<compile_context>
chip_gen: v7x
topology: tpu7x:2x2x1
jax: 0.10.0
libtpu: 0.0.40
codegen_flags: <defaults>
</compile_context>

<pallas_src>
import numpy as np
import jax
import jax.numpy as jnp
from jax.experimental import pallas as pl
from jax.experimental.pallas import tpu as pltpu


def ncf_kernel(idx_ref, off_ref, table_ref,
               w1_ref, b1_ref, w2_ref, b2_ref,
               wg_ref, wh_ref, bfc_ref, out_ref):
    TB, F = idx_ref.shape
    Vp, E = table_ref.shape
    HI = jax.lax.Precision.HIGHEST

    # ---- FeaturesEmbedding: x + offsets, then table lookup (one-hot gather) ----
    idx = idx_ref[...] + off_ref[...]                     # (TB, F) int32
    table = table_ref[...]                                # (Vp, E), VMEM-resident
    viota = jax.lax.broadcasted_iota(jnp.int32, (TB, Vp), 1)
    embs = []
    for f in range(F):                                    # F is small and static
        onehot = (idx[:, f:f + 1] == viota).astype(jnp.float32)   # (TB, Vp)
        embs.append(jnp.dot(onehot, table,
                            preferred_element_type=jnp.float32,
                            precision=HI))                # (TB, E) exact gather

    # ---- GMF branch: user * item * sum(context fields) ----
    context = embs[2]
    for f in range(3, F):
        context = context + embs[f]
    gmf = embs[0] * embs[1] * context                     # (TB, E)

    # ---- MLP branch (BN folded into w/b; Dropout = identity at inference) ----
    # flat @ w1 == sum_f embs[f] @ w1[f*E:(f+1)*E]  (static ref slices, no concat)
    h = b1_ref[...]
    for f in range(F):
        h = h + jnp.dot(embs[f], w1_ref[f * E:(f + 1) * E, :],
                        preferred_element_type=jnp.float32, precision=HI)
    h = jnp.maximum(h, 0.0)
    h = jnp.dot(h, w2_ref[...], preferred_element_type=jnp.float32,
                precision=HI) + b2_ref[...]
    h = jnp.maximum(h, 0.0)

    # ---- final fc on concat([gmf, h]): keep the N=1 matmul off the MXU ----
    out = jnp.sum(gmf * wg_ref[...] + h * wh_ref[...], axis=-1, keepdims=True)
    out_ref[...] = out + bfc_ref[...]                     # (TB, 1)


def make_params(key, field_dims, embed_dim, mlp_dims):
    num_fields = len(field_dims)
    total = int(np.sum(field_dims))
    keys = jax.random.split(key, 8)

    def xavier(k, shape):
        limit = float(np.sqrt(6.0 / (shape[0] + shape[1])))
        return jax.random.uniform(k, shape, jnp.float32, -limit, limit)

    in_dim = num_fields * embed_dim
    return {
        "offsets": jnp.asarray(
            np.array((0, *np.cumsum(field_dims)[:-1]), dtype=np.int32)),
        "emb_table": xavier(keys[0], (total, embed_dim)),
        "w1": xavier(keys[1], (in_dim, mlp_dims[0])),
        "b1": 0.01 * jax.random.normal(keys[2], (mlp_dims[0],), jnp.float32),
        "gamma1": jnp.ones((mlp_dims[0],), jnp.float32),
        "beta1": jnp.zeros((mlp_dims[0],), jnp.float32),
        "w2": xavier(keys[3], (mlp_dims[0], mlp_dims[1])),
        "b2": 0.01 * jax.random.normal(keys[4], (mlp_dims[1],), jnp.float32),
        "gamma2": jnp.ones((mlp_dims[1],), jnp.float32),
        "beta2": jnp.zeros((mlp_dims[1],), jnp.float32),
        "wfc": xavier(keys[5], (embed_dim + mlp_dims[1], 1)),
        "bfc": 0.01 * jax.random.normal(keys[6], (1,), jnp.float32),
    }


def fold_params(p, embed_dim, eps=1e-5):
    """One-time fold of inference BatchNorm into the Linear weights + operand prep."""
    s1 = p["gamma1"] / jnp.sqrt(1.0 + eps)      # running_var = 1, running_mean = 0
    s2 = p["gamma2"] / jnp.sqrt(1.0 + eps)
    V, E = p["emb_table"].shape
    Vp = int(np.ceil(V / 8) * 8)                # pad sublanes; padded rows never indexed
    table = jnp.zeros((Vp, E), jnp.float32).at[:V, :].set(p["emb_table"])
    return {
        "offsets": p["offsets"].reshape(1, -1).astype(jnp.int32),
        "table": table,
        "w1": p["w1"] * s1[None, :],
        "b1": (p["b1"] * s1 + p["beta1"]).reshape(1, -1),
        "w2": p["w2"] * s2[None, :],
        "b2": (p["b2"] * s2 + p["beta2"]).reshape(1, -1),
        "wg": p["wfc"][:embed_dim, 0].reshape(1, -1),     # (1, E)
        "wh": p["wfc"][embed_dim:, 0].reshape(1, -1),     # (1, mlp_out)
        "bfc": p["bfc"].reshape(1, 1),
    }


def ncf_forward(x_idx, fp, tile_b=None):
    B, F = x_idx.shape
    Vp, E = fp["table"].shape
    M1 = fp["w1"].shape[1]
    M2 = fp["w2"].shape[1]
    if tile_b is None:
        tile_b = B if B <= 512 else 512   # sweep 512-2048 at production batch sizes
    assert B % tile_b == 0 and tile_b % 8 == 0
    grid = (B // tile_b,)

    def const(shape):  # full-array operand, stays VMEM-resident across grid steps
        return pl.BlockSpec(shape, lambda i: (0, 0))

    out = pl.pallas_call(
        ncf_kernel,
        out_shape=jax.ShapeDtypeStruct((B, 1), jnp.float32),
        grid=grid,
        in_specs=[
            pl.BlockSpec((tile_b, F), lambda i: (i, 0)),   # only indices stream per tile
            const((1, F)),                                  # offsets
            const((Vp, E)),                                 # embedding table
            const((F * E, M1)), const((1, M1)),             # fused Linear1 + BN1
            const((M1, M2)), const((1, M2)),                # fused Linear2 + BN2
            const((1, E)), const((1, M2)), const((1, 1)),   # final fc as row vectors
        ],
        out_specs=pl.BlockSpec((tile_b, 1), lambda i: (i, 0)),
        compiler_params=pltpu.CompilerParams(
            dimension_semantics=("parallel",)),   # v7x: shard batch tiles over 2 TCs
    )(x_idx, fp["offsets"], fp["table"], fp["w1"], fp["b1"],
      fp["w2"], fp["b2"], fp["wg"], fp["wh"], fp["bfc"])
    return out[:, 0]


def ncf_reference(x_idx, p):
    eps = 1e-5
    HI = jax.lax.Precision.HIGHEST
    idx = x_idx + p["offsets"][None, :]
    emb = jnp.take(p["emb_table"], idx, axis=0)           # FeaturesEmbedding
    user_x, item_x = emb[:, 0, :], emb[:, 1, :]
    context_x = jnp.sum(emb[:, 2:, :], axis=1)
    gmf = user_x * item_x * context_x
    h = emb.reshape(emb.shape[0], -1)
    h = jnp.dot(h, p["w1"], precision=HI) + p["b1"]
    h = (h / jnp.sqrt(1.0 + eps)) * p["gamma1"] + p["beta1"]
    h = jnp.maximum(h, 0.0)
    h = jnp.dot(h, p["w2"], precision=HI) + p["b2"]
    h = (h / jnp.sqrt(1.0 + eps)) * p["gamma2"] + p["beta2"]
    h = jnp.maximum(h, 0.0)
    cat = jnp.concatenate([gmf, h], axis=1)
    return (jnp.dot(cat, p["wfc"], precision=HI) + p["bfc"])[:, 0]


if __name__ == "__main__":
    field_dims = np.array([7, 9, 5, 6], dtype=np.int64)   # user, item, 2 context fields
    embed_dim = 16
    mlp_dims = (32, 16)
    batch = 64
    tile_b = 16                                           # multiple of 8; 4 grid steps

    key = jax.random.PRNGKey(0)
    kp, kx = jax.random.split(key)
    raw = make_params(kp, field_dims, embed_dim, mlp_dims)
    folded = fold_params(raw, embed_dim)

    cols = []
    for fd in field_dims:
        kx, kf = jax.random.split(kx)
        cols.append(jax.random.randint(kf, (batch,), 0, int(fd), dtype=jnp.int32))
    x_idx = jnp.stack(cols, axis=1)                       # (B, F) int32

    fwd = jax.jit(lambda x, p: ncf_forward(x, p, tile_b=tile_b))
    out = fwd(x_idx, folded)
    jax.block_until_ready(out)

    ref = ncf_reference(x_idx, raw)
    np.testing.assert_allclose(np.asarray(out), np.asarray(ref), rtol=1e-5, atol=1e-5)
    print("KERNEL_OK")
</pallas_src>

<mosaic_0001>
module attributes {stable_mosaic.version = 11 : i64} {
  func.func @ncf_kernel(%arg0: i32, %arg1: memref<16x4xi32, #tpu.memory_space<vmem>>, %arg2: memref<1x4xi32, #tpu.memory_space<vmem>>, %arg3: memref<32x16xf32, #tpu.memory_space<vmem>>, %arg4: memref<64x32xf32, #tpu.memory_space<vmem>>, %arg5: memref<1x32xf32, #tpu.memory_space<vmem>>, %arg6: memref<32x16xf32, #tpu.memory_space<vmem>>, %arg7: memref<1x16xf32, #tpu.memory_space<vmem>>, %arg8: memref<1x16xf32, #tpu.memory_space<vmem>>, %arg9: memref<1x16xf32, #tpu.memory_space<vmem>>, %arg10: memref<1x1xf32, #tpu.memory_space<vmem>>, %arg11: memref<16x1xf32, #tpu.memory_space<vmem>>) attributes {dimension_semantics = [#tpu.dimension_semantics<parallel>], iteration_bounds = array<i64: 4>, scalar_prefetch = 0 : i64, scratch_operands = 0 : i64, tpu.core_type = #tpu.core_type<tc>, window_params = [{transform_indices = @transform_0, window_bounds = array<i64: 16, 4>}, {pipeline_mode = #tpu.pipeline_mode<synchronous>, transform_indices = @transform_1, window_bounds = array<i64: 1, 4>}, {pipeline_mode = #tpu.pipeline_mode<synchronous>, transform_indices = @transform_2, window_bounds = array<i64: 32, 16>}, {pipeline_mode = #tpu.pipeline_mode<synchronous>, transform_indices = @transform_3, window_bounds = array<i64: 64, 32>}, {pipeline_mode = #tpu.pipeline_mode<synchronous>, transform_indices = @transform_4, window_bounds = array<i64: 1, 32>}, {pipeline_mode = #tpu.pipeline_mode<synchronous>, transform_indices = @transform_5, window_bounds = array<i64: 32, 16>}, {pipeline_mode = #tpu.pipeline_mode<synchronous>, transform_indices = @transform_6, window_bounds = array<i64: 1, 16>}, {pipeline_mode = #tpu.pipeline_mode<synchronous>, transform_indices = @transform_7, window_bounds = array<i64: 1, 16>}, {pipeline_mode = #tpu.pipeline_mode<synchronous>, transform_indices = @transform_8, window_bounds = array<i64: 1, 16>}, {pipeline_mode = #tpu.pipeline_mode<synchronous>, transform_indices = @transform_9, window_bounds = array<i64: 1, 1>}, {transform_indices = @transform_10, window_bounds = array<i64: 16, 1>}]} {
    %c0 = arith.constant 0 : index
    %c0_0 = arith.constant 0 : index
    %0 = vector.load %arg1[%c0, %c0_0] : memref<16x4xi32, #tpu.memory_space<vmem>>, vector<16x4xi32>
    %c0_1 = arith.constant 0 : index
    %c0_2 = arith.constant 0 : index
    %1 = vector.load %arg2[%c0_1, %c0_2] : memref<1x4xi32, #tpu.memory_space<vmem>>, vector<1x4xi32>
    %2 = vector.broadcast %1 : vector<1x4xi32> to vector<16x4xi32>
    %3 = arith.addi %0, %2 : vector<16x4xi32>
    %c0_3 = arith.constant 0 : index
    %c0_4 = arith.constant 0 : index
    %4 = vector.load %arg3[%c0_3, %c0_4] : memref<32x16xf32, #tpu.memory_space<vmem>>, vector<32x16xf32>
    %5 = tpu.iota {dimensions = array<i32: 1>} : vector<16x32xi32>
    %6 = vector.extract_strided_slice %3 {offsets = [0, 0], sizes = [16, 1], strides = [1, 1]} : vector<16x4xi32> to vector<16x1xi32>
    %7 = vector.broadcast %6 : vector<16x1xi32> to vector<16x32xi32>
    %8 = arith.cmpi eq, %7, %5 : vector<16x32xi32>
    %9 = arith.extui %8 : vector<16x32xi1> to vector<16x32xi32>
    %10 = arith.sitofp %9 : vector<16x32xi32> to vector<16x32xf32>
    %cst = arith.constant dense<0.000000e+00> : vector<16x16xf32>
    %11 = tpu.matmul %10, %4, %cst {dimension_numbers = #tpu.dot_dimension_numbers<[1], [0], [0], [1], [0, 0, 1, 1], [], []>, precision = #tpu.contract_precision<fp32>} : vector<16x32xf32>, vector<32x16xf32>, vector<16x16xf32> -> vector<16x16xf32>
    %12 = vector.extract_strided_slice %3 {offsets = [0, 1], sizes = [16, 1], strides = [1, 1]} : vector<16x4xi32> to vector<16x1xi32>
    %13 = vector.broadcast %12 : vector<16x1xi32> to vector<16x32xi32>
    %14 = arith.cmpi eq, %13, %5 : vector<16x32xi32>
    %15 = arith.extui %14 : vector<16x32xi1> to vector<16x32xi32>
    %16 = arith.sitofp %15 : vector<16x32xi32> to vector<16x32xf32>
    %cst_5 = arith.constant dense<0.000000e+00> : vector<16x16xf32>
    %17 = tpu.matmul %16, %4, %cst_5 {dimension_numbers = #tpu.dot_dimension_numbers<[1], [0], [0], [1], [0, 0, 1, 1], [], []>, precision = #tpu.contract_precision<fp32>} : vector<16x32xf32>, vector<32x16xf32>, vector<16x16xf32> -> vector<16x16xf32>
    %18 = vector.extract_strided_slice %3 {offsets = [0, 2], sizes = [16, 1], strides = [1, 1]} : vector<16x4xi32> to vector<16x1xi32>
    %19 = vector.broadcast %18 : vector<16x1xi32> to vector<16x32xi32>
    %20 = arith.cmpi eq, %19, %5 : vector<16x32xi32>
    %21 = arith.extui %20 : vector<16x32xi1> to vector<16x32xi32>
    %22 = arith.sitofp %21 : vector<16x32xi32> to vector<16x32xf32>
    %cst_6 = arith.constant dense<0.000000e+00> : vector<16x16xf32>
    %23 = tpu.matmul %22, %4, %cst_6 {dimension_numbers = #tpu.dot_dimension_numbers<[1], [0], [0], [1], [0, 0, 1, 1], [], []>, precision = #tpu.contract_precision<fp32>} : vector<16x32xf32>, vector<32x16xf32>, vector<16x16xf32> -> vector<16x16xf32>
    %24 = vector.extract_strided_slice %3 {offsets = [0, 3], sizes = [16, 1], strides = [1, 1]} : vector<16x4xi32> to vector<16x1xi32>
    %25 = vector.broadcast %24 : vector<16x1xi32> to vector<16x32xi32>
    %26 = arith.cmpi eq, %25, %5 : vector<16x32xi32>
    %27 = arith.extui %26 : vector<16x32xi1> to vector<16x32xi32>
    %28 = arith.sitofp %27 : vector<16x32xi32> to vector<16x32xf32>
    %cst_7 = arith.constant dense<0.000000e+00> : vector<16x16xf32>
    %29 = tpu.matmul %28, %4, %cst_7 {dimension_numbers = #tpu.dot_dimension_numbers<[1], [0], [0], [1], [0, 0, 1, 1], [], []>, precision = #tpu.contract_precision<fp32>} : vector<16x32xf32>, vector<32x16xf32>, vector<16x16xf32> -> vector<16x16xf32>
    %30 = arith.addf %23, %29 : vector<16x16xf32>
    %31 = arith.mulf %11, %17 : vector<16x16xf32>
    %32 = arith.mulf %31, %30 : vector<16x16xf32>
    %c0_8 = arith.constant 0 : index
    %c0_9 = arith.constant 0 : index
    %33 = vector.load %arg5[%c0_8, %c0_9] : memref<1x32xf32, #tpu.memory_space<vmem>>, vector<1x32xf32>
    %c0_10 = arith.constant 0 : index
    %c0_11 = arith.constant 0 : index
    %34 = vector.load %arg4[%c0_10, %c0_11] : memref<64x32xf32, #tpu.memory_space<vmem>>, vector<16x32xf32>
    %cst_12 = arith.constant dense<0.000000e+00> : vector<16x32xf32>
    %35 = tpu.matmul %11, %34, %cst_12 {dimension_numbers = #tpu.dot_dimension_numbers<[1], [0], [0], [1], [0, 0, 1, 1], [], []>, precision = #tpu.contract_precision<fp32>} : vector<16x16xf32>, vector<16x32xf32>, vector<16x32xf32> -> vector<16x32xf32>
    %36 = vector.broadcast %33 : vector<1x32xf32> to vector<16x32xf32>
    %37 = arith.addf %36, %35 : vector<16x32xf32>
    %c16 = arith.constant 16 : index
    %c0_13 = arith.constant 0 : index
    %38 = vector.load %arg4[%c16, %c0_13] : memref<64x32xf32, #tpu.memory_space<vmem>>, vector<16x32xf32>
    %cst_14 = arith.constant dense<0.000000e+00> : vector<16x32xf32>
    %39 = tpu.matmul %17, %38, %cst_14 {dimension_numbers = #tpu.dot_dimension_numbers<[1], [0], [0], [1], [0, 0, 1, 1], [], []>, precision = #tpu.contract_precision<fp32>} : vector<16x16xf32>, vector<16x32xf32>, vector<16x32xf32> -> vector<16x32xf32>
    %40 = arith.addf %37, %39 : vector<16x32xf32>
    %c32 = arith.constant 32 : index
    %c0_15 = arith.constant 0 : index
    %41 = vector.load %arg4[%c32, %c0_15] : memref<64x32xf32, #tpu.memory_space<vmem>>, vector<16x32xf32>
    %cst_16 = arith.constant dense<0.000000e+00> : vector<16x32xf32>
    %42 = tpu.matmul %23, %41, %cst_16 {dimension_numbers = #tpu.dot_dimension_numbers<[1], [0], [0], [1], [0, 0, 1, 1], [], []>, precision = #tpu.contract_precision<fp32>} : vector<16x16xf32>, vector<16x32xf32>, vector<16x32xf32> -> vector<16x32xf32>
    %43 = arith.addf %40, %42 : vector<16x32xf32>
    %c48 = arith.constant 48 : index
    %c0_17 = arith.constant 0 : index
    %44 = vector.load %arg4[%c48, %c0_17] : memref<64x32xf32, #tpu.memory_space<vmem>>, vector<16x32xf32>
    %cst_18 = arith.constant dense<0.000000e+00> : vector<16x32xf32>
    %45 = tpu.matmul %29, %44, %cst_18 {dimension_numbers = #tpu.dot_dimension_numbers<[1], [0], [0], [1], [0, 0, 1, 1], [], []>, precision = #tpu.contract_precision<fp32>} : vector<16x16xf32>, vector<16x32xf32>, vector<16x32xf32> -> vector<16x32xf32>
    %46 = arith.addf %43, %45 : vector<16x32xf32>
    %cst_19 = arith.constant 0.000000e+00 : f32
    %47 = vector.broadcast %cst_19 : f32 to vector<16x32xf32>
    %48 = arith.maximumf %46, %47 : vector<16x32xf32>
    %c0_20 = arith.constant 0 : index
    %c0_21 = arith.constant 0 : index
    %49 = vector.load %arg6[%c0_20, %c0_21] : memref<32x16xf32, #tpu.memory_space<vmem>>, vector<32x16xf32>
    %cst_22 = arith.constant dense<0.000000e+00> : vector<16x16xf32>
    %50 = tpu.matmul %48, %49, %cst_22 {dimension_numbers = #tpu.dot_dimension_numbers<[1], [0], [0], [1], [0, 0, 1, 1], [], []>, precision = #tpu.contract_precision<fp32>} : vector<16x32xf32>, vector<32x16xf32>, vector<16x16xf32> -> vector<16x16xf32>
    %c0_23 = arith.constant 0 : index
    %c0_24 = arith.constant 0 : index
    %51 = vector.load %arg7[%c0_23, %c0_24] : memref<1x16xf32, #tpu.memory_space<vmem>>, vector<1x16xf32>
    %52 = vector.broadcast %51 : vector<1x16xf32> to vector<16x16xf32>
    %53 = arith.addf %50, %52 : vector<16x16xf32>
    %cst_25 = arith.constant 0.000000e+00 : f32
    %54 = vector.broadcast %cst_25 : f32 to vector<16x16xf32>
    %55 = arith.maximumf %53, %54 : vector<16x16xf32>
    %c0_26 = arith.constant 0 : index
    %c0_27 = arith.constant 0 : index
    %56 = vector.load %arg8[%c0_26, %c0_27] : memref<1x16xf32, #tpu.memory_space<vmem>>, vector<1x16xf32>
    %57 = vector.broadcast %56 : vector<1x16xf32> to vector<16x16xf32>
    %58 = arith.mulf %32, %57 : vector<16x16xf32>
    %c0_28 = arith.constant 0 : index
    %c0_29 = arith.constant 0 : index
    %59 = vector.load %arg9[%c0_28, %c0_29] : memref<1x16xf32, #tpu.memory_space<vmem>>, vector<1x16xf32>
    %60 = vector.broadcast %59 : vector<1x16xf32> to vector<16x16xf32>
    %61 = arith.mulf %55, %60 : vector<16x16xf32>
    %62 = arith.addf %58, %61 : vector<16x16xf32>
    %cst_30 = arith.constant dense<0.000000e+00> : vector<16xf32>
    %63 = vector.multi_reduction <add>, %62, %cst_30 [1] : vector<16x16xf32> to vector<16xf32>
    %64 = vector.shape_cast %63 : vector<16xf32> to vector<16x1xf32>
    %c0_31 = arith.constant 0 : index
    %c0_32 = arith.constant 0 : index
    %65 = vector.load %arg10[%c0_31, %c0_32] : memref<1x1xf32, #tpu.memory_space<vmem>>, vector<1x1xf32>
    %66 = vector.broadcast %65 : vector<1x1xf32> to vector<16x1xf32>
    %67 = arith.addf %64, %66 : vector<16x1xf32>
    %c0_33 = arith.constant 0 : index
    %c0_34 = arith.constant 0 : index
    %68 = vector.load %arg11[%c0_33, %c0_34] : memref<16x1xf32, #tpu.memory_space<vmem>>, vector<16x1xf32>
    tpu.vector_store %arg11[%c0_33, %c0_34], %67 {strides = array<i32>} : memref<16x1xf32, #tpu.memory_space<vmem>>, vector<16x1xf32>,
    return
  }
  func.func @transform_0(%arg0: i32) -> (i32, i32) {
    %c0_i32 = arith.constant 0 : i32
    %c0_i32_0 = arith.constant 0 : i32
    return %arg0, %c0_i32 : i32, i32
  }
  func.func @transform_1(%arg0: i32) -> (i32, i32) {
    %c0_i32 = arith.constant 0 : i32
    %c0_i32_0 = arith.constant 0 : i32
    %c0_i32_1 = arith.constant 0 : i32
    return %c0_i32, %c0_i32_0 : i32, i32
  }
  func.func @transform_2(%arg0: i32) -> (i32, i32) {
    %c0_i32 = arith.constant 0 : i32
    %c0_i32_0 = arith.constant 0 : i32
    %c0_i32_1 = arith.constant 0 : i32
    return %c0_i32, %c0_i32_0 : i32, i32
  }
  func.func @transform_3(%arg0: i32) -> (i32, i32) {
    %c0_i32 = arith.constant 0 : i32
    %c0_i32_0 = arith.constant 0 : i32
    %c0_i32_1 = arith.constant 0 : i32
    return %c0_i32, %c0_i32_0 : i32, i32
  }
  func.func @transform_4(%arg0: i32) -> (i32, i32) {
    %c0_i32 = arith.constant 0 : i32
    %c0_i32_0 = arith.constant 0 : i32
    %c0_i32_1 = arith.constant 0 : i32
    return %c0_i32, %c0_i32_0 : i32, i32
  }
  func.func @transform_5(%arg0: i32) -> (i32, i32) {
    %c0_i32 = arith.constant 0 : i32
    %c0_i32_0 = arith.constant 0 : i32
    %c0_i32_1 = arith.constant 0 : i32
    return %c0_i32, %c0_i32_0 : i32, i32
  }
  func.func @transform_6(%arg0: i32) -> (i32, i32) {
    %c0_i32 = arith.constant 0 : i32
    %c0_i32_0 = arith.constant 0 : i32
    %c0_i32_1 = arith.constant 0 : i32
    return %c0_i32, %c0_i32_0 : i32, i32
  }
  func.func @transform_7(%arg0: i32) -> (i32, i32) {
    %c0_i32 = arith.constant 0 : i32
    %c0_i32_0 = arith.constant 0 : i32
    %c0_i32_1 = arith.constant 0 : i32
    return %c0_i32, %c0_i32_0 : i32, i32
  }
  func.func @transform_8(%arg0: i32) -> (i32, i32) {
    %c0_i32 = arith.constant 0 : i32
    %c0_i32_0 = arith.constant 0 : i32
    %c0_i32_1 = arith.constant 0 : i32
    return %c0_i32, %c0_i32_0 : i32, i32
  }
  func.func @transform_9(%arg0: i32) -> (i32, i32) {
    %c0_i32 = arith.constant 0 : i32
    %c0_i32_0 = arith.constant 0 : i32
    %c0_i32_1 = arith.constant 0 : i32
    return %c0_i32, %c0_i32_0 : i32, i32
  }
  func.func @transform_10(%arg0: i32) -> (i32, i32) {
    %c0_i32 = arith.constant 0 : i32
    %c0_i32_0 = arith.constant 0 : i32
    return %arg0, %c0_i32 : i32, i32
  }
}

</mosaic_0001>

<llo_original>
// kernel: _lambda_.1
$region0: #{_lambda_.1}
  #allocation0 [shape = 'u32[]', space=smem, size = 0x4, offset = 0x4, fixed_abs, tag = 'smem constant byte address 0x4 - core index']
  #allocation1 [shape = 'u32[144,128]{1,0:T(1,128)}', space=vmem, size = 0x12000, scoped, tag = 'internal scratch']
  #allocation2 [shape = 'f32[1,1]{1,0:T(1,128)S(1)}', space=vmem, size = 0x200, scoped, tag = 'scoped memory for _lambda_.1']
  %s0 = inlined_call_operand.vmem [shape: s32[64,4], index: 0, kind: input, shape index: {}]
  %s1 = inlined_call_operand.vmem [shape: s32[1,4], index: 1, kind: input, shape index: {}]
  %s2 = inlined_call_operand.vmem [shape: f32[32,16], index: 2, kind: input, shape index: {}]
  %s3 = inlined_call_operand.vmem [shape: f32[64,32], index: 3, kind: input, shape index: {}]
  %s4 = inlined_call_operand.vmem [shape: f32[1,32], index: 4, kind: input, shape index: {}]
  %s5 = inlined_call_operand.vmem [shape: f32[32,16], index: 5, kind: input, shape index: {}]
  %s6 = inlined_call_operand.vmem [shape: f32[1,16], index: 6, kind: input, shape index: {}]
  %s7 = inlined_call_operand.vmem [shape: f32[1,16], index: 7, kind: input, shape index: {}]
  %s8 = inlined_call_operand.vmem [shape: f32[1,16], index: 8, kind: input, shape index: {}]
  %s9 = inlined_call_operand.<no memory space> [shape: f32[1,1], index: 9, kind: input, shape index: {}]
  %s10 = inlined_call_operand.vmem [shape: f32[64,1], index: 10, kind: output, shape index: {}]
  %s11 = sld [smem:[#allocation0]]
  $region73: #{_lambda_.1} parent=0
    _
  %s13 = ssub.s32 1, %s11
  %s14 = scalar_select 0, %s13, %s11
  %v15 = vstv %s9
  %16 = vst [vmem:[#allocation2] sm:$0x1] %v15
  loop: start=0, step=1, limit=6
  $region2: #{_lambda_.1} parent=0 // loop_pre_header
    _
  $region3: #{_lambda_.1} parent=0 // loop_header
    %s18 = sphi 0, %s22
    %p19 = scmp.ge.s32.totalorder %s18, 6
    %s28 = sphi 0, %s30
    %s31 = sphi 0, %s28
    %s32 = sphi 0, %s31
    %s48 = sphi 0, %s32
    %s52 = sphi 0, %s52
    %s54 = sphi 0, %s52
    %s55 = sphi 0, %s54
    %s69 = sphi 0, %s55
    %s73 = sphi 0, %s73
    %s75 = sphi 0, %s73
    %s76 = sphi 0, %s75
    %s90 = sphi 0, %s76
    %s94 = sphi 0, %s94
    %s96 = sphi 0, %s94
    %s97 = sphi 0, %s96
    %s111 = sphi 0, %s97
    %s115 = sphi 0, %s115
    %s117 = sphi 0, %s115
    %s118 = sphi 0, %s117
    %s132 = sphi 0, %s118
    %s136 = sphi 0, %s136
    %s138 = sphi 0, %s136
    %s139 = sphi 0, %s138
    %s153 = sphi 0, %s139
    %s157 = sphi 0, %s157
    %s159 = sphi 0, %s157
    %s160 = sphi 0, %s159
    %s174 = sphi 0, %s160
    %s178 = sphi 0, %s178
    %s180 = sphi 0, %s178
    %s181 = sphi 0, %s180
    %s195 = sphi 0, %s181
    %s199 = sphi 0, %s199
    %s201 = sphi 0, %s199
    %s202 = sphi 0, %s201
    %s216 = sphi 0, %s202
    %s220 = sphi 0, %s220
    %s222 = sphi 0, %s220
    %s223 = sphi 0, %s222
    %s237 = sphi 0, %s223
    %s243 = sphi 0, %s245
    %s246 = sphi 0, %s243
    %s247 = sphi 0, %s246
    %s263 = sphi 0, %s247
  $region4: #{_lambda_.1} parent=0 // loop_header_branch
    %21 = sbr.rel (%p19) target = $region8
  $region5: #{_lambda_.1} parent=0 // loop_body
    %s23 = ssub.s32 %s18, 1
    %s24 = ssub.s32 %s18, 2
    %s25 = sadd.s32 %s18, 1
    %s26 = ssub.s32 %s18, %s25
    %p27 = scmp.eq.s32.totalorder %s26, 0
    %s29 = sadd.s32 %s28, 1
    %s30 = scalar_select %p27, %s28, %s29
    %p33 = pneg %p27
    %p34 = scmp.eq.s32.totalorder %s18, 3
    %p35 = por %p33, %p34
    %p36 = scmp.ne.s32.totalorder %s28, %s31
    %p37 = scmp.eq.s32.totalorder %s18, 0
    %p38 = por %p36, %p37
    %p39 = scmp.ne.s32.totalorder %s28, %s31
    %p40 = scmp.eq.s32.totalorder %s23, 3
    %p41 = por %p39, %p40
    %p42 = scmp.ne.s32.totalorder %s31, %s32
    %p43 = scmp.eq.s32.totalorder %s23, 0
    %p44 = por %p42, %p43
    %p45 = scmp.ne.s32.totalorder %s31, %s32
    %p46 = scmp.eq.s32.totalorder %s24, 3
    %p47 = por %p45, %p46
    %p49 = scmp.ne.s32.totalorder %s32, %s48
    %p50 = scmp.eq.s32.totalorder %s24, 0
    %p51 = por %p49, %p50
    %s53 = sadd.s32 %s52, 1
    %p56 = scmp.eq.s32.totalorder %s18, 3
    %p57 = scmp.ne.s32.totalorder %s52, %s54
    %p58 = scmp.eq.s32.totalorder %s18, 0
    %p59 = por %p57, %p58
    %p60 = scmp.ne.s32.totalorder %s52, %s54
    %p61 = scmp.eq.s32.totalorder %s23, 3
    %p62 = por %p60, %p61
    %p63 = scmp.ne.s32.totalorder %s54, %s55
    %p64 = scmp.eq.s32.totalorder %s23, 0
    %p65 = por %p63, %p64
    %p66 = scmp.ne.s32.totalorder %s54, %s55
    %p67 = scmp.eq.s32.totalorder %s24, 3
    %p68 = por %p66, %p67
    %p70 = scmp.ne.s32.totalorder %s55, %s69
    %p71 = scmp.eq.s32.totalorder %s24, 0
    %p72 = por %p70, %p71
    %s74 = sadd.s32 %s73, 1
    %p77 = scmp.eq.s32.totalorder %s18, 3
    %p78 = scmp.ne.s32.totalorder %s73, %s75
    %p79 = scmp.eq.s32.totalorder %s18, 0
    %p80 = por %p78, %p79
    %p81 = scmp.ne.s32.totalorder %s73, %s75
    %p82 = scmp.eq.s32.totalorder %s23, 3
    %p83 = por %p81, %p82
    %p84 = scmp.ne.s32.totalorder %s75, %s76
    %p85 = scmp.eq.s32.totalorder %s23, 0
    %p86 = por %p84, %p85
    %p87 = scmp.ne.s32.totalorder %s75, %s76
    %p88 = scmp.eq.s32.totalorder %s24, 3
    %p89 = por %p87, %p88
    %p91 = scmp.ne.s32.totalorder %s76, %s90
    %p92 = scmp.eq.s32.totalorder %s24, 0
    %p93 = por %p91, %p92
    %s95 = sadd.s32 %s94, 1
    %p98 = scmp.eq.s32.totalorder %s18, 3
    %p99 = scmp.ne.s32.totalorder %s94, %s96
    %p100 = scmp.eq.s32.totalorder %s18, 0
    %p101 = por %p99, %p100
    %p102 = scmp.ne.s32.totalorder %s94, %s96
    %p103 = scmp.eq.s32.totalorder %s23, 3
    %p104 = por %p102, %p103
    %p105 = scmp.ne.s32.totalorder %s96, %s97
    %p106 = scmp.eq.s32.totalorder %s23, 0
    %p107 = por %p105, %p106
    %p108 = scmp.ne.s32.totalorder %s96, %s97
    %p109 = scmp.eq.s32.totalorder %s24, 3
    %p110 = por %p108, %p109
    %p112 = scmp.ne.s32.totalorder %s97, %s111
    %p113 = scmp.eq.s32.totalorder %s24, 0
    %p114 = por %p112, %p113
    %s116 = sadd.s32 %s115, 1
    %p119 = scmp.eq.s32.totalorder %s18, 3
    %p120 = scmp.ne.s32.totalorder %s115, %s117
    %p121 = scmp.eq.s32.totalorder %s18, 0
    %p122 = por %p120, %p121
    %p123 = scmp.ne.s32.totalorder %s115, %s117
    %p124 = scmp.eq.s32.totalorder %s23, 3
    %p125 = por %p123, %p124
    %p126 = scmp.ne.s32.totalorder %s117, %s118
    %p127 = scmp.eq.s32.totalorder %s23, 0
    %p128 = por %p126, %p127
    %p129 = scmp.ne.s32.totalorder %s117, %s118
    %p130 = scmp.eq.s32.totalorder %s24, 3
    %p131 = por %p129, %p130
    %p133 = scmp.ne.s32.totalorder %s118, %s132
    %p134 = scmp.eq.s32.totalorder %s24, 0
    %p135 = por %p133, %p134
    %s137 = sadd.s32 %s136, 1
    %p140 = scmp.eq.s32.totalorder %s18, 3
    %p141 = scmp.ne.s32.totalorder %s136, %s138
    %p142 = scmp.eq.s32.totalorder %s18, 0
    %p143 = por %p141, %p142
    %p144 = scmp.ne.s32.totalorder %s136, %s138
    %p145 = scmp.eq.s32.totalorder %s23, 3
    %p146 = por %p144, %p145
    %p147 = scmp.ne.s32.totalorder %s138, %s139
    %p148 = scmp.eq.s32.totalorder %s23, 0
    %p149 = por %p147, %p148
    %p150 = scmp.ne.s32.totalorder %s138, %s139
    %p151 = scmp.eq.s32.totalorder %s24, 3
    %p152 = por %p150, %p151
    %p154 = scmp.ne.s32.totalorder %s139, %s153
    %p155 = scmp.eq.s32.totalorder %s24, 0
    %p156 = por %p154, %p155
    %s158 = sadd.s32 %s157, 1
    %p161 = scmp.eq.s32.totalorder %s18, 3
    %p162 = scmp.ne.s32.totalorder %s157, %s159
    %p163 = scmp.eq.s32.totalorder %s18, 0
    %p164 = por %p162, %p163
    %p165 = scmp.ne.s32.totalorder %s157, %s159
    %p166 = scmp.eq.s32.totalorder %s23, 3
    %p167 = por %p165, %p166
    %p168 = scmp.ne.s32.totalorder %s159, %s160
    %p169 = scmp.eq.s32.totalorder %s23, 0
    %p170 = por %p168, %p169
    %p171 = scmp.ne.s32.totalorder %s159, %s160
    %p172 = scmp.eq.s32.totalorder %s24, 3
    %p173 = por %p171, %p172
    %p175 = scmp.ne.s32.totalorder %s160, %s174
    %p176 = scmp.eq.s32.totalorder %s24, 0
    %p177 = por %p175, %p176
    %s179 = sadd.s32 %s178, 1
    %p182 = scmp.eq.s32.totalorder %s18, 3
    %p183 = scmp.ne.s32.totalorder %s178, %s180
    %p184 = scmp.eq.s32.totalorder %s18, 0
    %p185 = por %p183, %p184
    %p186 = scmp.ne.s32.totalorder %s178, %s180
    %p187 = scmp.eq.s32.totalorder %s23, 3
    %p188 = por %p186, %p187
    %p189 = scmp.ne.s32.totalorder %s180, %s181
    %p190 = scmp.eq.s32.totalorder %s23, 0
    %p191 = por %p189, %p190
    %p192 = scmp.ne.s32.totalorder %s180, %s181
    %p193 = scmp.eq.s32.totalorder %s24, 3
    %p194 = por %p192, %p193
    %p196 = scmp.ne.s32.totalorder %s181, %s195
    %p197 = scmp.eq.s32.totalorder %s24, 0
    %p198 = por %p196, %p197
    %s200 = sadd.s32 %s199, 1
    %p203 = scmp.eq.s32.totalorder %s18, 3
    %p204 = scmp.ne.s32.totalorder %s199, %s201
    %p205 = scmp.eq.s32.totalorder %s18, 0
    %p206 = por %p204, %p205
    %p207 = scmp.ne.s32.totalorder %s199, %s201
    %p208 = scmp.eq.s32.totalorder %s23, 3
    %p209 = por %p207, %p208
    %p210 = scmp.ne.s32.totalorder %s201, %s202
    %p211 = scmp.eq.s32.totalorder %s23, 0
    %p212 = por %p210, %p211
    %p213 = scmp.ne.s32.totalorder %s201, %s202
    %p214 = scmp.eq.s32.totalorder %s24, 3
    %p215 = por %p213, %p214
    %p217 = scmp.ne.s32.totalorder %s202, %s216
    %p218 = scmp.eq.s32.totalorder %s24, 0
    %p219 = por %p217, %p218
    %s221 = sadd.s32 %s220, 1
    %p224 = scmp.eq.s32.totalorder %s18, 3
    %p225 = scmp.ne.s32.totalorder %s220, %s222
    %p226 = scmp.eq.s32.totalorder %s18, 0
    %p227 = por %p225, %p226
    %p228 = scmp.ne.s32.totalorder %s220, %s222
    %p229 = scmp.eq.s32.totalorder %s23, 3
    %p230 = por %p228, %p229
    %p231 = scmp.ne.s32.totalorder %s222, %s223
    %p232 = scmp.eq.s32.totalorder %s23, 0
    %p233 = por %p231, %p232
    %p234 = scmp.ne.s32.totalorder %s222, %s223
    %p235 = scmp.eq.s32.totalorder %s24, 3
    %p236 = por %p234, %p235
    %p238 = scmp.ne.s32.totalorder %s223, %s237
    %p239 = scmp.eq.s32.totalorder %s24, 0
    %p240 = por %p238, %p239
    %s241 = ssub.s32 %s18, %s25
    %p242 = scmp.eq.s32.totalorder %s241, 0
    %s244 = sadd.s32 %s243, 1
    %s245 = scalar_select %p242, %s243, %s244
    %p248 = pneg %p242
    %p249 = scmp.eq.s32.totalorder %s18, 3
    %p250 = por %p248, %p249
    %p251 = scmp.ne.s32.totalorder %s243, %s246
    %p252 = scmp.eq.s32.totalorder %s18, 0
    %p253 = por %p251, %p252
    %p254 = scmp.ne.s32.totalorder %s243, %s246
    %p255 = scmp.eq.s32.totalorder %s23, 3
    %p256 = por %p254, %p255
    %p257 = scmp.ne.s32.totalorder %s246, %s247
    %p258 = scmp.eq.s32.totalorder %s23, 0
    %p259 = por %p257, %p258
    %p260 = scmp.ne.s32.totalorder %s246, %s247
    %p261 = scmp.eq.s32.totalorder %s24, 3
    %p262 = por %p260, %p261
    %p264 = scmp.ne.s32.totalorder %s247, %s263
    %p265 = scmp.eq.s32.totalorder %s24, 0
    %p266 = por %p264, %p265
    %p267 = scmp.le.s32.totalorder 1, %s18
    %p268 = scmp.lt.s32.totalorder %s18, 5
    %p269 = pnand %p267, %p268
    %p270 = pneg %p269
    // Predicated region
    $region9: #{_lambda_.1} parent=5 // pred_check
      _
    $region10: #{_lambda_.1} parent=5 // pred_check_branch
      %272 = sbr.rel (%p269) target = $region12
    $region11: #{_lambda_.1} parent=5 // pred_region
      %s273 = ssub.s32 %s18, 1
      // Predicated region
      $region13: #{_lambda_.1} parent=11 // pred_check
        %p274 = pneg %p65
      $region14: #{_lambda_.1} parent=11 // pred_check_branch
        %276 = sbr.rel (%p274) target = $region16
      $region15: #{_lambda_.1} parent=11 // pred_region
        _
      $region16: #{_lambda_.1} parent=11 // pred_fallthru
        _
      // Predicated region
      $region17: #{_lambda_.1} parent=11 // pred_check
        %p277 = pneg %p86
      $region18: #{_lambda_.1} parent=11 // pred_check_branch
        %279 = sbr.rel (%p277) target = $region20
      $region19: #{_lambda_.1} parent=11 // pred_region
        _
      $region20: #{_lambda_.1} parent=11 // pred_fallthru
        _
      // Predicated region
      $region21: #{_lambda_.1} parent=11 // pred_check
        %p280 = pneg %p107
      $region22: #{_lambda_.1} parent=11 // pred_check_branch
        %282 = sbr.rel (%p280) target = $region24
      $region23: #{_lambda_.1} parent=11 // pred_region
        _
      $region24: #{_lambda_.1} parent=11 // pred_fallthru
        _
      // Predicated region
      $region25: #{_lambda_.1} parent=11 // pred_check
        %p283 = pneg %p128
      $region26: #{_lambda_.1} parent=11 // pred_check_branch
        %285 = sbr.rel (%p283) target = $region28
      $region27: #{_lambda_.1} parent=11 // pred_region
        _
      $region28: #{_lambda_.1} parent=11 // pred_fallthru
        _
      // Predicated region
      $region29: #{_lambda_.1} parent=11 // pred_check
        %p286 = pneg %p149
      $region30: #{_lambda_.1} parent=11 // pred_check_branch
        %288 = sbr.rel (%p286) target = $region32
      $region31: #{_lambda_.1} parent=11 // pred_region
        _
      $region32: #{_lambda_.1} parent=11 // pred_fallthru
        _
      // Predicated region
      $region33: #{_lambda_.1} parent=11 // pred_check
        %p289 = pneg %p170
      $region34: #{_lambda_.1} parent=11 // pred_check_branch
        %291 = sbr.rel (%p289) target = $region36
      $region35: #{_lambda_.1} parent=11 // pred_region
        _
      $region36: #{_lambda_.1} parent=11 // pred_fallthru
        _
      // Predicated region
      $region37: #{_lambda_.1} parent=11 // pred_check
        %p292 = pneg %p191
      $region38: #{_lambda_.1} parent=11 // pred_check_branch
        %294 = sbr.rel (%p292) target = $region40
      $region39: #{_lambda_.1} parent=11 // pred_region
        _
      $region40: #{_lambda_.1} parent=11 // pred_fallthru
        _
      // Predicated region
      $region41: #{_lambda_.1} parent=11 // pred_check
        %p295 = pneg %p212
      $region42: #{_lambda_.1} parent=11 // pred_check_branch
        %297 = sbr.rel (%p295) target = $region44
      $region43: #{_lambda_.1} parent=11 // pred_region
        _
      $region44: #{_lambda_.1} parent=11 // pred_fallthru
        _
      // Predicated region
      $region45: #{_lambda_.1} parent=11 // pred_check
        %p298 = pneg %p233
      $region46: #{_lambda_.1} parent=11 // pred_check_branch
        %300 = sbr.rel (%p298) target = $region48
      $region47: #{_lambda_.1} parent=11 // pred_region
        _
      $region48: #{_lambda_.1} parent=11 // pred_fallthru
        _
    $region12: #{_lambda_.1} parent=5 // pred_fallthru
      _
    %p301 = scmp.lt.s32.totalorder %s18, 4
    // Predicated region
    $region49: #{_lambda_.1} parent=5 // pred_check
      %p302 = pneg %p301
    $region50: #{_lambda_.1} parent=5 // pred_check_branch
      %304 = sbr.rel (%p302) target = $region52
    $region51: #{_lambda_.1} parent=5 // pred_region
      // Predicated region
      $region53: #{_lambda_.1} parent=51 // pred_check
        %p305 = pneg %p38
      $region54: #{_lambda_.1} parent=51 // pred_check_branch
        %307 = sbr.rel (%p305) target = $region56
      $region55: #{_lambda_.1} parent=51 // pred_region
        %s308 = smul.u32 2, %s18
        %p309 = scmp.lt.s32.totalorder %s308, 7
        %s310 = scalar_select %p309, %s308, 7
        %s311 = smul.addr %s310, 8
        %s312 = scalar_lea.vmem %s0, %s311
        %s313 = smul.u32 2, %s18
      $region56: #{_lambda_.1} parent=51 // pred_fallthru
        _
    $region52: #{_lambda_.1} parent=5 // pred_fallthru
      _
    %p314 = scmp.le.s32.totalorder 1, %s18
    %p315 = scmp.lt.s32.totalorder %s18, 5
    %p316 = pnand %p314, %p315
    %p317 = pneg %p316
    // Predicated region
    $region57: #{_lambda_.1} parent=5 // pred_check
      _
    $region58: #{_lambda_.1} parent=5 // pred_check_branch
      %319 = sbr.rel (%p316) target = $region60
    $region59: #{_lambda_.1} parent=5 // pred_region
      %s320 = ssub.s32 %s18, 1
      %s321 = smul.u32 2, %s23
      %p322 = scmp.lt.s32.totalorder %s321, 7
      %s323 = scalar_select %p322, %s321, 7
      %s324 = smul.addr %s323, 8
      %s325 = scalar_lea.vmem %s0, %s324
      %p326 = pneg %p44
      %p327 = pneg %p41
      %p328 = pneg %p65
      %p329 = pneg %p62
      %p330 = pneg %p86
      %p331 = pneg %p83
      %p332 = pneg %p107
      %p333 = pneg %p104
      %p334 = pneg %p128
      %p335 = pneg %p125
      %p336 = pneg %p149
      %p337 = pneg %p146
      %p338 = pneg %p170
      %p339 = pneg %p167
      %p340 = pneg %p191
      %p341 = pneg %p188
      %p342 = pneg %p212
      %p343 = pneg %p209
      %p344 = pneg %p233
      %p345 = pneg %p230
      %p346 = pneg %p259
      %p347 = pneg %p256
      %s348 = smul.u32 2, %s23
      %p349 = scmp.lt.s32.totalorder %s348, 7
      %s350 = scalar_select %p349, %s348, 7
      %s351 = smul.addr %s350, 8
      %s352 = scalar_lea.vmem %s10, %s351
      %s353 = smul.u32 2, %s23
      %p354 = scmp.lt.s32.totalorder %s353, 7
      %s355 = scalar_select %p354, %s353, 7
      %s356 = smul.addr %s355, 8
      %s357 = scalar_lea.vmem %s0, %s356
      %s358 = smul.u32 2, %s23
      %s359 = smul.u32 2, %s23
      %p360 = scmp.lt.s32.totalorder %s359, 7
      %s361 = scalar_select %p360, %s359, 7
      %s362 = smul.addr %s361, 8
      %s363 = scalar_lea.vmem %s10, %s362
      %s364 = smul.u32 2, %s23
      %v365 = vld [vmem:[%s357] sm:$0xff]
      %v366 = vld [vmem:[%s357 + $0x8] sm:$0xff]
      %v367 = vld [vmem:[%s1] sm:$0x1]
      %v368 = vlaneseq
      %v369 = vshrl.u32 %v368, 7
      %v370 = vsub.s32 0, %v369
      %v371 = vrot.slane %v367, %v370
      %v372 = vadd.s32 %v365, %v371
      %v373 = vadd.s32 %v366, %v371
      %v374 = vld [vmem:[%s2] sm:$0xff]
      %v375 = vld [vmem:[%s2 + $0x8] sm:$0xff]
      %v376 = vld [vmem:[%s2 + $0x10] sm:$0xff]
      %v377 = vld [vmem:[%s2 + $0x18] sm:$0xff]
      %v378 = vlaneseq
      %v379 = vand.u32 %v378, 127
      %380 = vset.pattern.permute.xlu0 0
      %381 = vperm.xlu0 %380, %v372
      %v382 = vpop.permute.xlu0 %381
      %383 = vset.pattern.permute.xlu0 0
      %384 = vperm.xlu0 %383, %v373
      %v385 = vpop.permute.xlu0 %384
      %vm386 = vcmp.eq.s32.totalorder %v382, %v379
      %vm387 = vcmp.eq.s32.totalorder %v385, %v379
      %v388 = vsel %vm386, 1, 0
      %v389 = vsel %vm387, 1, 0
      %v390 = vcvt.s32.f32 %v388
      %v391 = vcvt.s32.f32 %v389
      %vm392 = vcmask 261120
      %v394 = vsel %vm392, %v390, 0
      %v397 = vsel %vm392, %v391, 0
      %399 = vmatprep.subr.mxu0 0.0
      %v400 = vand.u32 %v374, 4294901760
      %401 = vmatpush1.msra.mxu0 %v400
      %402 = vmatprep.subr.mxu0 0.0
      %v403 = vand.u32 %v375, 4294901760
      %404 = vmatpush1.msra.mxu0 %v403
      %405 = vmatprep.subr.mxu0 0.0
      %v406 = vand.u32 %v376, 4294901760
      %407 = vmatpush1.msra.mxu0 %v406
      %408 = vmatprep.subr.mxu0 0.0
      %v409 = vand.u32 %v377, 4294901760
      %410 = vmatpush1.msra.mxu0 %v409
      %411 = vmatprep.subr.mxu0 0.0
      %412 = vmatpush1.msra.mxu0 0.0
      %413 = vmatprep.subr.mxu0 0.0
      %414 = vmatpush1.msra.mxu0 0.0
      %415 = vmatprep.subr.mxu0 0.0
      %416 = vmatpush1.msra.mxu0 0.0
      %417 = vmatprep.subr.mxu0 0.0
      %418 = vmatpush1.msra.mxu0 0.0
      %419 = vmatprep.subr.mxu0 0.0
      %420 = vmatpush1.msra.mxu0 0.0
      %421 = vmatprep.subr.mxu0 0.0
      %422 = vmatpush1.msra.mxu0 0.0
      %423 = vmatprep.subr.mxu0 0.0
      %424 = vmatpush1.msra.mxu0 0.0
      %425 = vmatprep.subr.mxu0 0.0
      %426 = vmatpush1.msra.mxu0 0.0
      %427 = vmatprep.subr.mxu0 0.0
      %428 = vmatpush1.msra.mxu0 0.0
      %429 = vmatprep.subr.mxu0 0.0
      %430 = vmatpush1.msra.mxu0 0.0
      %431 = vmatprep.subr.mxu0 0.0
      %432 = vmatpush1.msra.mxu0 0.0
      %433 = vmatprep.subr.mxu0 0.0
      %434 = vmatpush1.msra.mxu0 0.0
      %435 = vmatprep.subr.mxu0 0.0
      %436 = vmatpush1.msra.mxu0 0.0
      %437 = vmatprep.subr.mxu0 0.0
      %438 = vmatpush1.msra.mxu0 0.0
      %439 = vmatprep.subr.mxu0 0.0
      %440 = vmatpush1.msra.mxu0 0.0
      %441 = vmatprep.subr.mxu0 0.0
      %442 = vmatpush1.msra.mxu0 0.0
      %443 = vmatprep.subr.mxu0 0.0
      %444 = vmatpush1.msra.mxu0 0.0
      %445 = vmatprep.subr.mxu0 0.0
      %446 = vmatpush1.msra.mxu0 0.0
      %447 = vmatprep.subr.mxu0 0.0
      %448 = vmatpush1.msra.mxu0 0.0
      %449 = vmatprep.subr.mxu0 0.0
      %450 = vmatpush1.msra.mxu0 0.0
      %451 = vmatprep.subr.mxu0 0.0
      %452 = vmatpush1.msra.mxu0 0.0
      %453 = vmatprep.subr.mxu0 0.0
      %454 = vmatpush1.msra.mxu0 0.0
      %455 = vmatprep.subr.mxu0 0.0
      %456 = vmatpush1.msra.mxu0 0.0
      %457 = vmatprep.subr.mxu0 0.0
      %458 = vmatpush1.msra.mxu0 0.0
      %459 = vmatprep.subr.mxu0 0.0
      %460 = vmatpush1.msra.mxu0 0.0
      %461 = vmatprep.subr.mxu0 0.0
      %462 = vmatpush1.msra.mxu0 0.0
      %463 = vmatprep.subr.mxu0 0.0
      %464 = vmatpush1.msra.mxu0 0.0
      %465 = vmatprep.subr.mxu0 0.0
      %466 = vmatpush1.msra.mxu0 0.0
      %467 = vmatprep.mubr.f32.mxu0 0.0
      %v468 = vand.u32 %v394, 4294901760
      %v469 = vsub.f32 %v394, %v468
      %v470 = vand.u32 %v469, 4294901760
      %v471 = vsub.f32 %v469, %v470
      %v472 = vand.u32 %v471, 4294901760
      %473 = vmatmul.mubr.f32.gmra.mrb[0].mxu0 %v472
      %v474 = vpop.f32.mrb[0].mxu0
      %v475 = vadd.f32 0.0, %v474
      %v476 = vpop.f32.mrb[0].mxu0
      %477 = vmatprep.mubr.f32.mxu0 0.0
      %v478 = vand.u32 %v397, 4294901760
      %v479 = vsub.f32 %v397, %v478
      %v480 = vand.u32 %v479, 4294901760
      %v481 = vsub.f32 %v479, %v480
      %v482 = vand.u32 %v481, 4294901760
      %483 = vmatmul.mubr.f32.gmra.mrb[0].mxu0 %v482
      %v484 = vpop.f32.mrb[0].mxu0
      %v485 = vadd.f32 0.0, %v484
      %v486 = vpop.f32.mrb[0].mxu0
      %487 = vdwg.mxu0
      %488 = vmatprep.subr.mxu0 0.0
      %v489 = vand.u32 %v374, 4294901760
      %v490 = vsub.f32 %v374, %v489
      %v491 = vand.u32 %v490, 4294901760
      %v492 = vsub.f32 %v490, %v491
      %v493 = vand.u32 %v492, 4294901760
      %494 = vmatpush1.msra.mxu0 %v493
      %495 = vmatprep.subr.mxu0 0.0
      %v496 = vand.u32 %v375, 4294901760
      %v497 = vsub.f32 %v375, %v496
      %v498 = vand.u32 %v497, 4294901760
      %v499 = vsub.f32 %v497, %v498
      %v500 = vand.u32 %v499, 4294901760
      %501 = vmatpush1.msra.mxu0 %v500
      %502 = vmatprep.subr.mxu0 0.0
      %v503 = vand.u32 %v376, 4294901760
      %v504 = vsub.f32 %v376, %v503
      %v505 = vand.u32 %v504, 4294901760
      %v506 = vsub.f32 %v504, %v505
      %v507 = vand.u32 %v506, 4294901760
      %508 = vmatpush1.msra.mxu0 %v507
      %509 = vmatprep.subr.mxu0 0.0
      %v510 = vand.u32 %v377, 4294901760
      %v511 = vsub.f32 %v377, %v510
      %v512 = vand.u32 %v511, 4294901760
      %v513 = vsub.f32 %v511, %v512
      %v514 = vand.u32 %v513, 4294901760
      %515 = vmatpush1.msra.mxu0 %v514
      %516 = vmatprep.subr.mxu0 0.0
      %517 = vmatpush1.msra.mxu0 0.0
      %518 = vmatprep.subr.mxu0 0.0
      %519 = vmatpush1.msra.mxu0 0.0
      %520 = vmatprep.subr.mxu0 0.0
      %521 = vmatpush1.msra.mxu0 0.0
      %522 = vmatprep.subr.mxu0 0.0
      %523 = vmatpush1.msra.mxu0 0.0
      %524 = vmatprep.subr.mxu0 0.0
      %525 = vmatpush1.msra.mxu0 0.0
      %526 = vmatprep.subr.mxu0 0.0
      %527 = vmatpush1.msra.mxu0 0.0
      %528 = vmatprep.subr.mxu0 0.0
      %529 = vmatpush1.msra.mxu0 0.0
      %530 = vmatprep.subr.mxu0 0.0
      %531 = vmatpush1.msra.mxu0 0.0
      %532 = vmatprep.subr.mxu0 0.0
      %533 = vmatpush1.msra.mxu0 0.0
      %534 = vmatprep.subr.mxu0 0.0
      %535 = vmatpush1.msra.mxu0 0.0
      %536 = vmatprep.subr.mxu0 0.0
      %537 = vmatpush1.msra.mxu0 0.0
      %538 = vmatprep.subr.mxu0 0.0
      %539 = vmatpush1.msra.mxu0 0.0
      %540 = vmatprep.subr.mxu0 0.0
      %541 = vmatpush1.msra.mxu0 0.0
      %542 = vmatprep.subr.mxu0 0.0
      %543 = vmatpush1.msra.mxu0 0.0
      %544 = vmatprep.subr.mxu0 0.0
      %545 = vmatpush1.msra.mxu0 0.0
      %546 = vmatprep.subr.mxu0 0.0
      %547 = vmatpush1.msra.mxu0 0.0
      %548 = vmatprep.subr.mxu0 0.0
      %549 = vmatpush1.msra.mxu0 0.0
      %550 = vmatprep.subr.mxu0 0.0
      %551 = vmatpush1.msra.mxu0 0.0
      %552 = vmatprep.subr.mxu0 0.0
      %553 = vmatpush1.msra.mxu0 0.0
      %554 = vmatprep.subr.mxu0 0.0
      %555 = vmatpush1.msra.mxu0 0.0
      %556 = vmatprep.subr.mxu0 0.0
      %557 = vmatpush1.msra.mxu0 0.0
      %558 = vmatprep.subr.mxu0 0.0
      %559 = vmatpush1.msra.mxu0 0.0
      %560 = vmatprep.subr.mxu0 0.0
      %561 = vmatpush1.msra.mxu0 0.0
      %562 = vmatprep.subr.mxu0 0.0
      %563 = vmatpush1.msra.mxu0 0.0
      %564 = vmatprep.subr.mxu0 0.0
      %565 = vmatpush1.msra.mxu0 0.0
      %566 = vmatprep.subr.mxu0 0.0
      %567 = vmatpush1.msra.mxu0 0.0
      %568 = vmatprep.subr.mxu0 0.0
      %569 = vmatpush1.msra.mxu0 0.0
      %570 = vmatprep.subr.mxu0 0.0
      %571 = vmatpush1.msra.mxu0 0.0
      %572 = vmatprep.mubr.f32.mxu0 0.0
      %v573 = vand.u32 %v394, 4294901760
      %574 = vmatmul.mubr.f32.gmra.mrb[0].mxu0 %v573
      %v575 = vpop.f32.mrb[0].mxu0
      %v576 = vadd.f32 %v475, %v575
      %v577 = vpop.f32.mrb[0].mxu0
      %578 = vmatprep.mubr.f32.mxu0 0.0
      %v579 = vand.u32 %v397, 4294901760
      %580 = vmatmul.mubr.f32.gmra.mrb[0].mxu0 %v579
      %v581 = vpop.f32.mrb[0].mxu0
      %v582 = vadd.f32 %v485, %v581
      %v583 = vpop.f32.mrb[0].mxu0
      %584 = vdwg.mxu0
      %585 = vmatprep.subr.mxu0 0.0
      %v586 = vand.u32 %v374, 4294901760
      %v587 = vsub.f32 %v374, %v586
      %588 = vmatpush1.msra.mxu0 %v587
      %589 = vmatprep.subr.mxu0 0.0
      %v590 = vand.u32 %v375, 4294901760
      %v591 = vsub.f32 %v375, %v590
      %592 = vmatpush1.msra.mxu0 %v591
      %593 = vmatprep.subr.mxu0 0.0
      %v594 = vand.u32 %v376, 4294901760
      %v595 = vsub.f32 %v376, %v594
      %596 = vmatpush1.msra.mxu0 %v595
      %597 = vmatprep.subr.mxu0 0.0
      %v598 = vand.u32 %v377, 4294901760
      %v599 = vsub.f32 %v377, %v598
      %600 = vmatpush1.msra.mxu0 %v599
      %601 = vmatprep.subr.mxu0 0.0
      %602 = vmatpush1.msra.mxu0 0.0
      %603 = vmatprep.subr.mxu0 0.0
      %604 = vmatpush1.msra.mxu0 0.0
      %605 = vmatprep.subr.mxu0 0.0
      %606 = vmatpush1.msra.mxu0 0.0
      %607 = vmatprep.subr.mxu0 0.0
      %608 = vmatpush1.msra.mxu0 0.0
      %609 = vmatprep.subr.mxu0 0.0
      %610 = vmatpush1.msra.mxu0 0.0
      %611 = vmatprep.subr.mxu0 0.0
      %612 = vmatpush1.msra.mxu0 0.0
      %613 = vmatprep.subr.mxu0 0.0
      %614 = vmatpush1.msra.mxu0 0.0
      %615 = vmatprep.subr.mxu0 0.0
      %616 = vmatpush1.msra.mxu0 0.0
      %617 = vmatprep.subr.mxu0 0.0
      %618 = vmatpush1.msra.mxu0 0.0
      %619 = vmatprep.subr.mxu0 0.0
      %620 = vmatpush1.msra.mxu0 0.0
      %621 = vmatprep.subr.mxu0 0.0
      %622 = vmatpush1.msra.mxu0 0.0
      %623 = vmatprep.subr.mxu0 0.0
      %624 = vmatpush1.msra.mxu0 0.0
      %625 = vmatprep.subr.mxu0 0.0
      %626 = vmatpush1.msra.mxu0 0.0
      %627 = vmatprep.subr.mxu0 0.0
      %628 = vmatpush1.msra.mxu0 0.0
      %629 = vmatprep.subr.mxu0 0.0
      %630 = vmatpush1.msra.mxu0 0.0
      %631 = vmatprep.subr.mxu0 0.0
      %632 = vmatpush1.msra.mxu0 0.0
      %633 = vmatprep.subr.mxu0 0.0
      %634 = vmatpush1.msra.mxu0 0.0
      %635 = vmatprep.subr.mxu0 0.0
      %636 = vmatpush1.msra.mxu0 0.0
      %637 = vmatprep.subr.mxu0 0.0
      %638 = vmatpush1.msra.mxu0 0.0
      %639 = vmatprep.subr.mxu0 0.0
      %640 = vmatpush1.msra.mxu0 0.0
      %641 = vmatprep.subr.mxu0 0.0
      %642 = vmatpush1.msra.mxu0 0.0
      %643 = vmatprep.subr.mxu0 0.0
      %644 = vmatpush1.msra.mxu0 0.0
      %645 = vmatprep.subr.mxu0 0.0
      %646 = vmatpush1.msra.mxu0 0.0
      %647 = vmatprep.subr.mxu0 0.0
      %648 = vmatpush1.msra.mxu0 0.0
      %649 = vmatprep.subr.mxu0 0.0
      %650 = vmatpush1.msra.mxu0 0.0
      %651 = vmatprep.subr.mxu0 0.0
      %652 = vmatpush1.msra.mxu0 0.0
      %653 = vmatprep.subr.mxu0 0.0
      %654 = vmatpush1.msra.mxu0 0.0
      %655 = vmatprep.subr.mxu0 0.0
      %656 = vmatpush1.msra.mxu0 0.0
      %657 = vmatprep.mubr.f32.mxu0 0.0
      %v658 = vand.u32 %v394, 4294901760
      %v659 = vsub.f32 %v394, %v658
      %660 = vmatmul.mubr.f32.gmra.mrb[0].mxu0 %v659
      %v661 = vpop.f32.mrb[0].mxu0
      %v662 = vadd.f32 %v576, %v661
      %v663 = vpop.f32.mrb[0].mxu0
      %664 = vmatprep.mubr.f32.mxu0 0.0
      %v665 = vand.u32 %v397, 4294901760
      %v666 = vsub.f32 %v397, %v665
      %667 = vmatmul.mubr.f32.gmra.mrb[0].mxu0 %v666
      %v668 = vpop.f32.mrb[0].mxu0
      %v669 = vadd.f32 %v582, %v668
      %v670 = vpop.f32.mrb[0].mxu0
      %671 = vdwg.mxu0
      %672 = vmatprep.subr.mxu0 0.0
      %v673 = vand.u32 %v374, 4294901760
      %674 = vmatpush1.msra.mxu0 %v673
      %675 = vmatprep.subr.mxu0 0.0
      %v676 = vand.u32 %v375, 4294901760
      %677 = vmatpush1.msra.mxu0 %v676
      %678 = vmatprep.subr.mxu0 0.0
      %v679 = vand.u32 %v376, 4294901760
      %680 = vmatpush1.msra.mxu0 %v679
      %681 = vmatprep.subr.mxu0 0.0
      %v682 = vand.u32 %v377, 4294901760
      %683 = vmatpush1.msra.mxu0 %v682
      %684 = vmatprep.subr.mxu0 0.0
      %685 = vmatpush1.msra.mxu0 0.0
      %686 = vmatprep.subr.mxu0 0.0
      %687 = vmatpush1.msra.mxu0 0.0
      %688 = vmatprep.subr.mxu0 0.0
      %689 = vmatpush1.msra.mxu0 0.0
      %690 = vmatprep.subr.mxu0 0.0
      %691 = vmatpush1.msra.mxu0 0.0
      %692 = vmatprep.subr.mxu0 0.0
      %693 = vmatpush1.msra.mxu0 0.0
      %694 = vmatprep.subr.mxu0 0.0
      %695 = vmatpush1.msra.mxu0 0.0
      %696 = vmatprep.subr.mxu0 0.0
      %697 = vmatpush1.msra.mxu0 0.0
      %698 = vmatprep.subr.mxu0 0.0
      %699 = vmatpush1.msra.mxu0 0.0
      %700 = vmatprep.subr.mxu0 0.0
      %701 = vmatpush1.msra.mxu0 0.0
      %702 = vmatprep.subr.mxu0 0.0
      %703 = vmatpush1.msra.mxu0 0.0
      %704 = vmatprep.subr.mxu0 0.0
      %705 = vmatpush1.msra.mxu0 0.0
      %706 = vmatprep.subr.mxu0 0.0
      %707 = vmatpush1.msra.mxu0 0.0
      %708 = vmatprep.subr.mxu0 0.0
      %709 = vmatpush1.msra.mxu0 0.0
      %710 = vmatprep.subr.mxu0 0.0
      %711 = vmatpush1.msra.mxu0 0.0
      %712 = vmatprep.subr.mxu0 0.0
      %713 = vmatpush1.msra.mxu0 0.0
      %714 = vmatprep.subr.mxu0 0.0
      %715 = vmatpush1.msra.mxu0 0.0
      %716 = vmatprep.subr.mxu0 0.0
      %717 = vmatpush1.msra.mxu0 0.0
      %718 = vmatprep.subr.mxu0 0.0
      %719 = vmatpush1.msra.mxu0 0.0
      %720 = vmatprep.subr.mxu0 0.0
      %721 = vmatpush1.msra.mxu0 0.0
      %722 = vmatprep.subr.mxu0 0.0
      %723 = vmatpush1.msra.mxu0 0.0
      %724 = vmatprep.subr.mxu0 0.0
      %725 = vmatpush1.msra.mxu0 0.0
      %726 = vmatprep.subr.mxu0 0.0
      %727 = vmatpush1.msra.mxu0 0.0
      %728 = vmatprep.subr.mxu0 0.0
      %729 = vmatpush1.msra.mxu0 0.0
      %730 = vmatprep.subr.mxu0 0.0
      %731 = vmatpush1.msra.mxu0 0.0
      %732 = vmatprep.subr.mxu0 0.0
      %733 = vmatpush1.msra.mxu0 0.0
      %734 = vmatprep.subr.mxu0 0.0
      %735 = vmatpush1.msra.mxu0 0.0
      %736 = vmatprep.subr.mxu0 0.0
      %737 = vmatpush1.msra.mxu0 0.0
      %738 = vmatprep.subr.mxu0 0.0
      %739 = vmatpush1.msra.mxu0 0.0
      %740 = vmatprep.mubr.f32.mxu0 0.0
      %v741 = vand.u32 %v394, 4294901760
      %v742 = vsub.f32 %v394, %v741
      %v743 = vand.u32 %v742, 4294901760
      %744 = vmatmul.mubr.f32.gmra.mrb[0].mxu0 %v743
      %v745 = vpop.f32.mrb[0].mxu0
      %v746 = vadd.f32 %v662, %v745
      %v747 = vpop.f32.mrb[0].mxu0
      %748 = vmatprep.mubr.f32.mxu0 0.0
      %v749 = vand.u32 %v397, 4294901760
      %v750 = vsub.f32 %v397, %v749
      %v751 = vand.u32 %v750, 4294901760
      %752 = vmatmul.mubr.f32.gmra.mrb[0].mxu0 %v751
      %v753 = vpop.f32.mrb[0].mxu0
      %v754 = vadd.f32 %v669, %v753
      %v755 = vpop.f32.mrb[0].mxu0
      %756 = vdwg.mxu0
      %757 = vmatprep.subr.mxu0 0.0
      %v758 = vand.u32 %v374, 4294901760
      %v759 = vsub.f32 %v374, %v758
      %v760 = vand.u32 %v759, 4294901760
      %761 = vmatpush1.msra.mxu0 %v760
      %762 = vmatprep.subr.mxu0 0.0
      %v763 = vand.u32 %v375, 4294901760
      %v764 = vsub.f32 %v375, %v763
      %v765 = vand.u32 %v764, 4294901760
      %766 = vmatpush1.msra.mxu0 %v765
      %767 = vmatprep.subr.mxu0 0.0
      %v768 = vand.u32 %v376, 4294901760
      %v769 = vsub.f32 %v376, %v768
      %v770 = vand.u32 %v769, 4294901760
      %771 = vmatpush1.msra.mxu0 %v770
      %772 = vmatprep.subr.mxu0 0.0
      %v773 = vand.u32 %v377, 4294901760
      %v774 = vsub.f32 %v377, %v773
      %v775 = vand.u32 %v774, 4294901760
      %776 = vmatpush1.msra.mxu0 %v775
      %777 = vmatprep.subr.mxu0 0.0
      %778 = vmatpush1.msra.mxu0 0.0
      %779 = vmatprep.subr.mxu0 0.0
      %780 = vmatpush1.msra.mxu0 0.0
      %781 = vmatprep.subr.mxu0 0.0
      %782 = vmatpush1.msra.mxu0 0.0
      %783 = vmatprep.subr.mxu0 0.0
      %784 = vmatpush1.msra.mxu0 0.0
      %785 = vmatprep.subr.mxu0 0.0
      %786 = vmatpush1.msra.mxu0 0.0
      %787 = vmatprep.subr.mxu0 0.0
      %788 = vmatpush1.msra.mxu0 0.0
      %789 = vmatprep.subr.mxu0 0.0
      %790 = vmatpush1.msra.mxu0 0.0
      %791 = vmatprep.subr.mxu0 0.0
      %792 = vmatpush1.msra.mxu0 0.0
      %793 = vmatprep.subr.mxu0 0.0
      %794 = vmatpush1.msra.mxu0 0.0
      %795 = vmatprep.subr.mxu0 0.0
      %796 = vmatpush1.msra.mxu0 0.0
      %797 = vmatprep.subr.mxu0 0.0
      %798 = vmatpush1.msra.mxu0 0.0
      %799 = vmatprep.subr.mxu0 0.0
      %800 = vmatpush1.msra.mxu0 0.0
      %801 = vmatprep.subr.mxu0 0.0
      %802 = vmatpush1.msra.mxu0 0.0
      %803 = vmatprep.subr.mxu0 0.0
      %804 = vmatpush1.msra.mxu0 0.0
      %805 = vmatprep.subr.mxu0 0.0
      %806 = vmatpush1.msra.mxu0 0.0
      %807 = vmatprep.subr.mxu0 0.0
      %808 = vmatpush1.msra.mxu0 0.0
      %809 = vmatprep.subr.mxu0 0.0
      %810 = vmatpush1.msra.mxu0 0.0
      %811 = vmatprep.subr.mxu0 0.0
      %812 = vmatpush1.msra.mxu0 0.0
      %813 = vmatprep.subr.mxu0 0.0
      %814 = vmatpush1.msra.mxu0 0.0
      %815 = vmatprep.subr.mxu0 0.0
      %816 = vmatpush1.msra.mxu0 0.0
      %817 = vmatprep.subr.mxu0 0.0
      %818 = vmatpush1.msra.mxu0 0.0
      %819 = vmatprep.subr.mxu0 0.0
      %820 = vmatpush1.msra.mxu0 0.0
      %821 = vmatprep.subr.mxu0 0.0
      %822 = vmatpush1.msra.mxu0 0.0
      %823 = vmatprep.subr.mxu0 0.0
      %824 = vmatpush1.msra.mxu0 0.0
      %825 = vmatprep.subr.mxu0 0.0
      %826 = vmatpush1.msra.mxu0 0.0
      %827 = vmatprep.subr.mxu0 0.0
      %828 = vmatpush1.msra.mxu0 0.0
      %829 = vmatprep.subr.mxu0 0.0
      %830 = vmatpush1.msra.mxu0 0.0
      %831 = vmatprep.subr.mxu0 0.0
      %832 = vmatpush1.msra.mxu0 0.0
      %833 = vmatprep.mubr.f32.mxu0 0.0
      %v834 = vand.u32 %v394, 4294901760
      %835 = vmatmul.mubr.f32.gmra.mrb[0].mxu0 %v834
      %v836 = vpop.f32.mrb[0].mxu0
      %v837 = vadd.f32 %v746, %v836
      %v838 = vpop.f32.mrb[0].mxu0
      %839 = vmatprep.mubr.f32.mxu0 0.0
      %v840 = vand.u32 %v397, 4294901760
      %841 = vmatmul.mubr.f32.gmra.mrb[0].mxu0 %v840
      %v842 = vpop.f32.mrb[0].mxu0
      %v843 = vadd.f32 %v754, %v842
      %v844 = vpop.f32.mrb[0].mxu0
      %845 = vdwg.mxu0
      %846 = vmatprep.subr.mxu0 0.0
      %v847 = vand.u32 %v374, 4294901760
      %848 = vmatpush1.msra.mxu0 %v847
      %849 = vmatprep.subr.mxu0 0.0
      %v850 = vand.u32 %v375, 4294901760
      %851 = vmatpush1.msra.mxu0 %v850
      %852 = vmatprep.subr.mxu0 0.0
      %v853 = vand.u32 %v376, 4294901760
      %854 = vmatpush1.msra.mxu0 %v853
      %855 = vmatprep.subr.mxu0 0.0
      %v856 = vand.u32 %v377, 4294901760
      %857 = vmatpush1.msra.mxu0 %v856
      %858 = vmatprep.subr.mxu0 0.0
      %859 = vmatpush1.msra.mxu0 0.0
      %860 = vmatprep.subr.mxu0 0.0
      %861 = vmatpush1.msra.mxu0 0.0
      %862 = vmatprep.subr.mxu0 0.0
      %863 = vmatpush1.msra.mxu0 0.0
      %864 = vmatprep.subr.mxu0 0.0
      %865 = vmatpush1.msra.mxu0 0.0
      %866 = vmatprep.subr.mxu0 0.0
      %867 = vmatpush1.msra.mxu0 0.0
      %868 = vmatprep.subr.mxu0 0.0
      %869 = vmatpush1.msra.mxu0 0.0
      %870 = vmatprep.subr.mxu0 0.0
      %871 = vmatpush1.msra.mxu0 0.0
      %872 = vmatprep.subr.mxu0 0.0
      %873 = vmatpush1.msra.mxu0 0.0
      %874 = vmatprep.subr.mxu0 0.0
      %875 = vmatpush1.msra.mxu0 0.0
      %876 = vmatprep.subr.mxu0 0.0
      %877 = vmatpush1.msra.mxu0 0.0
      %878 = vmatprep.subr.mxu0 0.0
      %879 = vmatpush1.msra.mxu0 0.0
      %880 = vmatprep.subr.mxu0 0.0
      %881 = vmatpush1.msra.mxu0 0.0
      %882 = vmatprep.subr.mxu0 0.0
      %883 = vmatpush1.msra.mxu0 0.0
      %884 = vmatprep.subr.mxu0 0.0
      %885 = vmatpush1.msra.mxu0 0.0
      %886 = vmatprep.subr.mxu0 0.0
      %887 = vmatpush1.msra.mxu0 0.0
      %888 = vmatprep.subr.mxu0 0.0
      %889 = vmatpush1.msra.mxu0 0.0
      %890 = vmatprep.subr.mxu0 0.0
      %891 = vmatpush1.msra.mxu0 0.0
      %892 = vmatprep.subr.mxu0 0.0
      %893 = vmatpush1.msra.mxu0 0.0
      %894 = vmatprep.subr.mxu0 0.0
      %895 = vmatpush1.msra.mxu0 0.0
      %896 = vmatprep.subr.mxu0 0.0
      %897 = vmatpush1.msra.mxu0 0.0
      %898 = vmatprep.subr.mxu0 0.0
      %899 = vmatpush1.msra.mxu0 0.0
      %900 = vmatprep.subr.mxu0 0.0
      %901 = vmatpush1.msra.mxu0 0.0
      %902 = vmatprep.subr.mxu0 0.0
      %903 = vmatpush1.msra.mxu0 0.0
      %904 = vmatprep.subr.mxu0 0.0
      %905 = vmatpush1.msra.mxu0 0.0
      %906 = vmatprep.subr.mxu0 0.0
      %907 = vmatpush1.msra.mxu0 0.0
      %908 = vmatprep.subr.mxu0 0.0
      %909 = vmatpush1.msra.mxu0 0.0
      %910 = vmatprep.subr.mxu0 0.0
      %911 = vmatpush1.msra.mxu0 0.0
      %912 = vmatprep.subr.mxu0 0.0
      %913 = vmatpush1.msra.mxu0 0.0
      %914 = vmatprep.mubr.f32.mxu0 0.0
      %v915 = vand.u32 %v394, 4294901760
      %916 = vmatmul.mubr.f32.gmra.mrb[0].mxu0 %v915
      %v917 = vpop.f32.mrb[0].mxu0
      %v918 = vadd.f32 %v837, %v917
      %v919 = vpop.f32.mrb[0].mxu0
      %920 = vmatprep.mubr.f32.mxu0 0.0
      %v921 = vand.u32 %v397, 4294901760
      %922 = vmatmul.mubr.f32.gmra.mrb[0].mxu0 %v921
      %v923 = vpop.f32.mrb[0].mxu0
      %v924 = vadd.f32 %v843, %v923
      %v925 = vpop.f32.mrb[0].mxu0
      %926 = vdwg.mxu0
      %927 = vset.pattern.permute.xlu0 1
      %928 = vperm.xlu0 %927, %v372
      %v929 = vpop.permute.xlu0 %928
      %930 = vset.pattern.permute.xlu0 1
      %931 = vperm.xlu0 %930, %v373
      %v932 = vpop.permute.xlu0 %931
      %vm933 = vcmp.eq.s32.totalorder %v929, %v379
      %vm934 = vcmp.eq.s32.totalorder %v932, %v379
      %v935 = vsel %vm933, 1, 0
      %v936 = vsel %vm934, 1, 0
      %v937 = vcvt.s32.f32 %v935
      %v938 = vcvt.s32.f32 %v936
      %v940 = vsel %vm392, %v937, 0
      %v943 = vsel %vm392, %v938, 0
      %945 = vmatprep.subr.mxu0 0.0
      %v946 = vand.u32 %v374, 4294901760
      %947 = vmatpush1.msra.mxu0 %v946
      %948 = vmatprep.subr.mxu0 0.0
      %v949 = vand.u32 %v375, 4294901760
      %950 = vmatpush1.msra.mxu0 %v949
      %951 = vmatprep.subr.mxu0 0.0
      %v952 = vand.u32 %v376, 4294901760
      %953 = vmatpush1.msra.mxu0 %v952
      %954 = vmatprep.subr.mxu0 0.0
      %v955 = vand.u32 %v377, 4294901760
      %956 = vmatpush1.msra.mxu0 %v955
      %957 = vmatprep.subr.mxu0 0.0
      %958 = vmatpush1.msra.mxu0 0.0
      %959 = vmatprep.subr.mxu0 0.0
      %960 = vmatpush1.msra.mxu0 0.0
      %961 = vmatprep.subr.mxu0 0.0
      %962 = vmatpush1.msra.mxu0 0.0
      %963 = vmatprep.subr.mxu0 0.0
      %964 = vmatpush1.msra.mxu0 0.0
      %965 = vmatprep.subr.mxu0 0.0
      %966 = vmatpush1.msra.mxu0 0.0
      %967 = vmatprep.subr.mxu0 0.0
      %968 = vmatpush1.msra.mxu0 0.0
      %969 = vmatprep.subr.mxu0 0.0
      %970 = vmatpush1.msra.mxu0 0.0
      %971 = vmatprep.subr.mxu0 0.0
      %972 = vmatpush1.msra.mxu0 0.0
      %973 = vmatprep.subr.mxu0 0.0
      %974 = vmatpush1.msra.mxu0 0.0
      %975 = vmatprep.subr.mxu0 0.0
      %976 = vmatpush1.msra.mxu0 0.0
      %977 = vmatprep.subr.mxu0 0.0
      %978 = vmatpush1.msra.mxu0 0.0
      %979 = vmatprep.subr.mxu0 0.0
      %980 = vmatpush1.msra.mxu0 0.0
      %981 = vmatprep.subr.mxu0 0.0
      %982 = vmatpush1.msra.mxu0 0.0
      %983 = vmatprep.subr.mxu0 0.0
      %984 = vmatpush1.msra.mxu0 0.0
      %985 = vmatprep.subr.mxu0 0.0
      %986 = vmatpush1.msra.mxu0 0.0
      %987 = vmatprep.subr.mxu0 0.0
      %988 = vmatpush1.msra.mxu0 0.0
      %989 = vmatprep.subr.mxu0 0.0
      %990 = vmatpush1.msra.mxu0 0.0
      %991 = vmatprep.subr.mxu0 0.0
      %992 = vmatpush1.msra.mxu0 0.0
      %993 = vmatprep.subr.mxu0 0.0
      %994 = vmatpush1.msra.mxu0 0.0
      %995 = vmatprep.subr.mxu0 0.0
      %996 = vmatpush1.msra.mxu0 0.0
      %997 = vmatprep.subr.mxu0 0.0
      %998 = vmatpush1.msra.mxu0 0.0
      %999 = vmatprep.subr.mxu0 0.0
      %1000 = vmatpush1.msra.mxu0 0.0
      %1001 = vmatprep.subr.mxu0 0.0
      %1002 = vmatpush1.msra.mxu0 0.0
      %1003 = vmatprep.subr.mxu0 0.0
      %1004 = vmatpush1.msra.mxu0 0.0
      %1005 = vmatprep.subr.mxu0 0.0
      %1006 = vmatpush1.msra.mxu0 0.0
      %1007 = vmatprep.subr.mxu0 0.0
      %1008 = vmatpush1.msra.mxu0 0.0
      %1009 = vmatprep.subr.mxu0 0.0
      %1010 = vmatpush1.msra.mxu0 0.0
      %1011 = vmatprep.subr.mxu0 0.0
      %1012 = vmatpush1.msra.mxu0 0.0
      %1013 = vmatprep.mubr.f32.mxu0 0.0
      %v1014 = vand.u32 %v940, 4294901760
      %v1015 = vsub.f32 %v940, %v1014
      %v1016 = vand.u32 %v1015, 4294901760
      %v1017 = vsub.f32 %v1015, %v1016
      %v1018 = vand.u32 %v1017, 4294901760
      %1019 = vmatmul.mubr.f32.gmra.mrb[0].mxu0 %v1018
      %v1020 = vpop.f32.mrb[0].mxu0
      %v1021 = vadd.f32 0.0, %v1020
      %v1022 = vpop.f32.mrb[0].mxu0
      %1023 = vmatprep.mubr.f32.mxu0 0.0
      %v1024 = vand.u32 %v943, 4294901760
      %v1025 = vsub.f32 %v943, %v1024
      %v1026 = vand.u32 %v1025, 4294901760
      %v1027 = vsub.f32 %v1025, %v1026
      %v1028 = vand.u32 %v1027, 4294901760
      %1029 = vmatmul.mubr.f32.gmra.mrb[0].mxu0 %v1028
      %v1030 = vpop.f32.mrb[0].mxu0
      %v1031 = vadd.f32 0.0, %v1030
      %v1032 = vpop.f32.mrb[0].mxu0
      %1033 = vdwg.mxu0
      %1034 = vmatprep.subr.mxu0 0.0
      %v1035 = vand.u32 %v374, 4294901760
      %v1036 = vsub.f32 %v374, %v1035
      %v1037 = vand.u32 %v1036, 4294901760
      %v1038 = vsub.f32 %v1036, %v1037
      %v1039 = vand.u32 %v1038, 4294901760
      %1040 = vmatpush1.msra.mxu0 %v1039
      %1041 = vmatprep.subr.mxu0 0.0
      %v1042 = vand.u32 %v375, 4294901760
      %v1043 = vsub.f32 %v375, %v1042
      %v1044 = vand.u32 %v1043, 4294901760
      %v1045 = vsub.f32 %v1043, %v1044
      %v1046 = vand.u32 %v1045, 4294901760
      %1047 = vmatpush1.msra.mxu0 %v1046
      %1048 = vmatprep.subr.mxu0 0.0
      %v1049 = vand.u32 %v376, 4294901760
      %v1050 = vsub.f32 %v376, %v1049
      %v1051 = vand.u32 %v1050, 4294901760
      %v1052 = vsub.f32 %v1050, %v1051
      %v1053 = vand.u32 %v1052, 4294901760
      %1054 = vmatpush1.msra.mxu0 %v1053
      %1055 = vmatprep.subr.mxu0 0.0
      %v1056 = vand.u32 %v377, 4294901760
      %v1057 = vsub.f32 %v377, %v1056
      %v1058 = vand.u32 %v1057, 4294901760
      %v1059 = vsub.f32 %v1057, %v1058
      %v1060 = vand.u32 %v1059, 4294901760
      %1061 = vmatpush1.msra.mxu0 %v1060
      %1062 = vmatprep.subr.mxu0 0.0
      %1063 = vmatpush1.msra.mxu0 0.0
      %1064 = vmatprep.subr.mxu0 0.0
      %1065 = vmatpush1.msra.mxu0 0.0
      %1066 = vmatprep.subr.mxu0 0.0
      %1067 = vmatpush1.msra.mxu0 0.0
      %1068 = vmatprep.subr.mxu0 0.0
      %1069 = vmatpush1.msra.mxu0 0.0
      %1070 = vmatprep.subr.mxu0 0.0
      %1071 = vmatpush1.msra.mxu0 0.0
      %1072 = vmatprep.subr.mxu0 0.0
      %1073 = vmatpush1.msra.mxu0 0.0
      %1074 = vmatprep.subr.mxu0 0.0
      %1075 = vmatpush1.msra.mxu0 0.0
      %1076 = vmatprep.subr.mxu0 0.0
      %1077 = vmatpush1.msra.mxu0 0.0
      %1078 = vmatprep.subr.mxu0 0.0
      %1079 = vmatpush1.msra.mxu0 0.0
      %1080 = vmatprep.subr.mxu0 0.0
      %1081 = vmatpush1.msra.mxu0 0.0
      %1082 = vmatprep.subr.mxu0 0.0
      %1083 = vmatpush1.msra.mxu0 0.0
      %1084 = vmatprep.subr.mxu0 0.0
      %1085 = vmatpush1.msra.mxu0 0.0
      %1086 = vmatprep.subr.mxu0 0.0
      %1087 = vmatpush1.msra.mxu0 0.0
      %1088 = vmatprep.subr.mxu0 0.0
      %1089 = vmatpush1.msra.mxu0 0.0
      %1090 = vmatprep.subr.mxu0 0.0
      %1091 = vmatpush1.msra.mxu0 0.0
      %1092 = vmatprep.subr.mxu0 0.0
      %1093 = vmatpush1.msra.mxu0 0.0
      %1094 = vmatprep.subr.mxu0 0.0
      %1095 = vmatpush1.msra.mxu0 0.0
      %1096 = vmatprep.subr.mxu0 0.0
      %1097 = vmatpush1.msra.mxu0 0.0
      %1098 = vmatprep.subr.mxu0 0.0
      %1099 = vmatpush1.msra.mxu0 0.0
      %1100 = vmatprep.subr.mxu0 0.0
      %1101 = vmatpush1.msra.mxu0 0.0
      %1102 = vmatprep.subr.mxu0 0.0
      %1103 = vmatpush1.msra.mxu0 0.0
      %1104 = vmatprep.subr.mxu0 0.0
      %1105 = vmatpush1.msra.mxu0 0.0
      %1106 = vmatprep.subr.mxu0 0.0
      %1107 = vmatpush1.msra.mxu0 0.0
      %1108 = vmatprep.subr.mxu0 0.0
      %1109 = vmatpush1.msra.mxu0 0.0
      %1110 = vmatprep.subr.mxu0 0.0
      %1111 = vmatpush1.msra.mxu0 0.0
      %1112 = vmatprep.subr.mxu0 0.0
      %1113 = vmatpush1.msra.mxu0 0.0
      %1114 = vmatprep.subr.mxu0 0.0
      %1115 = vmatpush1.msra.mxu0 0.0
      %1116 = vmatprep.subr.mxu0 0.0
      %1117 = vmatpush1.msra.mxu0 0.0
      %1118 = vmatprep.mubr.f32.mxu0 0.0
      %v1119 = vand.u32 %v940, 4294901760
      %1120 = vmatmul.mubr.f32.gmra.mrb[0].mxu0 %v1119
      %v1121 = vpop.f32.mrb[0].mxu0
      %v1122 = vadd.f32 %v1021, %v1121
      %v1123 = vpop.f32.mrb[0].mxu0
      %1124 = vmatprep.mubr.f32.mxu0 0.0
      %v1125 = vand.u32 %v943, 4294901760
      %1126 = vmatmul.mubr.f32.gmra.mrb[0].mxu0 %v1125
      %v1127 = vpop.f32.mrb[0].mxu0
      %v1128 = vadd.f32 %v1031, %v1127
      %v1129 = vpop.f32.mrb[0].mxu0
      %1130 = vdwg.mxu0
      %1131 = vmatprep.subr.mxu0 0.0
      %v1132 = vand.u32 %v374, 4294901760
      %v1133 = vsub.f32 %v374, %v1132
      %1134 = vmatpush1.msra.mxu0 %v1133
      %1135 = vmatprep.subr.mxu0 0.0
      %v1136 = vand.u32 %v375, 4294901760
      %v1137 = vsub.f32 %v375, %v1136
      %1138 = vmatpush1.msra.mxu0 %v1137
      %1139 = vmatprep.subr.mxu0 0.0
      %v1140 = vand.u32 %v376, 4294901760
      %v1141 = vsub.f32 %v376, %v1140
      %1142 = vmatpush1.msra.mxu0 %v1141
      %1143 = vmatprep.subr.mxu0 0.0
      %v1144 = vand.u32 %v377, 4294901760
      %v1145 = vsub.f32 %v377, %v1144
      %1146 = vmatpush1.msra.mxu0 %v1145
      %1147 = vmatprep.subr.mxu0 0.0
      %1148 = vmatpush1.msra.mxu0 0.0
      %1149 = vmatprep.subr.mxu0 0.0
      %1150 = vmatpush1.msra.mxu0 0.0
      %1151 = vmatprep.subr.mxu0 0.0
      %1152 = vmatpush1.msra.mxu0 0.0
      %1153 = vmatprep.subr.mxu0 0.0
      %1154 = vmatpush1.msra.mxu0 0.0
      %1155 = vmatprep.subr.mxu0 0.0
      %1156 = vmatpush1.msra.mxu0 0.0
      %1157 = vmatprep.subr.mxu0 0.0
      %1158 = vmatpush1.msra.mxu0 0.0
      %1159 = vmatprep.subr.mxu0 0.0
      %1160 = vmatpush1.msra.mxu0 0.0
      %1161 = vmatprep.subr.mxu0 0.0
      %1162 = vmatpush1.msra.mxu0 0.0
      %1163 = vmatprep.subr.mxu0 0.0
      %1164 = vmatpush1.msra.mxu0 0.0
      %1165 = vmatprep.subr.mxu0 0.0
      %1166 = vmatpush1.msra.mxu0 0.0
      %1167 = vmatprep.subr.mxu0 0.0
      %1168 = vmatpush1.msra.mxu0 0.0
      %1169 = vmatprep.subr.mxu0 0.0
      %1170 = vmatpush1.msra.mxu0 0.0
      %1171 = vmatprep.subr.mxu0 0.0
      %1172 = vmatpush1.msra.mxu0 0.0
      %1173 = vmatprep.subr.mxu0 0.0
      %1174 = vmatpush1.msra.mxu0 0.0
      %1175 = vmatprep.subr.mxu0 0.0
      %1176 = vmatpush1.msra.mxu0 0.0
      %1177 = vmatprep.subr.mxu0 0.0
      %1178 = vmatpush1.msra.mxu0 0.0
      %1179 = vmatprep.subr.mxu0 0.0
      %1180 = vmatpush1.msra.mxu0 0.0
      %1181 = vmatprep.subr.mxu0 0.0
      %1182 = vmatpush1.msra.mxu0 0.0
      %1183 = vmatprep.subr.mxu0 0.0
      %1184 = vmatpush1.msra.mxu0 0.0
      %1185 = vmatprep.subr.mxu0 0.0
      %1186 = vmatpush1.msra.mxu0 0.0
      %1187 = vmatprep.subr.mxu0 0.0
      %1188 = vmatpush1.msra.mxu0 0.0
      %1189 = vmatprep.subr.mxu0 0.0
      %1190 = vmatpush1.msra.mxu0 0.0
      %1191 = vmatprep.subr.mxu0 0.0
      %1192 = vmatpush1.msra.mxu0 0.0
      %1193 = vmatprep.subr.mxu0 0.0
      %1194 = vmatpush1.msra.mxu0 0.0
      %1195 = vmatprep.subr.mxu0 0.0
      %1196 = vmatpush1.msra.mxu0 0.0
      %1197 = vmatprep.subr.mxu0 0.0
      %1198 = vmatpush1.msra.mxu0 0.0
      %1199 = vmatprep.subr.mxu0 0.0
      %1200 = vmatpush1.msra.mxu0 0.0
      %1201 = vmatprep.subr.mxu0 0.0
      %1202 = vmatpush1.msra.mxu0 0.0
      %1203 = vmatprep.mubr.f32.mxu0 0.0
      %v1204 = vand.u32 %v940, 4294901760
      %v1205 = vsub.f32 %v940, %v1204
      %1206 = vmatmul.mubr.f32.gmra.mrb[0].mxu0 %v1205
      %v1207 = vpop.f32.mrb[0].mxu0
      %v1208 = vadd.f32 %v1122, %v1207
      %v1209 = vpop.f32.mrb[0].mxu0
      %1210 = vmatprep.mubr.f32.mxu0 0.0
      %v1211 = vand.u32 %v943, 4294901760
      %v1212 = vsub.f32 %v943, %v1211
      %1213 = vmatmul.mubr.f32.gmra.mrb[0].mxu0 %v1212
      %v1214 = vpop.f32.mrb[0].mxu0
      %v1215 = vadd.f32 %v1128, %v1214
      %v1216 = vpop.f32.mrb[0].mxu0
      %1217 = vdwg.mxu0
      %1218 = vmatprep.subr.mxu0 0.0
      %v1219 = vand.u32 %v374, 4294901760
      %1220 = vmatpush1.msra.mxu0 %v1219
      %1221 = vmatprep.subr.mxu0 0.0
      %v1222 = vand.u32 %v375, 4294901760
      %1223 = vmatpush1.msra.mxu0 %v1222
      %1224 = vmatprep.subr.mxu0 0.0
      %v1225 = vand.u32 %v376, 4294901760
      %1226 = vmatpush1.msra.mxu0 %v1225
      %1227 = vmatprep.subr.mxu0 0.0
      %v1228 = vand.u32 %v377, 4294901760
      %1229 = vmatpush1.msra.mxu0 %v1228
      %1230 = vmatprep.subr.mxu0 0.0
      %1231 = vmatpush1.msra.mxu0 0.0
      %1232 = vmatprep.subr.mxu0 0.0
      %1233 = vmatpush1.msra.mxu0 0.0
      %1234 = vmatprep.subr.mxu0 0.0
      %1235 = vmatpush1.msra.mxu0 0.0
      %1236 = vmatprep.subr.mxu0 0.0
      %1237 = vmatpush1.msra.mxu0 0.0
      %1238 = vmatprep.subr.mxu0 0.0
      %1239 = vmatpush1.msra.mxu0 0.0
      %1240 = vmatprep.subr.mxu0 0.0
      %1241 = vmatpush1.msra.mxu0 0.0
      %1242 = vmatprep.subr.mxu0 0.0
      %1243 = vmatpush1.msra.mxu0 0.0
      %1244 = vmatprep.subr.mxu0 0.0
      %1245 = vmatpush1.msra.mxu0 0.0
      %1246 = vmatprep.subr.mxu0 0.0
      %1247 = vmatpush1.msra.mxu0 0.0
      %1248 = vmatprep.subr.mxu0 0.0
      %1249 = vmatpush1.msra.mxu0 0.0
      %1250 = vmatprep.subr.mxu0 0.0
      %1251 = vmatpush1.msra.mxu0 0.0
      %1252 = vmatprep.subr.mxu0 0.0
      %1253 = vmatpush1.msra.mxu0 0.0
      %1254 = vmatprep.subr.mxu0 0.0
      %1255 = vmatpush1.msra.mxu0 0.0
      %1256 = vmatprep.subr.mxu0 0.0
      %1257 = vmatpush1.msra.mxu0 0.0
      %1258 = vmatprep.subr.mxu0 0.0
      %1259 = vmatpush1.msra.mxu0 0.0
      %1260 = vmatprep.subr.mxu0 0.0
      %1261 = vmatpush1.msra.mxu0 0.0
      %1262 = vmatprep.subr.mxu0 0.0
      %1263 = vmatpush1.msra.mxu0 0.0
      %1264 = vmatprep.subr.mxu0 0.0
      %1265 = vmatpush1.msra.mxu0 0.0
      %1266 = vmatprep.subr.mxu0 0.0
      %1267 = vmatpush1.msra.mxu0 0.0
      %1268 = vmatprep.subr.mxu0 0.0
      %1269 = vmatpush1.msra.mxu0 0.0
      %1270 = vmatprep.subr.mxu0 0.0
      %1271 = vmatpush1.msra.mxu0 0.0
      %1272 = vmatprep.subr.mxu0 0.0
      %1273 = vmatpush1.msra.mxu0 0.0
      %1274 = vmatprep.subr.mxu0 0.0
      %1275 = vmatpush1.msra.mxu0 0.0
      %1276 = vmatprep.subr.mxu0 0.0
      %1277 = vmatpush1.msra.mxu0 0.0
      %1278 = vmatprep.subr.mxu0 0.0
      %1279 = vmatpush1.msra.mxu0 0.0
      %1280 = vmatprep.subr.mxu0 0.0
      %1281 = vmatpush1.msra.mxu0 0.0
      %1282 = vmatprep.subr.mxu0 0.0
      %1283 = vmatpush1.msra.mxu0 0.0
      %1284 = vmatprep.subr.mxu0 0.0
      %1285 = vmatpush1.msra.mxu0 0.0
      %1286 = vmatprep.mubr.f32.mxu0 0.0
      %v1287 = vand.u32 %v940, 4294901760
      %v1288 = vsub.f32 %v940, %v1287
      %v1289 = vand.u32 %v1288, 4294901760
      %1290 = vmatmul.mubr.f32.gmra.mrb[0].mxu0 %v1289
      %v1291 = vpop.f32.mrb[0].mxu0
      %v1292 = vadd.f32 %v1208, %v1291
      %v1293 = vpop.f32.mrb[0].mxu0
      %1294 = vmatprep.mubr.f32.mxu0 0.0
      %v1295 = vand.u32 %v943, 4294901760
      %v1296 = vsub.f32 %v943, %v1295
      %v1297 = vand.u32 %v1296, 4294901760
      %1298 = vmatmul.mubr.f32.gmra.mrb[0].mxu0 %v1297
      %v1299 = vpop.f32.mrb[0].mxu0
      %v1300 = vadd.f32 %v1215, %v1299
      %v1301 = vpop.f32.mrb[0].mxu0
      %1302 = vdwg.mxu0
      %1303 = vmatprep.subr.mxu0 0.0
      %v1304 = vand.u32 %v374, 4294901760
      %v1305 = vsub.f32 %v374, %v1304
      %v1306 = vand.u32 %v1305, 4294901760
      %1307 = vmatpush1.msra.mxu0 %v1306
      %1308 = vmatprep.subr.mxu0 0.0
      %v1309 = vand.u32 %v375, 4294901760
      %v1310 = vsub.f32 %v375, %v1309
      %v1311 = vand.u32 %v1310, 4294901760
      %1312 = vmatpush1.msra.mxu0 %v1311
      %1313 = vmatprep.subr.mxu0 0.0
      %v1314 = vand.u32 %v376, 4294901760
      %v1315 = vsub.f32 %v376, %v1314
      %v1316 = vand.u32 %v1315, 4294901760
      %1317 = vmatpush1.msra.mxu0 %v1316
      %1318 = vmatprep.subr.mxu0 0.0
      %v1319 = vand.u32 %v377, 4294901760
      %v1320 = vsub.f32 %v377, %v1319
      %v1321 = vand.u32 %v1320, 4294901760
      %1322 = vmatpush1.msra.mxu0 %v1321
      %1323 = vmatprep.subr.mxu0 0.0
      %1324 = vmatpush1.msra.mxu0 0.0
      %1325 = vmatprep.subr.mxu0 0.0
      %1326 = vmatpush1.msra.mxu0 0.0
      %1327 = vmatprep.subr.mxu0 0.0
      %1328 = vmatpush1.msra.mxu0 0.0
      %1329 = vmatprep.subr.mxu0 0.0
      %1330 = vmatpush1.msra.mxu0 0.0
      %1331 = vmatprep.subr.mxu0 0.0
      %1332 = vmatpush1.msra.mxu0 0.0
      %1333 = vmatprep.subr.mxu0 0.0
      %1334 = vmatpush1.msra.mxu0 0.0
      %1335 = vmatprep.subr.mxu0 0.0
      %1336 = vmatpush1.msra.mxu0 0.0
      %1337 = vmatprep.subr.mxu0 0.0
      %1338 = vmatpush1.msra.mxu0 0.0
      %1339 = vmatprep.subr.mxu0 0.0
      %1340 = vmatpush1.msra.mxu0 0.0
      %1341 = vmatprep.subr.mxu0 0.0
      %1342 = vmatpush1.msra.mxu0 0.0
      %1343 = vmatprep.subr.mxu0 0.0
      %1344 = vmatpush1.msra.mxu0 0.0
      %1345 = vmatprep.subr.mxu0 0.0
      %1346 = vmatpush1.msra.mxu0 0.0
      %1347 = vmatprep.subr.mxu0 0.0
      %1348 = vmatpush1.msra.mxu0 0.0
      %1349 = vmatprep.subr.mxu0 0.0
      %1350 = vmatpush1.msra.mxu0 0.0
      %1351 = vmatprep.subr.mxu0 0.0
      %1352 = vmatpush1.msra.mxu0 0.0
      %1353 = vmatprep.subr.mxu0 0.0
      %1354 = vmatpush1.msra.mxu0 0.0
      %1355 = vmatprep.subr.mxu0 0.0
      %1356 = vmatpush1.msra.mxu0 0.0
      %1357 = vmatprep.subr.mxu0 0.0
      %1358 = vmatpush1.msra.mxu0 0.0
      %1359 = vmatprep.subr.mxu0 0.0
      %1360 = vmatpush1.msra.mxu0 0.0
      %1361 = vmatprep.subr.mxu0 0.0
      %1362 = vmatpush1.msra.mxu0 0.0
      %1363 = vmatprep.subr.mxu0 0.0
      %1364 = vmatpush1.msra.mxu0 0.0
      %1365 = vmatprep.subr.mxu0 0.0
      %1366 = vmatpush1.msra.mxu0 0.0
      %1367 = vmatprep.subr.mxu0 0.0
      %1368 = vmatpush1.msra.mxu0 0.0
      %1369 = vmatprep.subr.mxu0 0.0
      %1370 = vmatpush1.msra.mxu0 0.0
      %1371 = vmatprep.subr.mxu0 0.0
      %1372 = vmatpush1.msra.mxu0 0.0
      %1373 = vmatprep.subr.mxu0 0.0
      %1374 = vmatpush1.msra.mxu0 0.0
      %1375 = vmatprep.subr.mxu0 0.0
      %1376 = vmatpush1.msra.mxu0 0.0
      %1377 = vmatprep.subr.mxu0 0.0
      %1378 = vmatpush1.msra.mxu0 0.0
      %1379 = vmatprep.mubr.f32.mxu0 0.0
      %v1380 = vand.u32 %v940, 4294901760
      %1381 = vmatmul.mubr.f32.gmra.mrb[0].mxu0 %v1380
      %v1382 = vpop.f32.mrb[0].mxu0
      %v1383 = vadd.f32 %v1292, %v1382
      %v1384 = vpop.f32.mrb[0].mxu0
      %1385 = vmatprep.mubr.f32.mxu0 0.0
      %v1386 = vand.u32 %v943, 4294901760
      %1387 = vmatmul.mubr.f32.gmra.mrb[0].mxu0 %v1386
      %v1388 = vpop.f32.mrb[0].mxu0
      %v1389 = vadd.f32 %v1300, %v1388
      %v1390 = vpop.f32.mrb[0].mxu0
      %1391 = vdwg.mxu0
      %1392 = vmatprep.subr.mxu0 0.0
      %v1393 = vand.u32 %v374, 4294901760
      %1394 = vmatpush1.msra.mxu0 %v1393
      %1395 = vmatprep.subr.mxu0 0.0
      %v1396 = vand.u32 %v375, 4294901760
      %1397 = vmatpush1.msra.mxu0 %v1396
      %1398 = vmatprep.subr.mxu0 0.0
      %v1399 = vand.u32 %v376, 4294901760
      %1400 = vmatpush1.msra.mxu0 %v1399
      %1401 = vmatprep.subr.mxu0 0.0
      %v1402 = vand.u32 %v377, 4294901760
      %1403 = vmatpush1.msra.mxu0 %v1402
      %1404 = vmatprep.subr.mxu0 0.0
      %1405 = vmatpush1.msra.mxu0 0.0
      %1406 = vmatprep.subr.mxu0 0.0
      %1407 = vmatpush1.msra.mxu0 0.0
      %1408 = vmatprep.subr.mxu0 0.0
      %1409 = vmatpush1.msra.mxu0 0.0
      %1410 = vmatprep.subr.mxu0 0.0
      %1411 = vmatpush1.msra.mxu0 0.0
      %1412 = vmatprep.subr.mxu0 0.0
      %1413 = vmatpush1.msra.mxu0 0.0
      %1414 = vmatprep.subr.mxu0 0.0
      %1415 = vmatpush1.msra.mxu0 0.0
      %1416 = vmatprep.subr.mxu0 0.0
      %1417 = vmatpush1.msra.mxu0 0.0
      %1418 = vmatprep.subr.mxu0 0.0
      %1419 = vmatpush1.msra.mxu0 0.0
      %1420 = vmatprep.subr.mxu0 0.0
      %1421 = vmatpush1.msra.mxu0 0.0
      %1422 = vmatprep.subr.mxu0 0.0
      %1423 = vmatpush1.msra.mxu0 0.0
      %1424 = vmatprep.subr.mxu0 0.0
      %1425 = vmatpush1.msra.mxu0 0.0
      %1426 = vmatprep.subr.mxu0 0.0
      %1427 = vmatpush1.msra.mxu0 0.0
      %1428 = vmatprep.subr.mxu0 0.0
      %1429 = vmatpush1.msra.mxu0 0.0
      %1430 = vmatprep.subr.mxu0 0.0
      %1431 = vmatpush1.msra.mxu0 0.0
      %1432 = vmatprep.subr.mxu0 0.0
      %1433 = vmatpush1.msra.mxu0 0.0
      %1434 = vmatprep.subr.mxu0 0.0
      %1435 = vmatpush1.msra.mxu0 0.0
      %1436 = vmatprep.subr.mxu0 0.0
      %1437 = vmatpush1.msra.mxu0 0.0
      %1438 = vmatprep.subr.mxu0 0.0
      %1439 = vmatpush1.msra.mxu0 0.0
      %1440 = vmatprep.subr.mxu0 0.0
      %1441 = vmatpush1.msra.mxu0 0.0
      %1442 = vmatprep.subr.mxu0 0.0
      %1443 = vmatpush1.msra.mxu0 0.0
      %1444 = vmatprep.subr.mxu0 0.0
      %1445 = vmatpush1.msra.mxu0 0.0
      %1446 = vmatprep.subr.mxu0 0.0
      %1447 = vmatpush1.msra.mxu0 0.0
      %1448 = vmatprep.subr.mxu0 0.0
      %1449 = vmatpush1.msra.mxu0 0.0
      %1450 = vmatprep.subr.mxu0 0.0
      %1451 = vmatpush1.msra.mxu0 0.0
      %1452 = vmatprep.subr.mxu0 0.0
      %1453 = vmatpush1.msra.mxu0 0.0
      %1454 = vmatprep.subr.mxu0 0.0
      %1455 = vmatpush1.msra.mxu0 0.0
      %1456 = vmatprep.subr.mxu0 0.0
      %1457 = vmatpush1.msra.mxu0 0.0
      %1458 = vmatprep.subr.mxu0 0.0
      %1459 = vmatpush1.msra.mxu0 0.0
      %1460 = vmatprep.mubr.f32.mxu0 0.0
      %v1461 = vand.u32 %v940, 4294901760
      %1462 = vmatmul.mubr.f32.gmra.mrb[0].mxu0 %v1461
      %v1463 = vpop.f32.mrb[0].mxu0
      %v1464 = vadd.f32 %v1383, %v1463
      %v1465 = vpop.f32.mrb[0].mxu0
      %1466 = vmatprep.mubr.f32.mxu0 0.0
      %v1467 = vand.u32 %v943, 4294901760
      %1468 = vmatmul.mubr.f32.gmra.mrb[0].mxu0 %v1467
      %v1469 = vpop.f32.mrb[0].mxu0
      %v1470 = vadd.f32 %v1389, %v1469
      %v1471 = vpop.f32.mrb[0].mxu0
      %1472 = vdwg.mxu0
      %1473 = vset.pattern.permute.xlu0 2
      %1474 = vperm.xlu0 %1473, %v372
      %v1475 = vpop.permute.xlu0 %1474
      %1476 = vset.pattern.permute.xlu0 2
      %1477 = vperm.xlu0 %1476, %v373
      %v1478 = vpop.permute.xlu0 %1477
      %vm1479 = vcmp.eq.s32.totalorder %v1475, %v379
      %vm1480 = vcmp.eq.s32.totalorder %v1478, %v379
      %v1481 = vsel %vm1479, 1, 0
      %v1482 = vsel %vm1480, 1, 0
      %v1483 = vcvt.s32.f32 %v1481
      %v1484 = vcvt.s32.f32 %v1482
      %v1486 = vsel %vm392, %v1483, 0
      %v1489 = vsel %vm392, %v1484, 0
      %1491 = vmatprep.subr.mxu0 0.0
      %v1492 = vand.u32 %v374, 4294901760
      %1493 = vmatpush1.msra.mxu0 %v1492
      %1494 = vmatprep.subr.mxu0 0.0
      %v1495 = vand.u32 %v375, 4294901760
      %1496 = vmatpush1.msra.mxu0 %v1495
      %1497 = vmatprep.subr.mxu0 0.0
      %v1498 = vand.u32 %v376, 4294901760
      %1499 = vmatpush1.msra.mxu0 %v1498
      %1500 = vmatprep.subr.mxu0 0.0
      %v1501 = vand.u32 %v377, 4294901760
      %1502 = vmatpush1.msra.mxu0 %v1501
      %1503 = vmatprep.subr.mxu0 0.0
      %1504 = vmatpush1.msra.mxu0 0.0
      %1505 = vmatprep.subr.mxu0 0.0
      %1506 = vmatpush1.msra.mxu0 0.0
      %1507 = vmatprep.subr.mxu0 0.0
      %1508 = vmatpush1.msra.mxu0 0.0
      %1509 = vmatprep.subr.mxu0 0.0
      %1510 = vmatpush1.msra.mxu0 0.0
      %1511 = vmatprep.subr.mxu0 0.0
      %1512 = vmatpush1.msra.mxu0 0.0
      %1513 = vmatprep.subr.mxu0 0.0
      %1514 = vmatpush1.msra.mxu0 0.0
      %1515 = vmatprep.subr.mxu0 0.0
      %1516 = vmatpush1.msra.mxu0 0.0
      %1517 = vmatprep.subr.mxu0 0.0
      %1518 = vmatpush1.msra.mxu0 0.0
      %1519 = vmatprep.subr.mxu0 0.0
      %1520 = vmatpush1.msra.mxu0 0.0
      %1521 = vmatprep.subr.mxu0 0.0
      %1522 = vmatpush1.msra.mxu0 0.0
      %1523 = vmatprep.subr.mxu0 0.0
      %1524 = vmatpush1.msra.mxu0 0.0
      %1525 = vmatprep.subr.mxu0 0.0
      %1526 = vmatpush1.msra.mxu0 0.0
      %1527 = vmatprep.subr.mxu0 0.0
      %1528 = vmatpush1.msra.mxu0 0.0
      %1529 = vmatprep.subr.mxu0 0.0
      %1530 = vmatpush1.msra.mxu0 0.0
      %1531 = vmatprep.subr.mxu0 0.0
      %1532 = vmatpush1.msra.mxu0 0.0
      %1533 = vmatprep.subr.mxu0 0.0
      %1534 = vmatpush1.msra.mxu0 0.0
      %1535 = vmatprep.subr.mxu0 0.0
      %1536 = vmatpush1.msra.mxu0 0.0
      %1537 = vmatprep.subr.mxu0 0.0
      %1538 = vmatpush1.msra.mxu0 0.0
      %1539 = vmatprep.subr.mxu0 0.0
      %1540 = vmatpush1.msra.mxu0 0.0
      %1541 = vmatprep.subr.mxu0 0.0
      %1542 = vmatpush1.msra.mxu0 0.0
      %1543 = vmatprep.subr.mxu0 0.0
      %1544 = vmatpush1.msra.mxu0 0.0
      %1545 = vmatprep.subr.mxu0 0.0
      %1546 = vmatpush1.msra.mxu0 0.0
      %1547 = vmatprep.subr.mxu0 0.0
      %1548 = vmatpush1.msra.mxu0 0.0
      %1549 = vmatprep.subr.mxu0 0.0
      %1550 = vmatpush1.msra.mxu0 0.0
      %1551 = vmatprep.subr.mxu0 0.0
      %1552 = vmatpush1.msra.mxu0 0.0
      %1553 = vmatprep.subr.mxu0 0.0
      %1554 = vmatpush1.msra.mxu0 0.0
      %1555 = vmatprep.subr.mxu0 0.0
      %1556 = vmatpush1.msra.mxu0 0.0
      %1557 = vmatprep.subr.mxu0 0.0
      %1558 = vmatpush1.msra.mxu0 0.0
      %1559 = vmatprep.mubr.f32.mxu0 0.0
      %v1560 = vand.u32 %v1486, 4294901760
      %v1561 = vsub.f32 %v1486, %v1560
      %v1562 = vand.u32 %v1561, 4294901760
      %v1563 = vsub.f32 %v1561, %v1562
      %v1564 = vand.u32 %v1563, 4294901760
      %1565 = vmatmul.mubr.f32.gmra.mrb[0].mxu0 %v1564
      %v1566 = vpop.f32.mrb[0].mxu0
      %v1567 = vadd.f32 0.0, %v1566
      %v1568 = vpop.f32.mrb[0].mxu0
      %1569 = vmatprep.mubr.f32.mxu0 0.0
      %v1570 = vand.u32 %v1489, 4294901760
      %v1571 = vsub.f32 %v1489, %v1570
      %v1572 = vand.u32 %v1571, 4294901760
      %v1573 = vsub.f32 %v1571, %v1572
      %v1574 = vand.u32 %v1573, 4294901760
      %1575 = vmatmul.mubr.f32.gmra.mrb[0].mxu0 %v1574
      %v1576 = vpop.f32.mrb[0].mxu0
      %v1577 = vadd.f32 0.0, %v1576
      %v1578 = vpop.f32.mrb[0].mxu0
      %1579 = vdwg.mxu0
      %1580 = vmatprep.subr.mxu0 0.0
      %v1581 = vand.u32 %v374, 4294901760
      %v1582 = vsub.f32 %v374, %v1581
      %v1583 = vand.u32 %v1582, 4294901760
      %v1584 = vsub.f32 %v1582, %v1583
      %v1585 = vand.u32 %v1584, 4294901760
      %1586 = vmatpush1.msra.mxu0 %v1585
      %1587 = vmatprep.subr.mxu0 0.0
      %v1588 = vand.u32 %v375, 4294901760
      %v1589 = vsub.f32 %v375, %v1588
      %v1590 = vand.u32 %v1589, 4294901760
      %v1591 = vsub.f32 %v1589, %v1590
      %v1592 = vand.u32 %v1591, 4294901760
      %1593 = vmatpush1.msra.mxu0 %v1592
      %1594 = vmatprep.subr.mxu0 0.0
      %v1595 = vand.u32 %v376, 4294901760
      %v1596 = vsub.f32 %v376, %v1595
      %v1597 = vand.u32 %v1596, 4294901760
      %v1598 = vsub.f32 %v1596, %v1597
      %v1599 = vand.u32 %v1598, 4294901760
      %1600 = vmatpush1.msra.mxu0 %v1599
      %1601 = vmatprep.subr.mxu0 0.0
      %v1602 = vand.u32 %v377, 4294901760
      %v1603 = vsub.f32 %v377, %v1602
      %v1604 = vand.u32 %v1603, 4294901760
      %v1605 = vsub.f32 %v1603, %v1604
      %v1606 = vand.u32 %v1605, 4294901760
      %1607 = vmatpush1.msra.mxu0 %v1606
      %1608 = vmatprep.subr.mxu0 0.0
      %1609 = vmatpush1.msra.mxu0 0.0
      %1610 = vmatprep.subr.mxu0 0.0
      %1611 = vmatpush1.msra.mxu0 0.0
      %1612 = vmatprep.subr.mxu0 0.0
      %1613 = vmatpush1.msra.mxu0 0.0
      %1614 = vmatprep.subr.mxu0 0.0
      %1615 = vmatpush1.msra.mxu0 0.0
      %1616 = vmatprep.subr.mxu0 0.0
      %1617 = vmatpush1.msra.mxu0 0.0
      %1618 = vmatprep.subr.mxu0 0.0
      %1619 = vmatpush1.msra.mxu0 0.0
      %1620 = vmatprep.subr.mxu0 0.0
      %1621 = vmatpush1.msra.mxu0 0.0
      %1622 = vmatprep.subr.mxu0 0.0
      %1623 = vmatpush1.msra.mxu0 0.0
      %1624 = vmatprep.subr.mxu0 0.0
      %1625 = vmatpush1.msra.mxu0 0.0
      %1626 = vmatprep.subr.mxu0 0.0
      %1627 = vmatpush1.msra.mxu0 0.0
      %1628 = vmatprep.subr.mxu0 0.0
      %1629 = vmatpush1.msra.mxu0 0.0
      %1630 = vmatprep.subr.mxu0 0.0
      %1631 = vmatpush1.msra.mxu0 0.0
      %1632 = vmatprep.subr.mxu0 0.0
      %1633 = vmatpush1.msra.mxu0 0.0
      %1634 = vmatprep.subr.mxu0 0.0
      %1635 = vmatpush1.msra.mxu0 0.0
      %1636 = vmatprep.subr.mxu0 0.0
      %1637 = vmatpush1.msra.mxu0 0.0
      %1638 = vmatprep.subr.mxu0 0.0
      %1639 = vmatpush1.msra.mxu0 0.0
      %1640 = vmatprep.subr.mxu0 0.0
      %1641 = vmatpush1.msra.mxu0 0.0
      %1642 = vmatprep.subr.mxu0 0.0
      %1643 = vmatpush1.msra.mxu0 0.0
      %1644 = vmatprep.subr.mxu0 0.0
      %1645 = vmatpush1.msra.mxu0 0.0
      %1646 = vmatprep.subr.mxu0 0.0
      %1647 = vmatpush1.msra.mxu0 0.0
      %1648 = vmatprep.subr.mxu0 0.0
      %1649 = vmatpush1.msra.mxu0 0.0
      %1650 = vmatprep.subr.mxu0 0.0
      %1651 = vmatpush1.msra.mxu0 0.0
      %1652 = vmatprep.subr.mxu0 0.0
      %1653 = vmatpush1.msra.mxu0 0.0
      %1654 = vmatprep.subr.mxu0 0.0
      %1655 = vmatpush1.msra.mxu0 0.0
      %1656 = vmatprep.subr.mxu0 0.0
      %1657 = vmatpush1.msra.mxu0 0.0
      %1658 = vmatprep.subr.mxu0 0.0
      %1659 = vmatpush1.msra.mxu0 0.0
      %1660 = vmatprep.subr.mxu0 0.0
      %1661 = vmatpush1.msra.mxu0 0.0
      %1662 = vmatprep.subr.mxu0 0.0
      %1663 = vmatpush1.msra.mxu0 0.0
      %1664 = vmatprep.mubr.f32.mxu0 0.0
      %v1665 = vand.u32 %v1486, 4294901760
      %1666 = vmatmul.mubr.f32.gmra.mrb[0].mxu0 %v1665
      %v1667 = vpop.f32.mrb[0].mxu0
      %v1668 = vadd.f32 %v1567, %v1667
      %v1669 = vpop.f32.mrb[0].mxu0
      %1670 = vmatprep.mubr.f32.mxu0 0.0
      %v1671 = vand.u32 %v1489, 4294901760
      %1672 = vmatmul.mubr.f32.gmra.mrb[0].mxu0 %v1671
      %v1673 = vpop.f32.mrb[0].mxu0
      %v1674 = vadd.f32 %v1577, %v1673
      %v1675 = vpop.f32.mrb[0].mxu0
      %1676 = vdwg.mxu0
      %1677 = vmatprep.subr.mxu0 0.0
      %v1678 = vand.u32 %v374, 4294901760
      %v1679 = vsub.f32 %v374, %v1678
      %1680 = vmatpush1.msra.mxu0 %v1679
      %1681 = vmatprep.subr.mxu0 0.0
      %v1682 = vand.u32 %v375, 4294901760
      %v1683 = vsub.f32 %v375, %v1682
      %1684 = vmatpush1.msra.mxu0 %v1683
      %1685 = vmatprep.subr.mxu0 0.0
      %v1686 = vand.u32 %v376, 4294901760
      %v1687 = vsub.f32 %v376, %v1686
      %1688 = vmatpush1.msra.mxu0 %v1687
      %1689 = vmatprep.subr.mxu0 0.0
      %v1690 = vand.u32 %v377, 4294901760
      %v1691 = vsub.f32 %v377, %v1690
      %1692 = vmatpush1.msra.mxu0 %v1691
      %1693 = vmatprep.subr.mxu0 0.0
      %1694 = vmatpush1.msra.mxu0 0.0
      %1695 = vmatprep.subr.mxu0 0.0
      %1696 = vmatpush1.msra.mxu0 0.0
      %1697 = vmatprep.subr.mxu0 0.0
      %1698 = vmatpush1.msra.mxu0 0.0
      %1699 = vmatprep.subr.mxu0 0.0
      %1700 = vmatpush1.msra.mxu0 0.0
      %1701 = vmatprep.subr.mxu0 0.0
      %1702 = vmatpush1.msra.mxu0 0.0
      %1703 = vmatprep.subr.mxu0 0.0
      %1704 = vmatpush1.msra.mxu0 0.0
      %1705 = vmatprep.subr.mxu0 0.0
      %1706 = vmatpush1.msra.mxu0 0.0
      %1707 = vmatprep.subr.mxu0 0.0
      %1708 = vmatpush1.msra.mxu0 0.0
      %1709 = vmatprep.subr.mxu0 0.0
      %1710 = vmatpush1.msra.mxu0 0.0
      %1711 = vmatprep.subr.mxu0 0.0
      %1712 = vmatpush1.msra.mxu0 0.0
      %1713 = vmatprep.subr.mxu0 0.0
      %1714 = vmatpush1.msra.mxu0 0.0
      %1715 = vmatprep.subr.mxu0 0.0
      %1716 = vmatpush1.msra.mxu0 0.0
      %1717 = vmatprep.subr.mxu0 0.0
      %1718 = vmatpush1.msra.mxu0 0.0
      %1719 = vmatprep.subr.mxu0 0.0
      %1720 = vmatpush1.msra.mxu0 0.0
      %1721 = vmatprep.subr.mxu0 0.0
      %1722 = vmatpush1.msra.mxu0 0.0
      %1723 = vmatprep.subr.mxu0 0.0
      %1724 = vmatpush1.msra.mxu0 0.0
      %1725 = vmatprep.subr.mxu0 0.0
      %1726 = vmatpush1.msra.mxu0 0.0
      %1727 = vmatprep.subr.mxu0 0.0
      %1728 = vmatpush1.msra.mxu0 0.0
      %1729 = vmatprep.subr.mxu0 0.0
      %1730 = vmatpush1.msra.mxu0 0.0
      %1731 = vmatprep.subr.mxu0 0.0
      %1732 = vmatpush1.msra.mxu0 0.0
      %1733 = vmatprep.subr.mxu0 0.0
      %1734 = vmatpush1.msra.mxu0 0.0
      %1735 = vmatprep.subr.mxu0 0.0
      %1736 = vmatpush1.msra.mxu0 0.0
      %1737 = vmatprep.subr.mxu0 0.0
      %1738 = vmatpush1.msra.mxu0 0.0
      %1739 = vmatprep.subr.mxu0 0.0
      %1740 = vmatpush1.msra.mxu0 0.0
      %1741 = vmatprep.subr.mxu0 0.0
      %1742 = vmatpush1.msra.mxu0 0.0
      %1743 = vmatprep.subr.mxu0 0.0
      %1744 = vmatpush1.msra.mxu0 0.0
      %1745 = vmatprep.subr.mxu0 0.0
      %1746 = vmatpush1.msra.mxu0 0.0
      %1747 = vmatprep.subr.mxu0 0.0
      %1748 = vmatpush1.msra.mxu0 0.0
      %1749 = vmatprep.mubr.f32.mxu0 0.0
      %v1750 = vand.u32 %v1486, 4294901760
      %v1751 = vsub.f32 %v1486, %v1750
      %1752 = vmatmul.mubr.f32.gmra.mrb[0].mxu0 %v1751
      %v1753 = vpop.f32.mrb[0].mxu0
      %v1754 = vadd.f32 %v1668, %v1753
      %v1755 = vpop.f32.mrb[0].mxu0
      %1756 = vmatprep.mubr.f32.mxu0 0.0
      %v1757 = vand.u32 %v1489, 4294901760
      %v1758 = vsub.f32 %v1489, %v1757
      %1759 = vmatmul.mubr.f32.gmra.mrb[0].mxu0 %v1758
      %v1760 = vpop.f32.mrb[0].mxu0
      %v1761 = vadd.f32 %v1674, %v1760
      %v1762 = vpop.f32.mrb[0].mxu0
      %1763 = vdwg.mxu0
      %1764 = vmatprep.subr.mxu0 0.0
      %v1765 = vand.u32 %v374, 4294901760
      %1766 = vmatpush1.msra.mxu0 %v1765
      %1767 = vmatprep.subr.mxu0 0.0
      %v1768 = vand.u32 %v375, 4294901760
      %1769 = vmatpush1.msra.mxu0 %v1768
      %1770 = vmatprep.subr.mxu0 0.0
      %v1771 = vand.u32 %v376, 4294901760
      %1772 = vmatpush1.msra.mxu0 %v1771
      %1773 = vmatprep.subr.mxu0 0.0
      %v1774 = vand.u32 %v377, 4294901760
      %1775 = vmatpush1.msra.mxu0 %v1774
      %1776 = vmatprep.subr.mxu0 0.0
      %1777 = vmatpush1.msra.mxu0 0.0
      %1778 = vmatprep.subr.mxu0 0.0
      %1779 = vmatpush1.msra.mxu0 0.0
      %1780 = vmatprep.subr.mxu0 0.0
      %1781 = vmatpush1.msra.mxu0 0.0
      %1782 = vmatprep.subr.mxu0 0.0
      %1783 = vmatpush1.msra.mxu0 0.0
      %1784 = vmatprep.subr.mxu0 0.0
      %1785 = vmatpush1.msra.mxu0 0.0
      %1786 = vmatprep.subr.mxu0 0.0
      %1787 = vmatpush1.msra.mxu0 0.0
      %1788 = vmatprep.subr.mxu0 0.0
      %1789 = vmatpush1.msra.mxu0 0.0
      %1790 = vmatprep.subr.mxu0 0.0
      %1791 = vmatpush1.msra.mxu0 0.0
      %1792 = vmatprep.subr.mxu0 0.0
      %1793 = vmatpush1.msra.mxu0 0.0
      %1794 = vmatprep.subr.mxu0 0.0
      %1795 = vmatpush1.msra.mxu0 0.0
      %1796 = vmatprep.subr.mxu0 0.0
      %1797 = vmatpush1.msra.mxu0 0.0
      %1798 = vmatprep.subr.mxu0 0.0
      %1799 = vmatpush1.msra.mxu0 0.0
      %1800 = vmatprep.subr.mxu0 0.0
      %1801 = vmatpush1.msra.mxu0 0.0
      %1802 = vmatprep.subr.mxu0 0.0
      %1803 = vmatpush1.msra.mxu0 0.0
      %1804 = vmatprep.subr.mxu0 0.0
      %1805 = vmatpush1.msra.mxu0 0.0
      %1806 = vmatprep.subr.mxu0 0.0
      %1807 = vmatpush1.msra.mxu0 0.0
      %1808 = vmatprep.subr.mxu0 0.0
      %1809 = vmatpush1.msra.mxu0 0.0
      %1810 = vmatprep.subr.mxu0 0.0
      %1811 = vmatpush1.msra.mxu0 0.0
      %1812 = vmatprep.subr.mxu0 0.0
      %1813 = vmatpush1.msra.mxu0 0.0
      %1814 = vmatprep.subr.mxu0 0.0
      %1815 = vmatpush1.msra.mxu0 0.0
      %1816 = vmatprep.subr.mxu0 0.0
      %1817 = vmatpush1.msra.mxu0 0.0
      %1818 = vmatprep.subr.mxu0 0.0
      %1819 = vmatpush1.msra.mxu0 0.0
      %1820 = vmatprep.subr.mxu0 0.0
      %1821 = vmatpush1.msra.mxu0 0.0
      %1822 = vmatprep.subr.mxu0 0.0
      %1823 = vmatpush1.msra.mxu0 0.0
      %1824 = vmatprep.subr.mxu0 0.0
      %1825 = vmatpush1.msra.mxu0 0.0
      %1826 = vmatprep.subr.mxu0 0.0
      %1827 = vmatpush1.msra.mxu0 0.0
      %1828 = vmatprep.subr.mxu0 0.0
      %1829 = vmatpush1.msra.mxu0 0.0
      %1830 = vmatprep.subr.mxu0 0.0
      %1831 = vmatpush1.msra.mxu0 0.0
      %1832 = vmatprep.mubr.f32.mxu0 0.0
      %v1833 = vand.u32 %v1486, 4294901760
      %v1834 = vsub.f32 %v1486, %v1833
      %v1835 = vand.u32 %v1834, 4294901760
      %1836 = vmatmul.mubr.f32.gmra.mrb[0].mxu0 %v1835
      %v1837 = vpop.f32.mrb[0].mxu0
      %v1838 = vadd.f32 %v1754, %v1837
      %v1839 = vpop.f32.mrb[0].mxu0
      %1840 = vmatprep.mubr.f32.mxu0 0.0
      %v1841 = vand.u32 %v1489, 4294901760
      %v1842 = vsub.f32 %v1489, %v1841
      %v1843 = vand.u32 %v1842, 4294901760
      %1844 = vmatmul.mubr.f32.gmra.mrb[0].mxu0 %v1843
      %v1845 = vpop.f32.mrb[0].mxu0
      %v1846 = vadd.f32 %v1761, %v1845
      %v1847 = vpop.f32.mrb[0].mxu0
      %1848 = vdwg.mxu0
      %1849 = vmatprep.subr.mxu0 0.0
      %v1850 = vand.u32 %v374, 4294901760
      %v1851 = vsub.f32 %v374, %v1850
      %v1852 = vand.u32 %v1851, 4294901760
      %1853 = vmatpush1.msra.mxu0 %v1852
      %1854 = vmatprep.subr.mxu0 0.0
      %v1855 = vand.u32 %v375, 4294901760
      %v1856 = vsub.f32 %v375, %v1855
      %v1857 = vand.u32 %v1856, 4294901760
      %1858 = vmatpush1.msra.mxu0 %v1857
      %1859 = vmatprep.subr.mxu0 0.0
      %v1860 = vand.u32 %v376, 4294901760
      %v1861 = vsub.f32 %v376, %v1860
      %v1862 = vand.u32 %v1861, 4294901760
      %1863 = vmatpush1.msra.mxu0 %v1862
      %1864 = vmatprep.subr.mxu0 0.0
      %v1865 = vand.u32 %v377, 4294901760
      %v1866 = vsub.f32 %v377, %v1865
      %v1867 = vand.u32 %v1866, 4294901760
      %1868 = vmatpush1.msra.mxu0 %v1867
      %1869 = vmatprep.subr.mxu0 0.0
      %1870 = vmatpush1.msra.mxu0 0.0
      %1871 = vmatprep.subr.mxu0 0.0
      %1872 = vmatpush1.msra.mxu0 0.0
      %1873 = vmatprep.subr.mxu0 0.0
      %1874 = vmatpush1.msra.mxu0 0.0
      %1875 = vmatprep.subr.mxu0 0.0
      %1876 = vmatpush1.msra.mxu0 0.0
      %1877 = vmatprep.subr.mxu0 0.0
      %1878 = vmatpush1.msra.mxu0 0.0
      %1879 = vmatprep.subr.mxu0 0.0
      %1880 = vmatpush1.msra.mxu0 0.0
      %1881 = vmatprep.subr.mxu0 0.0
      %1882 = vmatpush1.msra.mxu0 0.0
      %1883 = vmatprep.subr.mxu0 0.0
      %1884 = vmatpush1.msra.mxu0 0.0
      %1885 = vmatprep.subr.mxu0 0.0
      %1886 = vmatpush1.msra.mxu0 0.0
      %1887 = vmatprep.subr.mxu0 0.0
      %1888 = vmatpush1.msra.mxu0 0.0
      %1889 = vmatprep.subr.mxu0 0.0
      %1890 = vmatpush1.msra.mxu0 0.0
      %1891 = vmatprep.subr.mxu0 0.0
      %1892 = vmatpush1.msra.mxu0 0.0
      %1893 = vmatprep.subr.mxu0 0.0
      %1894 = vmatpush1.msra.mxu0 0.0
      %1895 = vmatprep.subr.mxu0 0.0
      %1896 = vmatpush1.msra.mxu0 0.0
      %1897 = vmatprep.subr.mxu0 0.0
      %1898 = vmatpush1.msra.mxu0 0.0
      %1899 = vmatprep.subr.mxu0 0.0
      %1900 = vmatpush1.msra.mxu0 0.0
      %1901 = vmatprep.subr.mxu0 0.0
      %1902 = vmatpush1.msra.mxu0 0.0
      %1903 = vmatprep.subr.mxu0 0.0
      %1904 = vmatpush1.msra.mxu0 0.0
      %1905 = vmatprep.subr.mxu0 0.0
      %1906 = vmatpush1.msra.mxu0 0.0
      %1907 = vmatprep.subr.mxu0 0.0
      %1908 = vmatpush1.msra.mxu0 0.0
      %1909 = vmatprep.subr.mxu0 0.0
      %1910 = vmatpush1.msra.mxu0 0.0
      %1911 = vmatprep.subr.mxu0 0.0
      %1912 = vmatpush1.msra.mxu0 0.0
      %1913 = vmatprep.subr.mxu0 0.0
      %1914 = vmatpush1.msra.mxu0 0.0
      %1915 = vmatprep.subr.mxu0 0.0
      %1916 = vmatpush1.msra.mxu0 0.0
      %1917 = vmatprep.subr.mxu0 0.0
      %1918 = vmatpush1.msra.mxu0 0.0
      %1919 = vmatprep.subr.mxu0 0.0
      %1920 = vmatpush1.msra.mxu0 0.0
      %1921 = vmatprep.subr.mxu0 0.0
      %1922 = vmatpush1.msra.mxu0 0.0
      %1923 = vmatprep.subr.mxu0 0.0
      %1924 = vmatpush1.msra.mxu0 0.0
      %1925 = vmatprep.mubr.f32.mxu0 0.0
      %v1926 = vand.u32 %v1486, 4294901760
      %1927 = vmatmul.mubr.f32.gmra.mrb[0].mxu0 %v1926
      %v1928 = vpop.f32.mrb[0].mxu0
      %v1929 = vadd.f32 %v1838, %v1928
      %v1930 = vpop.f32.mrb[0].mxu0
      %1931 = vmatprep.mubr.f32.mxu0 0.0
      %v1932 = vand.u32 %v1489, 4294901760
      %1933 = vmatmul.mubr.f32.gmra.mrb[0].mxu0 %v1932
      %v1934 = vpop.f32.mrb[0].mxu0
      %v1935 = vadd.f32 %v1846, %v1934
      %v1936 = vpop.f32.mrb[0].mxu0
      %1937 = vdwg.mxu0
      %1938 = vmatprep.subr.mxu0 0.0
      %v1939 = vand.u32 %v374, 4294901760
      %1940 = vmatpush1.msra.mxu0 %v1939
      %1941 = vmatprep.subr.mxu0 0.0
      %v1942 = vand.u32 %v375, 4294901760
      %1943 = vmatpush1.msra.mxu0 %v1942
      %1944 = vmatprep.subr.mxu0 0.0
      %v1945 = vand.u32 %v376, 4294901760
      %1946 = vmatpush1.msra.mxu0 %v1945
      %1947 = vmatprep.subr.mxu0 0.0
      %v1948 = vand.u32 %v377, 4294901760
      %1949 = vmatpush1.msra.mxu0 %v1948
      %1950 = vmatprep.subr.mxu0 0.0
      %1951 = vmatpush1.msra.mxu0 0.0
      %1952 = vmatprep.subr.mxu0 0.0
      %1953 = vmatpush1.msra.mxu0 0.0
      %1954 = vmatprep.subr.mxu0 0.0
      %1955 = vmatpush1.msra.mxu0 0.0
      %1956 = vmatprep.subr.mxu0 0.0
      %1957 = vmatpush1.msra.mxu0 0.0
      %1958 = vmatprep.subr.mxu0 0.0
      %1959 = vmatpush1.msra.mxu0 0.0
      %1960 = vmatprep.subr.mxu0 0.0
      %1961 = vmatpush1.msra.mxu0 0.0
      %1962 = vmatprep.subr.mxu0 0.0
      %1963 = vmatpush1.msra.mxu0 0.0
      %1964 = vmatprep.subr.mxu0 0.0
      %1965 = vmatpush1.msra.mxu0 0.0
      %1966 = vmatprep.subr.mxu0 0.0
      %1967 = vmatpush1.msra.mxu0 0.0
      %1968 = vmatprep.subr.mxu0 0.0
      %1969 = vmatpush1.msra.mxu0 0.0
      %1970 = vmatprep.subr.mxu0 0.0
      %1971 = vmatpush1.msra.mxu0 0.0
      %1972 = vmatprep.subr.mxu0 0.0
      %1973 = vmatpush1.msra.mxu0 0.0
      %1974 = vmatprep.subr.mxu0 0.0
      %1975 = vmatpush1.msra.mxu0 0.0
      %1976 = vmatprep.subr.mxu0 0.0
      %1977 = vmatpush1.msra.mxu0 0.0
      %1978 = vmatprep.subr.mxu0 0.0
      %1979 = vmatpush1.msra.mxu0 0.0
      %1980 = vmatprep.subr.mxu0 0.0
      %1981 = vmatpush1.msra.mxu0 0.0
      %1982 = vmatprep.subr.mxu0 0.0
      %1983 = vmatpush1.msra.mxu0 0.0
      %1984 = vmatprep.subr.mxu0 0.0
      %1985 = vmatpush1.msra.mxu0 0.0
      %1986 = vmatprep.subr.mxu0 0.0
      %1987 = vmatpush1.msra.mxu0 0.0
      %1988 = vmatprep.subr.mxu0 0.0
      %1989 = vmatpush1.msra.mxu0 0.0
      %1990 = vmatprep.subr.mxu0 0.0
      %1991 = vmatpush1.msra.mxu0 0.0
      %1992 = vmatprep.subr.mxu0 0.0
      %1993 = vmatpush1.msra.mxu0 0.0
      %1994 = vmatprep.subr.mxu0 0.0
      %1995 = vmatpush1.msra.mxu0 0.0
      %1996 = vmatprep.subr.mxu0 0.0
      %1997 = vmatpush1.msra.mxu0 0.0
      %1998 = vmatprep.subr.mxu0 0.0
      %1999 = vmatpush1.msra.mxu0 0.0
      %2000 = vmatprep.subr.mxu0 0.0
      %2001 = vmatpush1.msra.mxu0 0.0
      %2002 = vmatprep.subr.mxu0 0.0
      %2003 = vmatpush1.msra.mxu0 0.0
      %2004 = vmatprep.subr.mxu0 0.0
      %2005 = vmatpush1.msra.mxu0 0.0
      %2006 = vmatprep.mubr.f32.mxu0 0.0
      %v2007 = vand.u32 %v1486, 4294901760
      %2008 = vmatmul.mubr.f32.gmra.mrb[0].mxu0 %v2007
      %v2009 = vpop.f32.mrb[0].mxu0
      %v2010 = vadd.f32 %v1929, %v2009
      %v2011 = vpop.f32.mrb[0].mxu0
      %2012 = vmatprep.mubr.f32.mxu0 0.0
      %v2013 = vand.u32 %v1489, 4294901760
      %2014 = vmatmul.mubr.f32.gmra.mrb[0].mxu0 %v2013
      %v2015 = vpop.f32.mrb[0].mxu0
      %v2016 = vadd.f32 %v1935, %v2015
      %v2017 = vpop.f32.mrb[0].mxu0
      %2018 = vdwg.mxu0
      %2019 = vset.pattern.permute.xlu0 3
      %2020 = vperm.xlu0 %2019, %v372
      %v2021 = vpop.permute.xlu0 %2020
      %2022 = vset.pattern.permute.xlu0 3
      %2023 = vperm.xlu0 %2022, %v373
      %v2024 = vpop.permute.xlu0 %2023
      %vm2025 = vcmp.eq.s32.totalorder %v2021, %v379
      %vm2026 = vcmp.eq.s32.totalorder %v2024, %v379
      %v2027 = vsel %vm2025, 1, 0
      %v2028 = vsel %vm2026, 1, 0
      %v2029 = vcvt.s32.f32 %v2027
      %v2030 = vcvt.s32.f32 %v2028
      %v2032 = vsel %vm392, %v2029, 0
      %v2035 = vsel %vm392, %v2030, 0
      %2037 = vmatprep.subr.mxu0 0.0
      %v2038 = vand.u32 %v374, 4294901760
      %2039 = vmatpush1.msra.mxu0 %v2038
      %2040 = vmatprep.subr.mxu0 0.0
      %v2041 = vand.u32 %v375, 4294901760
      %2042 = vmatpush1.msra.mxu0 %v2041
      %2043 = vmatprep.subr.mxu0 0.0
      %v2044 = vand.u32 %v376, 4294901760
      %2045 = vmatpush1.msra.mxu0 %v2044
      %2046 = vmatprep.subr.mxu0 0.0
      %v2047 = vand.u32 %v377, 4294901760
      %2048 = vmatpush1.msra.mxu0 %v2047
      %2049 = vmatprep.subr.mxu0 0.0
      %2050 = vmatpush1.msra.mxu0 0.0
      %2051 = vmatprep.subr.mxu0 0.0
      %2052 = vmatpush1.msra.mxu0 0.0
      %2053 = vmatprep.subr.mxu0 0.0
      %2054 = vmatpush1.msra.mxu0 0.0
      %2055 = vmatprep.subr.mxu0 0.0
      %2056 = vmatpush1.msra.mxu0 0.0
      %2057 = vmatprep.subr.mxu0 0.0
      %2058 = vmatpush1.msra.mxu0 0.0
      %2059 = vmatprep.subr.mxu0 0.0
      %2060 = vmatpush1.msra.mxu0 0.0
      %2061 = vmatprep.subr.mxu0 0.0
      %2062 = vmatpush1.msra.mxu0 0.0
      %2063 = vmatprep.subr.mxu0 0.0
      %2064 = vmatpush1.msra.mxu0 0.0
      %2065 = vmatprep.subr.mxu0 0.0
      %2066 = vmatpush1.msra.mxu0 0.0
      %2067 = vmatprep.subr.mxu0 0.0
      %2068 = vmatpush1.msra.mxu0 0.0
      %2069 = vmatprep.subr.mxu0 0.0
      %2070 = vmatpush1.msra.mxu0 0.0
      %2071 = vmatprep.subr.mxu0 0.0
      %2072 = vmatpush1.msra.mxu0 0.0
      %2073 = vmatprep.subr.mxu0 0.0
      %2074 = vmatpush1.msra.mxu0 0.0
      %2075 = vmatprep.subr.mxu0 0.0
      %2076 = vmatpush1.msra.mxu0 0.0
      %2077 = vmatprep.subr.mxu0 0.0
      %2078 = vmatpush1.msra.mxu0 0.0
      %2079 = vmatprep.subr.mxu0 0.0
      %2080 = vmatpush1.msra.mxu0 0.0
      %2081 = vmatprep.subr.mxu0 0.0
      %2082 = vmatpush1.msra.mxu0 0.0
      %2083 = vmatprep.subr.mxu0 0.0
      %2084 = vmatpush1.msra.mxu0 0.0
      %2085 = vmatprep.subr.mxu0 0.0
      %2086 = vmatpush1.msra.mxu0 0.0
      %2087 = vmatprep.subr.mxu0 0.0
      %2088 = vmatpush1.msra.mxu0 0.0
      %2089 = vmatprep.subr.mxu0 0.0
      %2090 = vmatpush1.msra.mxu0 0.0
      %2091 = vmatprep.subr.mxu0 0.0
      %2092 = vmatpush1.msra.mxu0 0.0
      %2093 = vmatprep.subr.mxu0 0.0
      %2094 = vmatpush1.msra.mxu0 0.0
      %2095 = vmatprep.subr.mxu0 0.0
      %2096 = vmatpush1.msra.mxu0 0.0
      %2097 = vmatprep.subr.mxu0 0.0
      %2098 = vmatpush1.msra.mxu0 0.0
      %2099 = vmatprep.subr.mxu0 0.0
      %2100 = vmatpush1.msra.mxu0 0.0
      %2101 = vmatprep.subr.mxu0 0.0
      %2102 = vmatpush1.msra.mxu0 0.0
      %2103 = vmatprep.subr.mxu0 0.0
      %2104 = vmatpush1.msra.mxu0 0.0
      %2105 = vmatprep.mubr.f32.mxu0 0.0
      %v2106 = vand.u32 %v2032, 4294901760
      %v2107 = vsub.f32 %v2032, %v2106
      %v2108 = vand.u32 %v2107, 4294901760
      %v2109 = vsub.f32 %v2107, %v2108
      %v2110 = vand.u32 %v2109, 4294901760
      %2111 = vmatmul.mubr.f32.gmra.mrb[0].mxu0 %v2110
      %v2112 = vpop.f32.mrb[0].mxu0
      %v2113 = vadd.f32 0.0, %v2112
      %v2114 = vpop.f32.mrb[0].mxu0
      %2115 = vmatprep.mubr.f32.mxu0 0.0
      %v2116 = vand.u32 %v2035, 4294901760
      %v2117 = vsub.f32 %v2035, %v2116
      %v2118 = vand.u32 %v2117, 4294901760
      %v2119 = vsub.f32 %v2117, %v2118
      %v2120 = vand.u32 %v2119, 4294901760
      %2121 = vmatmul.mubr.f32.gmra.mrb[0].mxu0 %v2120
      %v2122 = vpop.f32.mrb[0].mxu0
      %v2123 = vadd.f32 0.0, %v2122
      %v2124 = vpop.f32.mrb[0].mxu0
      %2125 = vdwg.mxu0
      %2126 = vmatprep.subr.mxu0 0.0
      %v2127 = vand.u32 %v374, 4294901760
      %v2128 = vsub.f32 %v374, %v2127
      %v2129 = vand.u32 %v2128, 4294901760
      %v2130 = vsub.f32 %v2128, %v2129
      %v2131 = vand.u32 %v2130, 4294901760
      %2132 = vmatpush1.msra.mxu0 %v2131
      %2133 = vmatprep.subr.mxu0 0.0
      %v2134 = vand.u32 %v375, 4294901760
      %v2135 = vsub.f32 %v375, %v2134
      %v2136 = vand.u32 %v2135, 4294901760
      %v2137 = vsub.f32 %v2135, %v2136
      %v2138 = vand.u32 %v2137, 4294901760
      %2139 = vmatpush1.msra.mxu0 %v2138
      %2140 = vmatprep.subr.mxu0 0.0
      %v2141 = vand.u32 %v376, 4294901760
      %v2142 = vsub.f32 %v376, %v2141
      %v2143 = vand.u32 %v2142, 4294901760
      %v2144 = vsub.f32 %v2142, %v2143
      %v2145 = vand.u32 %v2144, 4294901760
      %2146 = vmatpush1.msra.mxu0 %v2145
      %2147 = vmatprep.subr.mxu0 0.0
      %v2148 = vand.u32 %v377, 4294901760
      %v2149 = vsub.f32 %v377, %v2148
      %v2150 = vand.u32 %v2149, 4294901760
      %v2151 = vsub.f32 %v2149, %v2150
      %v2152 = vand.u32 %v2151, 4294901760
      %2153 = vmatpush1.msra.mxu0 %v2152
      %2154 = vmatprep.subr.mxu0 0.0
      %2155 = vmatpush1.msra.mxu0 0.0
      %2156 = vmatprep.subr.mxu0 0.0
      %2157 = vmatpush1.msra.mxu0 0.0
      %2158 = vmatprep.subr.mxu0 0.0
      %2159 = vmatpush1.msra.mxu0 0.0
      %2160 = vmatprep.subr.mxu0 0.0
      %2161 = vmatpush1.msra.mxu0 0.0
      %2162 = vmatprep.subr.mxu0 0.0
      %2163 = vmatpush1.msra.mxu0 0.0
      %2164 = vmatprep.subr.mxu0 0.0
      %2165 = vmatpush1.msra.mxu0 0.0
      %2166 = vmatprep.subr.mxu0 0.0
      %2167 = vmatpush1.msra.mxu0 0.0
      %2168 = vmatprep.subr.mxu0 0.0
      %2169 = vmatpush1.msra.mxu0 0.0
      %2170 = vmatprep.subr.mxu0 0.0
      %2171 = vmatpush1.msra.mxu0 0.0
      %2172 = vmatprep.subr.mxu0 0.0
      %2173 = vmatpush1.msra.mxu0 0.0
      %2174 = vmatprep.subr.mxu0 0.0
      %2175 = vmatpush1.msra.mxu0 0.0
      %2176 = vmatprep.subr.mxu0 0.0
      %2177 = vmatpush1.msra.mxu0 0.0
      %2178 = vmatprep.subr.mxu0 0.0
      %2179 = vmatpush1.msra.mxu0 0.0
      %2180 = vmatprep.subr.mxu0 0.0
      %2181 = vmatpush1.msra.mxu0 0.0
      %2182 = vmatprep.subr.mxu0 0.0
      %2183 = vmatpush1.msra.mxu0 0.0
      %2184 = vmatprep.subr.mxu0 0.0
      %2185 = vmatpush1.msra.mxu0 0.0
      %2186 = vmatprep.subr.mxu0 0.0
      %2187 = vmatpush1.msra.mxu0 0.0
      %2188 = vmatprep.subr.mxu0 0.0
      %2189 = vmatpush1.msra.mxu0 0.0
      %2190 = vmatprep.subr.mxu0 0.0
      %2191 = vmatpush1.msra.mxu0 0.0
      %2192 = vmatprep.subr.mxu0 0.0
      %2193 = vmatpush1.msra.mxu0 0.0
      %2194 = vmatprep.subr.mxu0 0.0
      %2195 = vmatpush1.msra.mxu0 0.0
      %2196 = vmatprep.subr.mxu0 0.0
      %2197 = vmatpush1.msra.mxu0 0.0
      %2198 = vmatprep.subr.mxu0 0.0
      %2199 = vmatpush1.msra.mxu0 0.0
      %2200 = vmatprep.subr.mxu0 0.0
      %2201 = vmatpush1.msra.mxu0 0.0
      %2202 = vmatprep.subr.mxu0 0.0
      %2203 = vmatpush1.msra.mxu0 0.0
      %2204 = vmatprep.subr.mxu0 0.0
      %2205 = vmatpush1.msra.mxu0 0.0
      %2206 = vmatprep.subr.mxu0 0.0
      %2207 = vmatpush1.msra.mxu0 0.0
      %2208 = vmatprep.subr.mxu0 0.0
      %2209 = vmatpush1.msra.mxu0 0.0
      %2210 = vmatprep.mubr.f32.mxu0 0.0
      %v2211 = vand.u32 %v2032, 4294901760
      %2212 = vmatmul.mubr.f32.gmra.mrb[0].mxu0 %v2211
      %v2213 = vpop.f32.mrb[0].mxu0
      %v2214 = vadd.f32 %v2113, %v2213
      %v2215 = vpop.f32.mrb[0].mxu0
      %2216 = vmatprep.mubr.f32.mxu0 0.0
      %v2217 = vand.u32 %v2035, 4294901760
      %2218 = vmatmul.mubr.f32.gmra.mrb[0].mxu0 %v2217
      %v2219 = vpop.f32.mrb[0].mxu0
      %v2220 = vadd.f32 %v2123, %v2219
      %v2221 = vpop.f32.mrb[0].mxu0
      %2222 = vdwg.mxu0
      %2223 = vmatprep.subr.mxu0 0.0
      %v2224 = vand.u32 %v374, 4294901760
      %v2225 = vsub.f32 %v374, %v2224
      %2226 = vmatpush1.msra.mxu0 %v2225
      %2227 = vmatprep.subr.mxu0 0.0
      %v2228 = vand.u32 %v375, 4294901760
      %v2229 = vsub.f32 %v375, %v2228
      %2230 = vmatpush1.msra.mxu0 %v2229
      %2231 = vmatprep.subr.mxu0 0.0
      %v2232 = vand.u32 %v376, 4294901760
      %v2233 = vsub.f32 %v376, %v2232
      %2234 = vmatpush1.msra.mxu0 %v2233
      %2235 = vmatprep.subr.mxu0 0.0
      %v2236 = vand.u32 %v377, 4294901760
      %v2237 = vsub.f32 %v377, %v2236
      %2238 = vmatpush1.msra.mxu0 %v2237
      %2239 = vmatprep.subr.mxu0 0.0
      %2240 = vmatpush1.msra.mxu0 0.0
      %2241 = vmatprep.subr.mxu0 0.0
      %2242 = vmatpush1.msra.mxu0 0.0
      %2243 = vmatprep.subr.mxu0 0.0
      %2244 = vmatpush1.msra.mxu0 0.0
      %2245 = vmatprep.subr.mxu0 0.0
      %2246 = vmatpush1.msra.mxu0 0.0
      %2247 = vmatprep.subr.mxu0 0.0
      %2248 = vmatpush1.msra.mxu0 0.0
      %2249 = vmatprep.subr.mxu0 0.0
      %2250 = vmatpush1.msra.mxu0 0.0
      %2251 = vmatprep.subr.mxu0 0.0
      %2252 = vmatpush1.msra.mxu0 0.0
      %2253 = vmatprep.subr.mxu0 0.0
      %2254 = vmatpush1.msra.mxu0 0.0
      %2255 = vmatprep.subr.mxu0 0.0
      %2256 = vmatpush1.msra.mxu0 0.0
      %2257 = vmatprep.subr.mxu0 0.0
      %2258 = vmatpush1.msra.mxu0 0.0
      %2259 = vmatprep.subr.mxu0 0.0
      %2260 = vmatpush1.msra.mxu0 0.0
      %2261 = vmatprep.subr.mxu0 0.0
      %2262 = vmatpush1.msra.mxu0 0.0
      %2263 = vmatprep.subr.mxu0 0.0
      %2264 = vmatpush1.msra.mxu0 0.0
      %2265 = vmatprep.subr.mxu0 0.0
      %2266 = vmatpush1.msra.mxu0 0.0
      %2267 = vmatprep.subr.mxu0 0.0
      %2268 = vmatpush1.msra.mxu0 0.0
      %2269 = vmatprep.subr.mxu0 0.0
      %2270 = vmatpush1.msra.mxu0 0.0
      %2271 = vmatprep.subr.mxu0 0.0
      %2272 = vmatpush1.msra.mxu0 0.0
      %2273 = vmatprep.subr.mxu0 0.0
      %2274 = vmatpush1.msra.mxu0 0.0
      %2275 = vmatprep.subr.mxu0 0.0
      %2276 = vmatpush1.msra.mxu0 0.0
      %2277 = vmatprep.subr.mxu0 0.0
      %2278 = vmatpush1.msra.mxu0 0.0
      %2279 = vmatprep.subr.mxu0 0.0
      %2280 = vmatpush1.msra.mxu0 0.0
      %2281 = vmatprep.subr.mxu0 0.0
      %2282 = vmatpush1.msra.mxu0 0.0
      %2283 = vmatprep.subr.mxu0 0.0
      %2284 = vmatpush1.msra.mxu0 0.0
      %2285 = vmatprep.subr.mxu0 0.0
      %2286 = vmatpush1.msra.mxu0 0.0
      %2287 = vmatprep.subr.mxu0 0.0
      %2288 = vmatpush1.msra.mxu0 0.0
      %2289 = vmatprep.subr.mxu0 0.0
      %2290 = vmatpush1.msra.mxu0 0.0
      %2291 = vmatprep.subr.mxu0 0.0
      %2292 = vmatpush1.msra.mxu0 0.0
      %2293 = vmatprep.subr.mxu0 0.0
      %2294 = vmatpush1.msra.mxu0 0.0
      %2295 = vmatprep.mubr.f32.mxu0 0.0
      %v2296 = vand.u32 %v2032, 4294901760
      %v2297 = vsub.f32 %v2032, %v2296
      %2298 = vmatmul.mubr.f32.gmra.mrb[0].mxu0 %v2297
      %v2299 = vpop.f32.mrb[0].mxu0
      %v2300 = vadd.f32 %v2214, %v2299
      %v2301 = vpop.f32.mrb[0].mxu0
      %2302 = vmatprep.mubr.f32.mxu0 0.0
      %v2303 = vand.u32 %v2035, 4294901760
      %v2304 = vsub.f32 %v2035, %v2303
      %2305 = vmatmul.mubr.f32.gmra.mrb[0].mxu0 %v2304
      %v2306 = vpop.f32.mrb[0].mxu0
      %v2307 = vadd.f32 %v2220, %v2306
      %v2308 = vpop.f32.mrb[0].mxu0
      %2309 = vdwg.mxu0
      %2310 = vmatprep.subr.mxu0 0.0
      %v2311 = vand.u32 %v374, 4294901760
      %2312 = vmatpush1.msra.mxu0 %v2311
      %2313 = vmatprep.subr.mxu0 0.0
      %v2314 = vand.u32 %v375, 4294901760
      %2315 = vmatpush1.msra.mxu0 %v2314
      %2316 = vmatprep.subr.mxu0 0.0
      %v2317 = vand.u32 %v376, 4294901760
      %2318 = vmatpush1.msra.mxu0 %v2317
      %2319 = vmatprep.subr.mxu0 0.0
      %v2320 = vand.u32 %v377, 4294901760
      %2321 = vmatpush1.msra.mxu0 %v2320
      %2322 = vmatprep.subr.mxu0 0.0
      %2323 = vmatpush1.msra.mxu0 0.0
      %2324 = vmatprep.subr.mxu0 0.0
      %2325 = vmatpush1.msra.mxu0 0.0
      %2326 = vmatprep.subr.mxu0 0.0
      %2327 = vmatpush1.msra.mxu0 0.0
      %2328 = vmatprep.subr.mxu0 0.0
      %2329 = vmatpush1.msra.mxu0 0.0
      %2330 = vmatprep.subr.mxu0 0.0
      %2331 = vmatpush1.msra.mxu0 0.0
      %2332 = vmatprep.subr.mxu0 0.0
      %2333 = vmatpush1.msra.mxu0 0.0
      %2334 = vmatprep.subr.mxu0 0.0
      %2335 = vmatpush1.msra.mxu0 0.0
      %2336 = vmatprep.subr.mxu0 0.0
      %2337 = vmatpush1.msra.mxu0 0.0
      %2338 = vmatprep.subr.mxu0 0.0
      %2339 = vmatpush1.msra.mxu0 0.0
      %2340 = vmatprep.subr.mxu0 0.0
      %2341 = vmatpush1.msra.mxu0 0.0
      %2342 = vmatprep.subr.mxu0 0.0
      %2343 = vmatpush1.msra.mxu0 0.0
      %2344 = vmatprep.subr.mxu0 0.0
      %2345 = vmatpush1.msra.mxu0 0.0
      %2346 = vmatprep.subr.mxu0 0.0
      %2347 = vmatpush1.msra.mxu0 0.0
      %2348 = vmatprep.subr.mxu0 0.0
      %2349 = vmatpush1.msra.mxu0 0.0
      %2350 = vmatprep.subr.mxu0 0.0
      %2351 = vmatpush1.msra.mxu0 0.0
      %2352 = vmatprep.subr.mxu0 0.0
      %2353 = vmatpush1.msra.mxu0 0.0
      %2354 = vmatprep.subr.mxu0 0.0
      %2355 = vmatpush1.msra.mxu0 0.0
      %2356 = vmatprep.subr.mxu0 0.0
      %2357 = vmatpush1.msra.mxu0 0.0
      %2358 = vmatprep.subr.mxu0 0.0
      %2359 = vmatpush1.msra.mxu0 0.0
      %2360 = vmatprep.subr.mxu0 0.0
      %2361 = vmatpush1.msra.mxu0 0.0
      %2362 = vmatprep.subr.mxu0 0.0
      %2363 = vmatpush1.msra.mxu0 0.0
      %2364 = vmatprep.subr.mxu0 0.0
      %2365 = vmatpush1.msra.mxu0 0.0
      %2366 = vmatprep.subr.mxu0 0.0
      %2367 = vmatpush1.msra.mxu0 0.0
      %2368 = vmatprep.subr.mxu0 0.0
      %2369 = vmatpush1.msra.mxu0 0.0
      %2370 = vmatprep.subr.mxu0 0.0
      %2371 = vmatpush1.msra.mxu0 0.0
      %2372 = vmatprep.subr.mxu0 0.0
      %2373 = vmatpush1.msra.mxu0 0.0
      %2374 = vmatprep.subr.mxu0 0.0
      %2375 = vmatpush1.msra.mxu0 0.0
      %2376 = vmatprep.subr.mxu0 0.0
      %2377 = vmatpush1.msra.mxu0 0.0
      %2378 = vmatprep.mubr.f32.mxu0 0.0
      %v2379 = vand.u32 %v2032, 4294901760
      %v2380 = vsub.f32 %v2032, %v2379
      %v2381 = vand.u32 %v2380, 4294901760
      %2382 = vmatmul.mubr.f32.gmra.mrb[0].mxu0 %v2381
      %v2383 = vpop.f32.mrb[0].mxu0
      %v2384 = vadd.f32 %v2300, %v2383
      %v2385 = vpop.f32.mrb[0].mxu0
      %2386 = vmatprep.mubr.f32.mxu0 0.0
      %v2387 = vand.u32 %v2035, 4294901760
      %v2388 = vsub.f32 %v2035, %v2387
      %v2389 = vand.u32 %v2388, 4294901760
      %2390 = vmatmul.mubr.f32.gmra.mrb[0].mxu0 %v2389
      %v2391 = vpop.f32.mrb[0].mxu0
      %v2392 = vadd.f32 %v2307, %v2391
      %v2393 = vpop.f32.mrb[0].mxu0
      %2394 = vdwg.mxu0
      %2395 = vmatprep.subr.mxu0 0.0
      %v2396 = vand.u32 %v374, 4294901760
      %v2397 = vsub.f32 %v374, %v2396
      %v2398 = vand.u32 %v2397, 4294901760
      %2399 = vmatpush1.msra.mxu0 %v2398
      %2400 = vmatprep.subr.mxu0 0.0
      %v2401 = vand.u32 %v375, 4294901760
      %v2402 = vsub.f32 %v375, %v2401
      %v2403 = vand.u32 %v2402, 4294901760
      %2404 = vmatpush1.msra.mxu0 %v2403
      %2405 = vmatprep.subr.mxu0 0.0
      %v2406 = vand.u32 %v376, 4294901760
      %v2407 = vsub.f32 %v376, %v2406
      %v2408 = vand.u32 %v2407, 4294901760
      %2409 = vmatpush1.msra.mxu0 %v2408
      %2410 = vmatprep.subr.mxu0 0.0
      %v2411 = vand.u32 %v377, 4294901760
      %v2412 = vsub.f32 %v377, %v2411
      %v2413 = vand.u32 %v2412, 4294901760
      %2414 = vmatpush1.msra.mxu0 %v2413
      %2415 = vmatprep.subr.mxu0 0.0
      %2416 = vmatpush1.msra.mxu0 0.0
      %2417 = vmatprep.subr.mxu0 0.0
      %2418 = vmatpush1.msra.mxu0 0.0
      %2419 = vmatprep.subr.mxu0 0.0
      %2420 = vmatpush1.msra.mxu0 0.0
      %2421 = vmatprep.subr.mxu0 0.0
      %2422 = vmatpush1.msra.mxu0 0.0
      %2423 = vmatprep.subr.mxu0 0.0
      %2424 = vmatpush1.msra.mxu0 0.0
      %2425 = vmatprep.subr.mxu0 0.0
      %2426 = vmatpush1.msra.mxu0 0.0
      %2427 = vmatprep.subr.mxu0 0.0
      %2428 = vmatpush1.msra.mxu0 0.0
      %2429 = vmatprep.subr.mxu0 0.0
      %2430 = vmatpush1.msra.mxu0 0.0
      %2431 = vmatprep.subr.mxu0 0.0
      %2432 = vmatpush1.msra.mxu0 0.0
      %2433 = vmatprep.subr.mxu0 0.0
      %2434 = vmatpush1.msra.mxu0 0.0
      %2435 = vmatprep.subr.mxu0 0.0
      %2436 = vmatpush1.msra.mxu0 0.0
      %2437 = vmatprep.subr.mxu0 0.0
      %2438 = vmatpush1.msra.mxu0 0.0
      %2439 = vmatprep.subr.mxu0 0.0
      %2440 = vmatpush1.msra.mxu0 0.0
      %2441 = vmatprep.subr.mxu0 0.0
      %2442 = vmatpush1.msra.mxu0 0.0
      %2443 = vmatprep.subr.mxu0 0.0
      %2444 = vmatpush1.msra.mxu0 0.0
      %2445 = vmatprep.subr.mxu0 0.0
      %2446 = vmatpush1.msra.mxu0 0.0
      %2447 = vmatprep.subr.mxu0 0.0
      %2448 = vmatpush1.msra.mxu0 0.0
      %2449 = vmatprep.subr.mxu0 0.0
      %2450 = vmatpush1.msra.mxu0 0.0
      %2451 = vmatprep.subr.mxu0 0.0
      %2452 = vmatpush1.msra.mxu0 0.0
      %2453 = vmatprep.subr.mxu0 0.0
      %2454 = vmatpush1.msra.mxu0 0.0
      %2455 = vmatprep.subr.mxu0 0.0
      %2456 = vmatpush1.msra.mxu0 0.0
      %2457 = vmatprep.subr.mxu0 0.0
      %2458 = vmatpush1.msra.mxu0 0.0
      %2459 = vmatprep.subr.mxu0 0.0
      %2460 = vmatpush1.msra.mxu0 0.0
      %2461 = vmatprep.subr.mxu0 0.0
      %2462 = vmatpush1.msra.mxu0 0.0
      %2463 = vmatprep.subr.mxu0 0.0
      %2464 = vmatpush1.msra.mxu0 0.0
      %2465 = vmatprep.subr.mxu0 0.0
      %2466 = vmatpush1.msra.mxu0 0.0
      %2467 = vmatprep.subr.mxu0 0.0
      %2468 = vmatpush1.msra.mxu0 0.0
      %2469 = vmatprep.subr.mxu0 0.0
      %2470 = vmatpush1.msra.mxu0 0.0
      %2471 = vmatprep.mubr.f32.mxu0 0.0
      %v2472 = vand.u32 %v2032, 4294901760
      %2473 = vmatmul.mubr.f32.gmra.mrb[0].mxu0 %v2472
      %v2474 = vpop.f32.mrb[0].mxu0
      %v2475 = vadd.f32 %v2384, %v2474
      %v2476 = vpop.f32.mrb[0].mxu0
      %2477 = vmatprep.mubr.f32.mxu0 0.0
      %v2478 = vand.u32 %v2035, 4294901760
      %2479 = vmatmul.mubr.f32.gmra.mrb[0].mxu0 %v2478
      %v2480 = vpop.f32.mrb[0].mxu0
      %v2481 = vadd.f32 %v2392, %v2480
      %v2482 = vpop.f32.mrb[0].mxu0
      %2483 = vdwg.mxu0
      %2484 = vmatprep.subr.mxu0 0.0
      %v2485 = vand.u32 %v374, 4294901760
      %2486 = vmatpush1.msra.mxu0 %v2485
      %2487 = vmatprep.subr.mxu0 0.0
      %v2488 = vand.u32 %v375, 4294901760
      %2489 = vmatpush1.msra.mxu0 %v2488
      %2490 = vmatprep.subr.mxu0 0.0
      %v2491 = vand.u32 %v376, 4294901760
      %2492 = vmatpush1.msra.mxu0 %v2491
      %2493 = vmatprep.subr.mxu0 0.0
      %v2494 = vand.u32 %v377, 4294901760
      %2495 = vmatpush1.msra.mxu0 %v2494
      %2496 = vmatprep.subr.mxu0 0.0
      %2497 = vmatpush1.msra.mxu0 0.0
      %2498 = vmatprep.subr.mxu0 0.0
      %2499 = vmatpush1.msra.mxu0 0.0
      %2500 = vmatprep.subr.mxu0 0.0
      %2501 = vmatpush1.msra.mxu0 0.0
      %2502 = vmatprep.subr.mxu0 0.0
      %2503 = vmatpush1.msra.mxu0 0.0
      %2504 = vmatprep.subr.mxu0 0.0
      %2505 = vmatpush1.msra.mxu0 0.0
      %2506 = vmatprep.subr.mxu0 0.0
      %2507 = vmatpush1.msra.mxu0 0.0
      %2508 = vmatprep.subr.mxu0 0.0
      %2509 = vmatpush1.msra.mxu0 0.0
      %2510 = vmatprep.subr.mxu0 0.0
      %2511 = vmatpush1.msra.mxu0 0.0
      %2512 = vmatprep.subr.mxu0 0.0
      %2513 = vmatpush1.msra.mxu0 0.0
      %2514 = vmatprep.subr.mxu0 0.0
      %2515 = vmatpush1.msra.mxu0 0.0
      %2516 = vmatprep.subr.mxu0 0.0
      %2517 = vmatpush1.msra.mxu0 0.0
      %2518 = vmatprep.subr.mxu0 0.0
      %2519 = vmatpush1.msra.mxu0 0.0
      %2520 = vmatprep.subr.mxu0 0.0
      %2521 = vmatpush1.msra.mxu0 0.0
      %2522 = vmatprep.subr.mxu0 0.0
      %2523 = vmatpush1.msra.mxu0 0.0
      %2524 = vmatprep.subr.mxu0 0.0
      %2525 = vmatpush1.msra.mxu0 0.0
      %2526 = vmatprep.subr.mxu0 0.0
      %2527 = vmatpush1.msra.mxu0 0.0
      %2528 = vmatprep.subr.mxu0 0.0
      %2529 = vmatpush1.msra.mxu0 0.0
      %2530 = vmatprep.subr.mxu0 0.0
      %2531 = vmatpush1.msra.mxu0 0.0
      %2532 = vmatprep.subr.mxu0 0.0
      %2533 = vmatpush1.msra.mxu0 0.0
      %2534 = vmatprep.subr.mxu0 0.0
      %2535 = vmatpush1.msra.mxu0 0.0
      %2536 = vmatprep.subr.mxu0 0.0
      %2537 = vmatpush1.msra.mxu0 0.0
      %2538 = vmatprep.subr.mxu0 0.0
      %2539 = vmatpush1.msra.mxu0 0.0
      %2540 = vmatprep.subr.mxu0 0.0
      %2541 = vmatpush1.msra.mxu0 0.0
      %2542 = vmatprep.subr.mxu0 0.0
      %2543 = vmatpush1.msra.mxu0 0.0
      %2544 = vmatprep.subr.mxu0 0.0
      %2545 = vmatpush1.msra.mxu0 0.0
      %2546 = vmatprep.subr.mxu0 0.0
      %2547 = vmatpush1.msra.mxu0 0.0
      %2548 = vmatprep.subr.mxu0 0.0
      %2549 = vmatpush1.msra.mxu0 0.0
      %2550 = vmatprep.subr.mxu0 0.0
      %2551 = vmatpush1.msra.mxu0 0.0
      %2552 = vmatprep.mubr.f32.mxu0 0.0
      %v2553 = vand.u32 %v2032, 4294901760
      %2554 = vmatmul.mubr.f32.gmra.mrb[0].mxu0 %v2553
      %v2555 = vpop.f32.mrb[0].mxu0
      %v2556 = vadd.f32 %v2475, %v2555
      %v2557 = vpop.f32.mrb[0].mxu0
      %2558 = vmatprep.mubr.f32.mxu0 0.0
      %v2559 = vand.u32 %v2035, 4294901760
      %2560 = vmatmul.mubr.f32.gmra.mrb[0].mxu0 %v2559
      %v2561 = vpop.f32.mrb[0].mxu0
      %v2562 = vadd.f32 %v2481, %v2561
      %v2563 = vpop.f32.mrb[0].mxu0
      %2564 = vdwg.mxu0
      %v2565 = vadd.f32 %v2010, %v2556
      %v2566 = vadd.f32 %v2016, %v2562
      %v2567 = vmul.f32 %v918, %v1464
      %v2568 = vmul.f32 %v924, %v1470
      %v2569 = vmul.f32 %v2567, %v2565
      %v2570 = vmul.f32 %v2568, %v2566
      %v2571 = vld [vmem:[%s4] sm:$0x1]
      %v2572 = vld [vmem:[%s3] sm:$0xff]
      %v2573 = vld [vmem:[%s3 + $0x8] sm:$0xff]
      %vm2574 = vcmask 130048
      %v2576 = vsel %vm2574, %v918, 0
      %v2579 = vsel %vm2574, %v924, 0
      %2581 = vmatprep.subr.mxu0 0.0
      %v2582 = vand.u32 %v2572, 4294901760
      %2583 = vmatpush1.msra.mxu0 %v2582
      %2584 = vmatprep.subr.mxu0 0.0
      %v2585 = vand.u32 %v2573, 4294901760
      %2586 = vmatpush1.msra.mxu0 %v2585
      %2587 = vmatprep.subr.mxu0 0.0
      %2588 = vmatpush1.msra.mxu0 0.0
      %2589 = vmatprep.subr.mxu0 0.0
      %2590 = vmatpush1.msra.mxu0 0.0
      %2591 = vmatprep.subr.mxu0 0.0
      %2592 = vmatpush1.msra.mxu0 0.0
      %2593 = vmatprep.subr.mxu0 0.0
      %2594 = vmatpush1.msra.mxu0 0.0
      %2595 = vmatprep.subr.mxu0 0.0
      %2596 = vmatpush1.msra.mxu0 0.0
      %2597 = vmatprep.subr.mxu0 0.0
      %2598 = vmatpush1.msra.mxu0 0.0
      %2599 = vmatprep.subr.mxu0 0.0
      %2600 = vmatpush1.msra.mxu0 0.0
      %2601 = vmatprep.subr.mxu0 0.0
      %2602 = vmatpush1.msra.mxu0 0.0
      %2603 = vmatprep.subr.mxu0 0.0
      %2604 = vmatpush1.msra.mxu0 0.0
      %2605 = vmatprep.subr.mxu0 0.0
      %2606 = vmatpush1.msra.mxu0 0.0
      %2607 = vmatprep.subr.mxu0 0.0
      %2608 = vmatpush1.msra.mxu0 0.0
      %2609 = vmatprep.subr.mxu0 0.0
      %2610 = vmatpush1.msra.mxu0 0.0
      %2611 = vmatprep.subr.mxu0 0.0
      %2612 = vmatpush1.msra.mxu0 0.0
      %2613 = vmatprep.subr.mxu0 0.0
      %2614 = vmatpush1.msra.mxu0 0.0
      %2615 = vmatprep.subr.mxu0 0.0
      %2616 = vmatpush1.msra.mxu0 0.0
      %2617 = vmatprep.subr.mxu0 0.0
      %2618 = vmatpush1.msra.mxu0 0.0
      %2619 = vmatprep.subr.mxu0 0.0
      %2620 = vmatpush1.msra.mxu0 0.0
      %2621 = vmatprep.subr.mxu0 0.0
      %2622 = vmatpush1.msra.mxu0 0.0
      %2623 = vmatprep.subr.mxu0 0.0
      %2624 = vmatpush1.msra.mxu0 0.0
      %2625 = vmatprep.subr.mxu0 0.0
      %2626 = vmatpush1.msra.mxu0 0.0
      %2627 = vmatprep.subr.mxu0 0.0
      %2628 = vmatpush1.msra.mxu0 0.0
      %2629 = vmatprep.subr.mxu0 0.0
      %2630 = vmatpush1.msra.mxu0 0.0
      %2631 = vmatprep.subr.mxu0 0.0
      %2632 = vmatpush1.msra.mxu0 0.0
      %2633 = vmatprep.subr.mxu0 0.0
      %2634 = vmatpush1.msra.mxu0 0.0
      %2635 = vmatprep.subr.mxu0 0.0
      %2636 = vmatpush1.msra.mxu0 0.0
      %2637 = vmatprep.subr.mxu0 0.0
      %2638 = vmatpush1.msra.mxu0 0.0
      %2639 = vmatprep.subr.mxu0 0.0
      %2640 = vmatpush1.msra.mxu0 0.0
      %2641 = vmatprep.subr.mxu0 0.0
      %2642 = vmatpush1.msra.mxu0 0.0
      %2643 = vmatprep.subr.mxu0 0.0
      %2644 = vmatpush1.msra.mxu0 0.0
      %2645 = vmatprep.subr.mxu0 0.0
      %2646 = vmatpush1.msra.mxu0 0.0
      %2647 = vmatprep.mubr.f32.mxu0 0.0
      %v2648 = vand.u32 %v2576, 4294901760
      %v2649 = vsub.f32 %v2576, %v2648
      %v2650 = vand.u32 %v2649, 4294901760
      %v2651 = vsub.f32 %v2649, %v2650
      %v2652 = vand.u32 %v2651, 4294901760
      %2653 = vmatmul.mubr.f32.gmra.mrb[0].mxu0 %v2652
      %v2654 = vpop.f32.mrb[0].mxu0
      %v2655 = vadd.f32 0.0, %v2654
      %v2656 = vpop.f32.mrb[0].mxu0
      %2657 = vmatprep.mubr.f32.mxu0 0.0
      %v2658 = vand.u32 %v2579, 4294901760
      %v2659 = vsub.f32 %v2579, %v2658
      %v2660 = vand.u32 %v2659, 4294901760
      %v2661 = vsub.f32 %v2659, %v2660
      %v2662 = vand.u32 %v2661, 4294901760
      %2663 = vmatmul.mubr.f32.gmra.mrb[0].mxu0 %v2662
      %v2664 = vpop.f32.mrb[0].mxu0
      %v2665 = vadd.f32 0.0, %v2664
      %v2666 = vpop.f32.mrb[0].mxu0
      %2667 = vdwg.mxu0
      %2668 = vmatprep.subr.mxu0 0.0
      %v2669 = vand.u32 %v2572, 4294901760
      %v2670 = vsub.f32 %v2572, %v2669
      %v2671 = vand.u32 %v2670, 4294901760
      %v2672 = vsub.f32 %v2670, %v2671
      %v2673 = vand.u32 %v2672, 4294901760
      %2674 = vmatpush1.msra.mxu0 %v2673
      %2675 = vmatprep.subr.mxu0 0.0
      %v2676 = vand.u32 %v2573, 4294901760
      %v2677 = vsub.f32 %v2573, %v2676
      %v2678 = vand.u32 %v2677, 4294901760
      %v2679 = vsub.f32 %v2677, %v2678
      %v2680 = vand.u32 %v2679, 4294901760
      %2681 = vmatpush1.msra.mxu0 %v2680
      %2682 = vmatprep.subr.mxu0 0.0
      %2683 = vmatpush1.msra.mxu0 0.0
      %2684 = vmatprep.subr.mxu0 0.0
      %2685 = vmatpush1.msra.mxu0 0.0
      %2686 = vmatprep.subr.mxu0 0.0
      %2687 = vmatpush1.msra.mxu0 0.0
      %2688 = vmatprep.subr.mxu0 0.0
      %2689 = vmatpush1.msra.mxu0 0.0
      %2690 = vmatprep.subr.mxu0 0.0
      %2691 = vmatpush1.msra.mxu0 0.0
      %2692 = vmatprep.subr.mxu0 0.0
      %2693 = vmatpush1.msra.mxu0 0.0
      %2694 = vmatprep.subr.mxu0 0.0
      %2695 = vmatpush1.msra.mxu0 0.0
      %2696 = vmatprep.subr.mxu0 0.0
      %2697 = vmatpush1.msra.mxu0 0.0
      %2698 = vmatprep.subr.mxu0 0.0
      %2699 = vmatpush1.msra.mxu0 0.0
      %2700 = vmatprep.subr.mxu0 0.0
      %2701 = vmatpush1.msra.mxu0 0.0
      %2702 = vmatprep.subr.mxu0 0.0
      %2703 = vmatpush1.msra.mxu0 0.0
      %2704 = vmatprep.subr.mxu0 0.0
      %2705 = vmatpush1.msra.mxu0 0.0
      %2706 = vmatprep.subr.mxu0 0.0
      %2707 = vmatpush1.msra.mxu0 0.0
      %2708 = vmatprep.subr.mxu0 0.0
      %2709 = vmatpush1.msra.mxu0 0.0
      %2710 = vmatprep.subr.mxu0 0.0
      %2711 = vmatpush1.msra.mxu0 0.0
      %2712 = vmatprep.subr.mxu0 0.0
      %2713 = vmatpush1.msra.mxu0 0.0
      %2714 = vmatprep.subr.mxu0 0.0
      %2715 = vmatpush1.msra.mxu0 0.0
      %2716 = vmatprep.subr.mxu0 0.0
      %2717 = vmatpush1.msra.mxu0 0.0
      %2718 = vmatprep.subr.mxu0 0.0
      %2719 = vmatpush1.msra.mxu0 0.0
      %2720 = vmatprep.subr.mxu0 0.0
      %2721 = vmatpush1.msra.mxu0 0.0
      %2722 = vmatprep.subr.mxu0 0.0
      %2723 = vmatpush1.msra.mxu0 0.0
      %2724 = vmatprep.subr.mxu0 0.0
      %2725 = vmatpush1.msra.mxu0 0.0
      %2726 = vmatprep.subr.mxu0 0.0
      %2727 = vmatpush1.msra.mxu0 0.0
      %2728 = vmatprep.subr.mxu0 0.0
      %2729 = vmatpush1.msra.mxu0 0.0
      %2730 = vmatprep.subr.mxu0 0.0
      %2731 = vmatpush1.msra.mxu0 0.0
      %2732 = vmatprep.subr.mxu0 0.0
      %2733 = vmatpush1.msra.mxu0 0.0
      %2734 = vmatprep.subr.mxu0 0.0
      %2735 = vmatpush1.msra.mxu0 0.0
      %2736 = vmatprep.subr.mxu0 0.0
      %2737 = vmatpush1.msra.mxu0 0.0
      %2738 = vmatprep.subr.mxu0 0.0
      %2739 = vmatpush1.msra.mxu0 0.0
      %2740 = vmatprep.subr.mxu0 0.0
      %2741 = vmatpush1.msra.mxu0 0.0
      %2742 = vmatprep.mubr.f32.mxu0 0.0
      %v2743 = vand.u32 %v2576, 4294901760
      %2744 = vmatmul.mubr.f32.gmra.mrb[0].mxu0 %v2743
      %v2745 = vpop.f32.mrb[0].mxu0
      %v2746 = vadd.f32 %v2655, %v2745
      %v2747 = vpop.f32.mrb[0].mxu0
      %2748 = vmatprep.mubr.f32.mxu0 0.0
      %v2749 = vand.u32 %v2579, 4294901760
      %2750 = vmatmul.mubr.f32.gmra.mrb[0].mxu0 %v2749
      %v2751 = vpop.f32.mrb[0].mxu0
      %v2752 = vadd.f32 %v2665, %v2751
      %v2753 = vpop.f32.mrb[0].mxu0
      %2754 = vdwg.mxu0
      %2755 = vmatprep.subr.mxu0 0.0
      %v2756 = vand.u32 %v2572, 4294901760
      %v2757 = vsub.f32 %v2572, %v2756
      %2758 = vmatpush1.msra.mxu0 %v2757
      %2759 = vmatprep.subr.mxu0 0.0
      %v2760 = vand.u32 %v2573, 4294901760
      %v2761 = vsub.f32 %v2573, %v2760
      %2762 = vmatpush1.msra.mxu0 %v2761
      %2763 = vmatprep.subr.mxu0 0.0
      %2764 = vmatpush1.msra.mxu0 0.0
      %2765 = vmatprep.subr.mxu0 0.0
      %2766 = vmatpush1.msra.mxu0 0.0
      %2767 = vmatprep.subr.mxu0 0.0
      %2768 = vmatpush1.msra.mxu0 0.0
      %2769 = vmatprep.subr.mxu0 0.0
      %2770 = vmatpush1.msra.mxu0 0.0
      %2771 = vmatprep.subr.mxu0 0.0
      %2772 = vmatpush1.msra.mxu0 0.0
      %2773 = vmatprep.subr.mxu0 0.0
      %2774 = vmatpush1.msra.mxu0 0.0
      %2775 = vmatprep.subr.mxu0 0.0
      %2776 = vmatpush1.msra.mxu0 0.0
      %2777 = vmatprep.subr.mxu0 0.0
      %2778 = vmatpush1.msra.mxu0 0.0
      %2779 = vmatprep.subr.mxu0 0.0
      %2780 = vmatpush1.msra.mxu0 0.0
      %2781 = vmatprep.subr.mxu0 0.0
      %2782 = vmatpush1.msra.mxu0 0.0
      %2783 = vmatprep.subr.mxu0 0.0
      %2784 = vmatpush1.msra.mxu0 0.0
      %2785 = vmatprep.subr.mxu0 0.0
      %2786 = vmatpush1.msra.mxu0 0.0
      %2787 = vmatprep.subr.mxu0 0.0
      %2788 = vmatpush1.msra.mxu0 0.0
      %2789 = vmatprep.subr.mxu0 0.0
      %2790 = vmatpush1.msra.mxu0 0.0
      %2791 = vmatprep.subr.mxu0 0.0
      %2792 = vmatpush1.msra.mxu0 0.0
      %2793 = vmatprep.subr.mxu0 0.0
      %2794 = vmatpush1.msra.mxu0 0.0
      %2795 = vmatprep.subr.mxu0 0.0
      %2796 = vmatpush1.msra.mxu0 0.0
      %2797 = vmatprep.subr.mxu0 0.0
      %2798 = vmatpush1.msra.mxu0 0.0
      %2799 = vmatprep.subr.mxu0 0.0
      %2800 = vmatpush1.msra.mxu0 0.0
      %2801 = vmatprep.subr.mxu0 0.0
      %2802 = vmatpush1.msra.mxu0 0.0
      %2803 = vmatprep.subr.mxu0 0.0
      %2804 = vmatpush1.msra.mxu0 0.0
      %2805 = vmatprep.subr.mxu0 0.0
      %2806 = vmatpush1.msra.mxu0 0.0
      %2807 = vmatprep.subr.mxu0 0.0
      %2808 = vmatpush1.msra.mxu0 0.0
      %2809 = vmatprep.subr.mxu0 0.0
      %2810 = vmatpush1.msra.mxu0 0.0
      %2811 = vmatprep.subr.mxu0 0.0
      %2812 = vmatpush1.msra.mxu0 0.0
      %2813 = vmatprep.subr.mxu0 0.0
      %2814 = vmatpush1.msra.mxu0 0.0
      %2815 = vmatprep.subr.mxu0 0.0
      %2816 = vmatpush1.msra.mxu0 0.0
      %2817 = vmatprep.subr.mxu0 0.0
      %2818 = vmatpush1.msra.mxu0 0.0
      %2819 = vmatprep.subr.mxu0 0.0
      %2820 = vmatpush1.msra.mxu0 0.0
      %2821 = vmatprep.subr.mxu0 0.0
      %2822 = vmatpush1.msra.mxu0 0.0
      %2823 = vmatprep.mubr.f32.mxu0 0.0
      %v2824 = vand.u32 %v2576, 4294901760
      %v2825 = vsub.f32 %v2576, %v2824
      %2826 = vmatmul.mubr.f32.gmra.mrb[0].mxu0 %v2825
      %v2827 = vpop.f32.mrb[0].mxu0
      %v2828 = vadd.f32 %v2746, %v2827
      %v2829 = vpop.f32.mrb[0].mxu0
      %2830 = vmatprep.mubr.f32.mxu0 0.0
      %v2831 = vand.u32 %v2579, 4294901760
      %v2832 = vsub.f32 %v2579, %v2831
      %2833 = vmatmul.mubr.f32.gmra.mrb[0].mxu0 %v2832
      %v2834 = vpop.f32.mrb[0].mxu0
      %v2835 = vadd.f32 %v2752, %v2834
      %v2836 = vpop.f32.mrb[0].mxu0
      %2837 = vdwg.mxu0
      %2838 = vmatprep.subr.mxu0 0.0
      %v2839 = vand.u32 %v2572, 4294901760
      %2840 = vmatpush1.msra.mxu0 %v2839
      %2841 = vmatprep.subr.mxu0 0.0
      %v2842 = vand.u32 %v2573, 4294901760
      %2843 = vmatpush1.msra.mxu0 %v2842
      %2844 = vmatprep.subr.mxu0 0.0
      %2845 = vmatpush1.msra.mxu0 0.0
      %2846 = vmatprep.subr.mxu0 0.0
      %2847 = vmatpush1.msra.mxu0 0.0
      %2848 = vmatprep.subr.mxu0 0.0
      %2849 = vmatpush1.msra.mxu0 0.0
      %2850 = vmatprep.subr.mxu0 0.0
      %2851 = vmatpush1.msra.mxu0 0.0
      %2852 = vmatprep.subr.mxu0 0.0
      %2853 = vmatpush1.msra.mxu0 0.0
      %2854 = vmatprep.subr.mxu0 0.0
      %2855 = vmatpush1.msra.mxu0 0.0
      %2856 = vmatprep.subr.mxu0 0.0
      %2857 = vmatpush1.msra.mxu0 0.0
      %2858 = vmatprep.subr.mxu0 0.0
      %2859 = vmatpush1.msra.mxu0 0.0
      %2860 = vmatprep.subr.mxu0 0.0
      %2861 = vmatpush1.msra.mxu0 0.0
      %2862 = vmatprep.subr.mxu0 0.0
      %2863 = vmatpush1.msra.mxu0 0.0
      %2864 = vmatprep.subr.mxu0 0.0
      %2865 = vmatpush1.msra.mxu0 0.0
      %2866 = vmatprep.subr.mxu0 0.0
      %2867 = vmatpush1.msra.mxu0 0.0
      %2868 = vmatprep.subr.mxu0 0.0
      %2869 = vmatpush1.msra.mxu0 0.0
      %2870 = vmatprep.subr.mxu0 0.0
      %2871 = vmatpush1.msra.mxu0 0.0
      %2872 = vmatprep.subr.mxu0 0.0
      %2873 = vmatpush1.msra.mxu0 0.0
      %2874 = vmatprep.subr.mxu0 0.0
      %2875 = vmatpush1.msra.mxu0 0.0
      %2876 = vmatprep.subr.mxu0 0.0
      %2877 = vmatpush1.msra.mxu0 0.0
      %2878 = vmatprep.subr.mxu0 0.0
      %2879 = vmatpush1.msra.mxu0 0.0
      %2880 = vmatprep.subr.mxu0 0.0
      %2881 = vmatpush1.msra.mxu0 0.0
      %2882 = vmatprep.subr.mxu0 0.0
      %2883 = vmatpush1.msra.mxu0 0.0
      %2884 = vmatprep.subr.mxu0 0.0
      %2885 = vmatpush1.msra.mxu0 0.0
      %2886 = vmatprep.subr.mxu0 0.0
      %2887 = vmatpush1.msra.mxu0 0.0
      %2888 = vmatprep.subr.mxu0 0.0
      %2889 = vmatpush1.msra.mxu0 0.0
      %2890 = vmatprep.subr.mxu0 0.0
      %2891 = vmatpush1.msra.mxu0 0.0
      %2892 = vmatprep.subr.mxu0 0.0
      %2893 = vmatpush1.msra.mxu0 0.0
      %2894 = vmatprep.subr.mxu0 0.0
      %2895 = vmatpush1.msra.mxu0 0.0
      %2896 = vmatprep.subr.mxu0 0.0
      %2897 = vmatpush1.msra.mxu0 0.0
      %2898 = vmatprep.subr.mxu0 0.0
      %2899 = vmatpush1.msra.mxu0 0.0
      %2900 = vmatprep.subr.mxu0 0.0
      %2901 = vmatpush1.msra.mxu0 0.0
      %2902 = vmatprep.subr.mxu0 0.0
      %2903 = vmatpush1.msra.mxu0 0.0
      %2904 = vmatprep.mubr.f32.mxu0 0.0
      %v2905 = vand.u32 %v2576, 4294901760
      %v2906 = vsub.f32 %v2576, %v2905
      %v2907 = vand.u32 %v2906, 4294901760
      %2908 = vmatmul.mubr.f32.gmra.mrb[0].mxu0 %v2907
      %v2909 = vpop.f32.mrb[0].mxu0
      %v2910 = vadd.f32 %v2828, %v2909
      %v2911 = vpop.f32.mrb[0].mxu0
      %2912 = vmatprep.mubr.f32.mxu0 0.0
      %v2913 = vand.u32 %v2579, 4294901760
      %v2914 = vsub.f32 %v2579, %v2913
      %v2915 = vand.u32 %v2914, 4294901760
      %2916 = vmatmul.mubr.f32.gmra.mrb[0].mxu0 %v2915
      %v2917 = vpop.f32.mrb[0].mxu0
      %v2918 = vadd.f32 %v2835, %v2917
      %v2919 = vpop.f32.mrb[0].mxu0
      %2920 = vdwg.mxu0
      %2921 = vmatprep.subr.mxu0 0.0
      %v2922 = vand.u32 %v2572, 4294901760
      %v2923 = vsub.f32 %v2572, %v2922
      %v2924 = vand.u32 %v2923, 4294901760
      %2925 = vmatpush1.msra.mxu0 %v2924
      %2926 = vmatprep.subr.mxu0 0.0
      %v2927 = vand.u32 %v2573, 4294901760
      %v2928 = vsub.f32 %v2573, %v2927
      %v2929 = vand.u32 %v2928, 4294901760
      %2930 = vmatpush1.msra.mxu0 %v2929
      %2931 = vmatprep.subr.mxu0 0.0
      %2932 = vmatpush1.msra.mxu0 0.0
      %2933 = vmatprep.subr.mxu0 0.0
      %2934 = vmatpush1.msra.mxu0 0.0
      %2935 = vmatprep.subr.mxu0 0.0
      %2936 = vmatpush1.msra.mxu0 0.0
      %2937 = vmatprep.subr.mxu0 0.0
      %2938 = vmatpush1.msra.mxu0 0.0
      %2939 = vmatprep.subr.mxu0 0.0
      %2940 = vmatpush1.msra.mxu0 0.0
      %2941 = vmatprep.subr.mxu0 0.0
      %2942 = vmatpush1.msra.mxu0 0.0
      %2943 = vmatprep.subr.mxu0 0.0
      %2944 = vmatpush1.msra.mxu0 0.0
      %2945 = vmatprep.subr.mxu0 0.0
      %2946 = vmatpush1.msra.mxu0 0.0
      %2947 = vmatprep.subr.mxu0 0.0
      %2948 = vmatpush1.msra.mxu0 0.0
      %2949 = vmatprep.subr.mxu0 0.0
      %2950 = vmatpush1.msra.mxu0 0.0
      %2951 = vmatprep.subr.mxu0 0.0
      %2952 = vmatpush1.msra.mxu0 0.0
      %2953 = vmatprep.subr.mxu0 0.0
      %2954 = vmatpush1.msra.mxu0 0.0
      %2955 = vmatprep.subr.mxu0 0.0
      %2956 = vmatpush1.msra.mxu0 0.0
      %2957 = vmatprep.subr.mxu0 0.0
      %2958 = vmatpush1.msra.mxu0 0.0
      %2959 = vmatprep.subr.mxu0 0.0
      %2960 = vmatpush1.msra.mxu0 0.0
      %2961 = vmatprep.subr.mxu0 0.0
      %2962 = vmatpush1.msra.mxu0 0.0
      %2963 = vmatprep.subr.mxu0 0.0
      %2964 = vmatpush1.msra.mxu0 0.0
      %2965 = vmatprep.subr.mxu0 0.0
      %2966 = vmatpush1.msra.mxu0 0.0
      %2967 = vmatprep.subr.mxu0 0.0
      %2968 = vmatpush1.msra.mxu0 0.0
      %2969 = vmatprep.subr.mxu0 0.0
      %2970 = vmatpush1.msra.mxu0 0.0
      %2971 = vmatprep.subr.mxu0 0.0
      %2972 = vmatpush1.msra.mxu0 0.0
      %2973 = vmatprep.subr.mxu0 0.0
      %2974 = vmatpush1.msra.mxu0 0.0
      %2975 = vmatprep.subr.mxu0 0.0
      %2976 = vmatpush1.msra.mxu0 0.0
      %2977 = vmatprep.subr.mxu0 0.0
      %2978 = vmatpush1.msra.mxu0 0.0
      %2979 = vmatprep.subr.mxu0 0.0
      %2980 = vmatpush1.msra.mxu0 0.0
      %2981 = vmatprep.subr.mxu0 0.0
      %2982 = vmatpush1.msra.mxu0 0.0
      %2983 = vmatprep.subr.mxu0 0.0
      %2984 = vmatpush1.msra.mxu0 0.0
      %2985 = vmatprep.subr.mxu0 0.0
      %2986 = vmatpush1.msra.mxu0 0.0
      %2987 = vmatprep.subr.mxu0 0.0
      %2988 = vmatpush1.msra.mxu0 0.0
      %2989 = vmatprep.subr.mxu0 0.0
      %2990 = vmatpush1.msra.mxu0 0.0
      %2991 = vmatprep.mubr.f32.mxu0 0.0
      %v2992 = vand.u32 %v2576, 4294901760
      %2993 = vmatmul.mubr.f32.gmra.mrb[0].mxu0 %v2992
      %v2994 = vpop.f32.mrb[0].mxu0
      %v2995 = vadd.f32 %v2910, %v2994
      %v2996 = vpop.f32.mrb[0].mxu0
      %2997 = vmatprep.mubr.f32.mxu0 0.0
      %v2998 = vand.u32 %v2579, 4294901760
      %2999 = vmatmul.mubr.f32.gmra.mrb[0].mxu0 %v2998
      %v3000 = vpop.f32.mrb[0].mxu0
      %v3001 = vadd.f32 %v2918, %v3000
      %v3002 = vpop.f32.mrb[0].mxu0
      %3003 = vdwg.mxu0
      %3004 = vmatprep.subr.mxu0 0.0
      %v3005 = vand.u32 %v2572, 4294901760
      %3006 = vmatpush1.msra.mxu0 %v3005
      %3007 = vmatprep.subr.mxu0 0.0
      %v3008 = vand.u32 %v2573, 4294901760
      %3009 = vmatpush1.msra.mxu0 %v3008
      %3010 = vmatprep.subr.mxu0 0.0
      %3011 = vmatpush1.msra.mxu0 0.0
      %3012 = vmatprep.subr.mxu0 0.0
      %3013 = vmatpush1.msra.mxu0 0.0
      %3014 = vmatprep.subr.mxu0 0.0
      %3015 = vmatpush1.msra.mxu0 0.0
      %3016 = vmatprep.subr.mxu0 0.0
      %3017 = vmatpush1.msra.mxu0 0.0
      %3018 = vmatprep.subr.mxu0 0.0
      %3019 = vmatpush1.msra.mxu0 0.0
      %3020 = vmatprep.subr.mxu0 0.0
      %3021 = vmatpush1.msra.mxu0 0.0
      %3022 = vmatprep.subr.mxu0 0.0
      %3023 = vmatpush1.msra.mxu0 0.0
      %3024 = vmatprep.subr.mxu0 0.0
      %3025 = vmatpush1.msra.mxu0 0.0
      %3026 = vmatprep.subr.mxu0 0.0
      %3027 = vmatpush1.msra.mxu0 0.0
      %3028 = vmatprep.subr.mxu0 0.0
      %3029 = vmatpush1.msra.mxu0 0.0
      %3030 = vmatprep.subr.mxu0 0.0
      %3031 = vmatpush1.msra.mxu0 0.0
      %3032 = vmatprep.subr.mxu0 0.0
      %3033 = vmatpush1.msra.mxu0 0.0
      %3034 = vmatprep.subr.mxu0 0.0
      %3035 = vmatpush1.msra.mxu0 0.0
      %3036 = vmatprep.subr.mxu0 0.0
      %3037 = vmatpush1.msra.mxu0 0.0
      %3038 = vmatprep.subr.mxu0 0.0
      %3039 = vmatpush1.msra.mxu0 0.0
      %3040 = vmatprep.subr.mxu0 0.0
      %3041 = vmatpush1.msra.mxu0 0.0
      %3042 = vmatprep.subr.mxu0 0.0
      %3043 = vmatpush1.msra.mxu0 0.0
      %3044 = vmatprep.subr.mxu0 0.0
      %3045 = vmatpush1.msra.mxu0 0.0
      %3046 = vmatprep.subr.mxu0 0.0
      %3047 = vmatpush1.msra.mxu0 0.0
      %3048 = vmatprep.subr.mxu0 0.0
      %3049 = vmatpush1.msra.mxu0 0.0
      %3050 = vmatprep.subr.mxu0 0.0
      %3051 = vmatpush1.msra.mxu0 0.0
      %3052 = vmatprep.subr.mxu0 0.0
      %3053 = vmatpush1.msra.mxu0 0.0
      %3054 = vmatprep.subr.mxu0 0.0
      %3055 = vmatpush1.msra.mxu0 0.0
      %3056 = vmatprep.subr.mxu0 0.0
      %3057 = vmatpush1.msra.mxu0 0.0
      %3058 = vmatprep.subr.mxu0 0.0
      %3059 = vmatpush1.msra.mxu0 0.0
      %3060 = vmatprep.subr.mxu0 0.0
      %3061 = vmatpush1.msra.mxu0 0.0
      %3062 = vmatprep.subr.mxu0 0.0
      %3063 = vmatpush1.msra.mxu0 0.0
      %3064 = vmatprep.subr.mxu0 0.0
      %3065 = vmatpush1.msra.mxu0 0.0
      %3066 = vmatprep.subr.mxu0 0.0
      %3067 = vmatpush1.msra.mxu0 0.0
      %3068 = vmatprep.subr.mxu0 0.0
      %3069 = vmatpush1.msra.mxu0 0.0
      %3070 = vmatprep.mubr.f32.mxu0 0.0
      %v3071 = vand.u32 %v2576, 4294901760
      %3072 = vmatmul.mubr.f32.gmra.mrb[0].mxu0 %v3071
      %v3073 = vpop.f32.mrb[0].mxu0
      %v3074 = vadd.f32 %v2995, %v3073
      %v3075 = vpop.f32.mrb[0].mxu0
      %3076 = vmatprep.mubr.f32.mxu0 0.0
      %v3077 = vand.u32 %v2579, 4294901760
      %3078 = vmatmul.mubr.f32.gmra.mrb[0].mxu0 %v3077
      %v3079 = vpop.f32.mrb[0].mxu0
      %v3080 = vadd.f32 %v3001, %v3079
      %v3081 = vpop.f32.mrb[0].mxu0
      %3082 = vdwg.mxu0
      %v3084 = vlaneseq
      %v3085 = vshrl.u32 %v3084, 7
      %v3086 = vsub.s32 0, %v3085
      %v3087 = vrot.slane %v2571, %v3086
      %v3089 = vadd.f32 %v3087, %v3074
      %v3090 = vadd.f32 %v3087, %v3080
      %v3091 = vld [vmem:[%s3 + $0x10] sm:$0xff]
      %v3092 = vld [vmem:[%s3 + $0x18] sm:$0xff]
      %v3094 = vsel %vm2574, %v1464, 0
      %v3097 = vsel %vm2574, %v1470, 0
      %3099 = vmatprep.subr.mxu0 0.0
      %v3100 = vand.u32 %v3091, 4294901760
      %3101 = vmatpush1.msra.mxu0 %v3100
      %3102 = vmatprep.subr.mxu0 0.0
      %v3103 = vand.u32 %v3092, 4294901760
      %3104 = vmatpush1.msra.mxu0 %v3103
      %3105 = vmatprep.subr.mxu0 0.0
      %3106 = vmatpush1.msra.mxu0 0.0
      %3107 = vmatprep.subr.mxu0 0.0
      %3108 = vmatpush1.msra.mxu0 0.0
      %3109 = vmatprep.subr.mxu0 0.0
      %3110 = vmatpush1.msra.mxu0 0.0
      %3111 = vmatprep.subr.mxu0 0.0
      %3112 = vmatpush1.msra.mxu0 0.0
      %3113 = vmatprep.subr.mxu0 0.0
      %3114 = vmatpush1.msra.mxu0 0.0
      %3115 = vmatprep.subr.mxu0 0.0
      %3116 = vmatpush1.msra.mxu0 0.0
      %3117 = vmatprep.subr.mxu0 0.0
      %3118 = vmatpush1.msra.mxu0 0.0
      %3119 = vmatprep.subr.mxu0 0.0
      %3120 = vmatpush1.msra.mxu0 0.0
      %3121 = vmatprep.subr.mxu0 0.0
      %3122 = vmatpush1.msra.mxu0 0.0
      %3123 = vmatprep.subr.mxu0 0.0
      %3124 = vmatpush1.msra.mxu0 0.0
      %3125 = vmatprep.subr.mxu0 0.0
      %3126 = vmatpush1.msra.mxu0 0.0
      %3127 = vmatprep.subr.mxu0 0.0
      %3128 = vmatpush1.msra.mxu0 0.0
      %3129 = vmatprep.subr.mxu0 0.0
      %3130 = vmatpush1.msra.mxu0 0.0
      %3131 = vmatprep.subr.mxu0 0.0
      %3132 = vmatpush1.msra.mxu0 0.0
      %3133 = vmatprep.subr.mxu0 0.0
      %3134 = vmatpush1.msra.mxu0 0.0
      %3135 = vmatprep.subr.mxu0 0.0
      %3136 = vmatpush1.msra.mxu0 0.0
      %3137 = vmatprep.subr.mxu0 0.0
      %3138 = vmatpush1.msra.mxu0 0.0
      %3139 = vmatprep.subr.mxu0 0.0
      %3140 = vmatpush1.msra.mxu0 0.0
      %3141 = vmatprep.subr.mxu0 0.0
      %3142 = vmatpush1.msra.mxu0 0.0
      %3143 = vmatprep.subr.mxu0 0.0
      %3144 = vmatpush1.msra.mxu0 0.0
      %3145 = vmatprep.subr.mxu0 0.0
      %3146 = vmatpush1.msra.mxu0 0.0
      %3147 = vmatprep.subr.mxu0 0.0
      %3148 = vmatpush1.msra.mxu0 0.0
      %3149 = vmatprep.subr.mxu0 0.0
      %3150 = vmatpush1.msra.mxu0 0.0
      %3151 = vmatprep.subr.mxu0 0.0
      %3152 = vmatpush1.msra.mxu0 0.0
      %3153 = vmatprep.subr.mxu0 0.0
      %3154 = vmatpush1.msra.mxu0 0.0
      %3155 = vmatprep.subr.mxu0 0.0
      %3156 = vmatpush1.msra.mxu0 0.0
      %3157 = vmatprep.subr.mxu0 0.0
      %3158 = vmatpush1.msra.mxu0 0.0
      %3159 = vmatprep.subr.mxu0 0.0
      %3160 = vmatpush1.msra.mxu0 0.0
      %3161 = vmatprep.subr.mxu0 0.0
      %3162 = vmatpush1.msra.mxu0 0.0
      %3163 = vmatprep.subr.mxu0 0.0
      %3164 = vmatpush1.msra.mxu0 0.0
      %3165 = vmatprep.mubr.f32.mxu0 0.0
      %v3166 = vand.u32 %v3094, 4294901760
      %v3167 = vsub.f32 %v3094, %v3166
      %v3168 = vand.u32 %v3167, 4294901760
      %v3169 = vsub.f32 %v3167, %v3168
      %v3170 = vand.u32 %v3169, 4294901760
      %3171 = vmatmul.mubr.f32.gmra.mrb[0].mxu0 %v3170
      %v3172 = vpop.f32.mrb[0].mxu0
      %v3173 = vadd.f32 0.0, %v3172
      %v3174 = vpop.f32.mrb[0].mxu0
      %3175 = vmatprep.mubr.f32.mxu0 0.0
      %v3176 = vand.u32 %v3097, 4294901760
      %v3177 = vsub.f32 %v3097, %v3176
      %v3178 = vand.u32 %v3177, 4294901760
      %v3179 = vsub.f32 %v3177, %v3178
      %v3180 = vand.u32 %v3179, 4294901760
      %3181 = vmatmul.mubr.f32.gmra.mrb[0].mxu0 %v3180
      %v3182 = vpop.f32.mrb[0].mxu0
      %v3183 = vadd.f32 0.0, %v3182
      %v3184 = vpop.f32.mrb[0].mxu0
      %3185 = vdwg.mxu0
      %3186 = vmatprep.subr.mxu0 0.0
      %v3187 = vand.u32 %v3091, 4294901760
      %v3188 = vsub.f32 %v3091, %v3187
      %v3189 = vand.u32 %v3188, 4294901760
      %v3190 = vsub.f32 %v3188, %v3189
      %v3191 = vand.u32 %v3190, 4294901760
      %3192 = vmatpush1.msra.mxu0 %v3191
      %3193 = vmatprep.subr.mxu0 0.0
      %v3194 = vand.u32 %v3092, 4294901760
      %v3195 = vsub.f32 %v3092, %v3194
      %v3196 = vand.u32 %v3195, 4294901760
      %v3197 = vsub.f32 %v3195, %v3196
      %v3198 = vand.u32 %v3197, 4294901760
      %3199 = vmatpush1.msra.mxu0 %v3198
      %3200 = vmatprep.subr.mxu0 0.0
      %3201 = vmatpush1.msra.mxu0 0.0
      %3202 = vmatprep.subr.mxu0 0.0
      %3203 = vmatpush1.msra.mxu0 0.0
      %3204 = vmatprep.subr.mxu0 0.0
      %3205 = vmatpush1.msra.mxu0 0.0
      %3206 = vmatprep.subr.mxu0 0.0
      %3207 = vmatpush1.msra.mxu0 0.0
      %3208 = vmatprep.subr.mxu0 0.0
      %3209 = vmatpush1.msra.mxu0 0.0
      %3210 = vmatprep.subr.mxu0 0.0
      %3211 = vmatpush1.msra.mxu0 0.0
      %3212 = vmatprep.subr.mxu0 0.0
      %3213 = vmatpush1.msra.mxu0 0.0
      %3214 = vmatprep.subr.mxu0 0.0
      %3215 = vmatpush1.msra.mxu0 0.0
      %3216 = vmatprep.subr.mxu0 0.0
      %3217 = vmatpush1.msra.mxu0 0.0
      %3218 = vmatprep.subr.mxu0 0.0
      %3219 = vmatpush1.msra.mxu0 0.0
      %3220 = vmatprep.subr.mxu0 0.0
      %3221 = vmatpush1.msra.mxu0 0.0
      %3222 = vmatprep.subr.mxu0 0.0
      %3223 = vmatpush1.msra.mxu0 0.0
      %3224 = vmatprep.subr.mxu0 0.0
      %3225 = vmatpush1.msra.mxu0 0.0
      %3226 = vmatprep.subr.mxu0 0.0
      %3227 = vmatpush1.msra.mxu0 0.0
      %3228 = vmatprep.subr.mxu0 0.0
      %3229 = vmatpush1.msra.mxu0 0.0
      %3230 = vmatprep.subr.mxu0 0.0
      %3231 = vmatpush1.msra.mxu0 0.0
      %3232 = vmatprep.subr.mxu0 0.0
      %3233 = vmatpush1.msra.mxu0 0.0
      %3234 = vmatprep.subr.mxu0 0.0
      %3235 = vmatpush1.msra.mxu0 0.0
      %3236 = vmatprep.subr.mxu0 0.0
      %3237 = vmatpush1.msra.mxu0 0.0
      %3238 = vmatprep.subr.mxu0 0.0
      %3239 = vmatpush1.msra.mxu0 0.0
      %3240 = vmatprep.subr.mxu0 0.0
      %3241 = vmatpush1.msra.mxu0 0.0
      %3242 = vmatprep.subr.mxu0 0.0
      %3243 = vmatpush1.msra.mxu0 0.0
      %3244 = vmatprep.subr.mxu0 0.0
      %3245 = vmatpush1.msra.mxu0 0.0
      %3246 = vmatprep.subr.mxu0 0.0
      %3247 = vmatpush1.msra.mxu0 0.0
      %3248 = vmatprep.subr.mxu0 0.0
      %3249 = vmatpush1.msra.mxu0 0.0
      %3250 = vmatprep.subr.mxu0 0.0
      %3251 = vmatpush1.msra.mxu0 0.0
      %3252 = vmatprep.subr.mxu0 0.0
      %3253 = vmatpush1.msra.mxu0 0.0
      %3254 = vmatprep.subr.mxu0 0.0
      %3255 = vmatpush1.msra.mxu0 0.0
      %3256 = vmatprep.subr.mxu0 0.0
      %3257 = vmatpush1.msra.mxu0 0.0
      %3258 = vmatprep.subr.mxu0 0.0
      %3259 = vmatpush1.msra.mxu0 0.0
      %3260 = vmatprep.mubr.f32.mxu0 0.0
      %v3261 = vand.u32 %v3094, 4294901760
      %3262 = vmatmul.mubr.f32.gmra.mrb[0].mxu0 %v3261
      %v3263 = vpop.f32.mrb[0].mxu0
      %v3264 = vadd.f32 %v3173, %v3263
      %v3265 = vpop.f32.mrb[0].mxu0
      %3266 = vmatprep.mubr.f32.mxu0 0.0
      %v3267 = vand.u32 %v3097, 4294901760
      %3268 = vmatmul.mubr.f32.gmra.mrb[0].mxu0 %v3267
      %v3269 = vpop.f32.mrb[0].mxu0
      %v3270 = vadd.f32 %v3183, %v3269
      %v3271 = vpop.f32.mrb[0].mxu0
      %3272 = vdwg.mxu0
      %3273 = vmatprep.subr.mxu0 0.0
      %v3274 = vand.u32 %v3091, 4294901760
      %v3275 = vsub.f32 %v3091, %v3274
      %3276 = vmatpush1.msra.mxu0 %v3275
      %3277 = vmatprep.subr.mxu0 0.0
      %v3278 = vand.u32 %v3092, 4294901760
      %v3279 = vsub.f32 %v3092, %v3278
      %3280 = vmatpush1.msra.mxu0 %v3279
      %3281 = vmatprep.subr.mxu0 0.0
      %3282 = vmatpush1.msra.mxu0 0.0
      %3283 = vmatprep.subr.mxu0 0.0
      %3284 = vmatpush1.msra.mxu0 0.0
      %3285 = vmatprep.subr.mxu0 0.0
      %3286 = vmatpush1.msra.mxu0 0.0
      %3287 = vmatprep.subr.mxu0 0.0
      %3288 = vmatpush1.msra.mxu0 0.0
      %3289 = vmatprep.subr.mxu0 0.0
      %3290 = vmatpush1.msra.mxu0 0.0
      %3291 = vmatprep.subr.mxu0 0.0
      %3292 = vmatpush1.msra.mxu0 0.0
      %3293 = vmatprep.subr.mxu0 0.0
      %3294 = vmatpush1.msra.mxu0 0.0
      %3295 = vmatprep.subr.mxu0 0.0
      %3296 = vmatpush1.msra.mxu0 0.0
      %3297 = vmatprep.subr.mxu0 0.0
      %3298 = vmatpush1.msra.mxu0 0.0
      %3299 = vmatprep.subr.mxu0 0.0
      %3300 = vmatpush1.msra.mxu0 0.0
      %3301 = vmatprep.subr.mxu0 0.0
      %3302 = vmatpush1.msra.mxu0 0.0
      %3303 = vmatprep.subr.mxu0 0.0
      %3304 = vmatpush1.msra.mxu0 0.0
      %3305 = vmatprep.subr.mxu0 0.0
      %3306 = vmatpush1.msra.mxu0 0.0
      %3307 = vmatprep.subr.mxu0 0.0
      %3308 = vmatpush1.msra.mxu0 0.0
      %3309 = vmatprep.subr.mxu0 0.0
      %3310 = vmatpush1.msra.mxu0 0.0
      %3311 = vmatprep.subr.mxu0 0.0
      %3312 = vmatpush1.msra.mxu0 0.0
      %3313 = vmatprep.subr.mxu0 0.0
      %3314 = vmatpush1.msra.mxu0 0.0
      %3315 = vmatprep.subr.mxu0 0.0
      %3316 = vmatpush1.msra.mxu0 0.0
      %3317 = vmatprep.subr.mxu0 0.0
      %3318 = vmatpush1.msra.mxu0 0.0
      %3319 = vmatprep.subr.mxu0 0.0
      %3320 = vmatpush1.msra.mxu0 0.0
      %3321 = vmatprep.subr.mxu0 0.0
      %3322 = vmatpush1.msra.mxu0 0.0
      %3323 = vmatprep.subr.mxu0 0.0
      %3324 = vmatpush1.msra.mxu0 0.0
      %3325 = vmatprep.subr.mxu0 0.0
      %3326 = vmatpush1.msra.mxu0 0.0
      %3327 = vmatprep.subr.mxu0 0.0
      %3328 = vmatpush1.msra.mxu0 0.0
      %3329 = vmatprep.subr.mxu0 0.0
      %3330 = vmatpush1.msra.mxu0 0.0
      %3331 = vmatprep.subr.mxu0 0.0
      %3332 = vmatpush1.msra.mxu0 0.0
      %3333 = vmatprep.subr.mxu0 0.0
      %3334 = vmatpush1.msra.mxu0 0.0
      %3335 = vmatprep.subr.mxu0 0.0
      %3336 = vmatpush1.msra.mxu0 0.0
      %3337 = vmatprep.subr.mxu0 0.0
      %3338 = vmatpush1.msra.mxu0 0.0
      %3339 = vmatprep.subr.mxu0 0.0
      %3340 = vmatpush1.msra.mxu0 0.0
      %3341 = vmatprep.mubr.f32.mxu0 0.0
      %v3342 = vand.u32 %v3094, 4294901760
      %v3343 = vsub.f32 %v3094, %v3342
      %3344 = vmatmul.mubr.f32.gmra.mrb[0].mxu0 %v3343
      %v3345 = vpop.f32.mrb[0].mxu0
      %v3346 = vadd.f32 %v3264, %v3345
      %v3347 = vpop.f32.mrb[0].mxu0
      %3348 = vmatprep.mubr.f32.mxu0 0.0
      %v3349 = vand.u32 %v3097, 4294901760
      %v3350 = vsub.f32 %v3097, %v3349
      %3351 = vmatmul.mubr.f32.gmra.mrb[0].mxu0 %v3350
      %v3352 = vpop.f32.mrb[0].mxu0
      %v3353 = vadd.f32 %v3270, %v3352
      %v3354 = vpop.f32.mrb[0].mxu0
      %3355 = vdwg.mxu0
      %3356 = vmatprep.subr.mxu0 0.0
      %v3357 = vand.u32 %v3091, 4294901760
      %3358 = vmatpush1.msra.mxu0 %v3357
      %3359 = vmatprep.subr.mxu0 0.0
      %v3360 = vand.u32 %v3092, 4294901760
      %3361 = vmatpush1.msra.mxu0 %v3360
      %3362 = vmatprep.subr.mxu0 0.0
      %3363 = vmatpush1.msra.mxu0 0.0
      %3364 = vmatprep.subr.mxu0 0.0
      %3365 = vmatpush1.msra.mxu0 0.0
      %3366 = vmatprep.subr.mxu0 0.0
      %3367 = vmatpush1.msra.mxu0 0.0
      %3368 = vmatprep.subr.mxu0 0.0
      %3369 = vmatpush1.msra.mxu0 0.0
      %3370 = vmatprep.subr.mxu0 0.0
      %3371 = vmatpush1.msra.mxu0 0.0
      %3372 = vmatprep.subr.mxu0 0.0
      %3373 = vmatpush1.msra.mxu0 0.0
      %3374 = vmatprep.subr.mxu0 0.0
      %3375 = vmatpush1.msra.mxu0 0.0
      %3376 = vmatprep.subr.mxu0 0.0
      %3377 = vmatpush1.msra.mxu0 0.0
      %3378 = vmatprep.subr.mxu0 0.0
      %3379 = vmatpush1.msra.mxu0 0.0
      %3380 = vmatprep.subr.mxu0 0.0
      %3381 = vmatpush1.msra.mxu0 0.0
      %3382 = vmatprep.subr.mxu0 0.0
      %3383 = vmatpush1.msra.mxu0 0.0
      %3384 = vmatprep.subr.mxu0 0.0
      %3385 = vmatpush1.msra.mxu0 0.0
      %3386 = vmatprep.subr.mxu0 0.0
      %3387 = vmatpush1.msra.mxu0 0.0
      %3388 = vmatprep.subr.mxu0 0.0
      %3389 = vmatpush1.msra.mxu0 0.0
      %3390 = vmatprep.subr.mxu0 0.0
      %3391 = vmatpush1.msra.mxu0 0.0
      %3392 = vmatprep.subr.mxu0 0.0
      %3393 = vmatpush1.msra.mxu0 0.0
      %3394 = vmatprep.subr.mxu0 0.0
      %3395 = vmatpush1.msra.mxu0 0.0
      %3396 = vmatprep.subr.mxu0 0.0
      %3397 = vmatpush1.msra.mxu0 0.0
      %3398 = vmatprep.subr.mxu0 0.0
      %3399 = vmatpush1.msra.mxu0 0.0
      %3400 = vmatprep.subr.mxu0 0.0
      %3401 = vmatpush1.msra.mxu0 0.0
      %3402 = vmatprep.subr.mxu0 0.0
      %3403 = vmatpush1.msra.mxu0 0.0
      %3404 = vmatprep.subr.mxu0 0.0
      %3405 = vmatpush1.msra.mxu0 0.0
      %3406 = vmatprep.subr.mxu0 0.0
      %3407 = vmatpush1.msra.mxu0 0.0
      %3408 = vmatprep.subr.mxu0 0.0
      %3409 = vmatpush1.msra.mxu0 0.0
      %3410 = vmatprep.subr.mxu0 0.0
      %3411 = vmatpush1.msra.mxu0 0.0
      %3412 = vmatprep.subr.mxu0 0.0
      %3413 = vmatpush1.msra.mxu0 0.0
      %3414 = vmatprep.subr.mxu0 0.0
      %3415 = vmatpush1.msra.mxu0 0.0
      %3416 = vmatprep.subr.mxu0 0.0
      %3417 = vmatpush1.msra.mxu0 0.0
      %3418 = vmatprep.subr.mxu0 0.0
      %3419 = vmatpush1.msra.mxu0 0.0
      %3420 = vmatprep.subr.mxu0 0.0
      %3421 = vmatpush1.msra.mxu0 0.0
      %3422 = vmatprep.mubr.f32.mxu0 0.0
      %v3423 = vand.u32 %v3094, 4294901760
      %v3424 = vsub.f32 %v3094, %v3423
      %v3425 = vand.u32 %v3424, 4294901760
      %3426 = vmatmul.mubr.f32.gmra.mrb[0].mxu0 %v3425
      %v3427 = vpop.f32.mrb[0].mxu0
      %v3428 = vadd.f32 %v3346, %v3427
      %v3429 = vpop.f32.mrb[0].mxu0
      %3430 = vmatprep.mubr.f32.mxu0 0.0
      %v3431 = vand.u32 %v3097, 4294901760
      %v3432 = vsub.f32 %v3097, %v3431
      %v3433 = vand.u32 %v3432, 4294901760
      %3434 = vmatmul.mubr.f32.gmra.mrb[0].mxu0 %v3433
      %v3435 = vpop.f32.mrb[0].mxu0
      %v3436 = vadd.f32 %v3353, %v3435
      %v3437 = vpop.f32.mrb[0].mxu0
      %3438 = vdwg.mxu0
      %3439 = vmatprep.subr.mxu0 0.0
      %v3440 = vand.u32 %v3091, 4294901760
      %v3441 = vsub.f32 %v3091, %v3440
      %v3442 = vand.u32 %v3441, 4294901760
      %3443 = vmatpush1.msra.mxu0 %v3442
      %3444 = vmatprep.subr.mxu0 0.0
      %v3445 = vand.u32 %v3092, 4294901760
      %v3446 = vsub.f32 %v3092, %v3445
      %v3447 = vand.u32 %v3446, 4294901760
      %3448 = vmatpush1.msra.mxu0 %v3447
      %3449 = vmatprep.subr.mxu0 0.0
      %3450 = vmatpush1.msra.mxu0 0.0
      %3451 = vmatprep.subr.mxu0 0.0
      %3452 = vmatpush1.msra.mxu0 0.0
      %3453 = vmatprep.subr.mxu0 0.0
      %3454 = vmatpush1.msra.mxu0 0.0
      %3455 = vmatprep.subr.mxu0 0.0
      %3456 = vmatpush1.msra.mxu0 0.0
      %3457 = vmatprep.subr.mxu0 0.0
      %3458 = vmatpush1.msra.mxu0 0.0
      %3459 = vmatprep.subr.mxu0 0.0
      %3460 = vmatpush1.msra.mxu0 0.0
      %3461 = vmatprep.subr.mxu0 0.0
      %3462 = vmatpush1.msra.mxu0 0.0
      %3463 = vmatprep.subr.mxu0 0.0
      %3464 = vmatpush1.msra.mxu0 0.0
      %3465 = vmatprep.subr.mxu0 0.0
      %3466 = vmatpush1.msra.mxu0 0.0
      %3467 = vmatprep.subr.mxu0 0.0
      %3468 = vmatpush1.msra.mxu0 0.0
      %3469 = vmatprep.subr.mxu0 0.0
      %3470 = vmatpush1.msra.mxu0 0.0
      %3471 = vmatprep.subr.mxu0 0.0
      %3472 = vmatpush1.msra.mxu0 0.0
      %3473 = vmatprep.subr.mxu0 0.0
      %3474 = vmatpush1.msra.mxu0 0.0
      %3475 = vmatprep.subr.mxu0 0.0
      %3476 = vmatpush1.msra.mxu0 0.0
      %3477 = vmatprep.subr.mxu0 0.0
      %3478 = vmatpush1.msra.mxu0 0.0
      %3479 = vmatprep.subr.mxu0 0.0
      %3480 = vmatpush1.msra.mxu0 0.0
      %3481 = vmatprep.subr.mxu0 0.0
      %3482 = vmatpush1.msra.mxu0 0.0
      %3483 = vmatprep.subr.mxu0 0.0
      %3484 = vmatpush1.msra.mxu0 0.0
      %3485 = vmatprep.subr.mxu0 0.0
      %3486 = vmatpush1.msra.mxu0 0.0
      %3487 = vmatprep.subr.mxu0 0.0
      %3488 = vmatpush1.msra.mxu0 0.0
      %3489 = vmatprep.subr.mxu0 0.0
      %3490 = vmatpush1.msra.mxu0 0.0
      %3491 = vmatprep.subr.mxu0 0.0
      %3492 = vmatpush1.msra.mxu0 0.0
      %3493 = vmatprep.subr.mxu0 0.0
      %3494 = vmatpush1.msra.mxu0 0.0
      %3495 = vmatprep.subr.mxu0 0.0
      %3496 = vmatpush1.msra.mxu0 0.0
      %3497 = vmatprep.subr.mxu0 0.0
      %3498 = vmatpush1.msra.mxu0 0.0
      %3499 = vmatprep.subr.mxu0 0.0
      %3500 = vmatpush1.msra.mxu0 0.0
      %3501 = vmatprep.subr.mxu0 0.0
      %3502 = vmatpush1.msra.mxu0 0.0
      %3503 = vmatprep.subr.mxu0 0.0
      %3504 = vmatpush1.msra.mxu0 0.0
      %3505 = vmatprep.subr.mxu0 0.0
      %3506 = vmatpush1.msra.mxu0 0.0
      %3507 = vmatprep.subr.mxu0 0.0
      %3508 = vmatpush1.msra.mxu0 0.0
      %3509 = vmatprep.mubr.f32.mxu0 0.0
      %v3510 = vand.u32 %v3094, 4294901760
      %3511 = vmatmul.mubr.f32.gmra.mrb[0].mxu0 %v3510
      %v3512 = vpop.f32.mrb[0].mxu0
      %v3513 = vadd.f32 %v3428, %v3512
      %v3514 = vpop.f32.mrb[0].mxu0
      %3515 = vmatprep.mubr.f32.mxu0 0.0
      %v3516 = vand.u32 %v3097, 4294901760
      %3517 = vmatmul.mubr.f32.gmra.mrb[0].mxu0 %v3516
      %v3518 = vpop.f32.mrb[0].mxu0
      %v3519 = vadd.f32 %v3436, %v3518
      %v3520 = vpop.f32.mrb[0].mxu0
      %3521 = vdwg.mxu0
      %3522 = vmatprep.subr.mxu0 0.0
      %v3523 = vand.u32 %v3091, 4294901760
      %3524 = vmatpush1.msra.mxu0 %v3523
      %3525 = vmatprep.subr.mxu0 0.0
      %v3526 = vand.u32 %v3092, 4294901760
      %3527 = vmatpush1.msra.mxu0 %v3526
      %3528 = vmatprep.subr.mxu0 0.0
      %3529 = vmatpush1.msra.mxu0 0.0
      %3530 = vmatprep.subr.mxu0 0.0
      %3531 = vmatpush1.msra.mxu0 0.0
      %3532 = vmatprep.subr.mxu0 0.0
      %3533 = vmatpush1.msra.mxu0 0.0
      %3534 = vmatprep.subr.mxu0 0.0
      %3535 = vmatpush1.msra.mxu0 0.0
      %3536 = vmatprep.subr.mxu0 0.0
      %3537 = vmatpush1.msra.mxu0 0.0
      %3538 = vmatprep.subr.mxu0 0.0
      %3539 = vmatpush1.msra.mxu0 0.0
      %3540 = vmatprep.subr.mxu0 0.0
      %3541 = vmatpush1.msra.mxu0 0.0
      %3542 = vmatprep.subr.mxu0 0.0
      %3543 = vmatpush1.msra.mxu0 0.0
      %3544 = vmatprep.subr.mxu0 0.0
      %3545 = vmatpush1.msra.mxu0 0.0
      %3546 = vmatprep.subr.mxu0 0.0
      %3547 = vmatpush1.msra.mxu0 0.0
      %3548 = vmatprep.subr.mxu0 0.0
      %3549 = vmatpush1.msra.mxu0 0.0
      %3550 = vmatprep.subr.mxu0 0.0
      %3551 = vmatpush1.msra.mxu0 0.0
      %3552 = vmatprep.subr.mxu0 0.0
      %3553 = vmatpush1.msra.mxu0 0.0
      %3554 = vmatprep.subr.mxu0 0.0
      %3555 = vmatpush1.msra.mxu0 0.0
      %3556 = vmatprep.subr.mxu0 0.0
      %3557 = vmatpush1.msra.mxu0 0.0
      %3558 = vmatprep.subr.mxu0 0.0
      %3559 = vmatpush1.msra.mxu0 0.0
      %3560 = vmatprep.subr.mxu0 0.0
      %3561 = vmatpush1.msra.mxu0 0.0
      %3562 = vmatprep.subr.mxu0 0.0
      %3563 = vmatpush1.msra.mxu0 0.0
      %3564 = vmatprep.subr.mxu0 0.0
      %3565 = vmatpush1.msra.mxu0 0.0
      %3566 = vmatprep.subr.mxu0 0.0
      %3567 = vmatpush1.msra.mxu0 0.0
      %3568 = vmatprep.subr.mxu0 0.0
      %3569 = vmatpush1.msra.mxu0 0.0
      %3570 = vmatprep.subr.mxu0 0.0
      %3571 = vmatpush1.msra.mxu0 0.0
      %3572 = vmatprep.subr.mxu0 0.0
      %3573 = vmatpush1.msra.mxu0 0.0
      %3574 = vmatprep.subr.mxu0 0.0
      %3575 = vmatpush1.msra.mxu0 0.0
      %3576 = vmatprep.subr.mxu0 0.0
      %3577 = vmatpush1.msra.mxu0 0.0
      %3578 = vmatprep.subr.mxu0 0.0
      %3579 = vmatpush1.msra.mxu0 0.0
      %3580 = vmatprep.subr.mxu0 0.0
      %3581 = vmatpush1.msra.mxu0 0.0
      %3582 = vmatprep.subr.mxu0 0.0
      %3583 = vmatpush1.msra.mxu0 0.0
      %3584 = vmatprep.subr.mxu0 0.0
      %3585 = vmatpush1.msra.mxu0 0.0
      %3586 = vmatprep.subr.mxu0 0.0
      %3587 = vmatpush1.msra.mxu0 0.0
      %3588 = vmatprep.mubr.f32.mxu0 0.0
      %v3589 = vand.u32 %v3094, 4294901760
      %3590 = vmatmul.mubr.f32.gmra.mrb[0].mxu0 %v3589
      %v3591 = vpop.f32.mrb[0].mxu0
      %v3592 = vadd.f32 %v3513, %v3591
      %v3593 = vpop.f32.mrb[0].mxu0
      %3594 = vmatprep.mubr.f32.mxu0 0.0
      %v3595 = vand.u32 %v3097, 4294901760
      %3596 = vmatmul.mubr.f32.gmra.mrb[0].mxu0 %v3595
      %v3597 = vpop.f32.mrb[0].mxu0
      %v3598 = vadd.f32 %v3519, %v3597
      %v3599 = vpop.f32.mrb[0].mxu0
      %3600 = vdwg.mxu0
      %v3601 = vadd.f32 %v3089, %v3592
      %v3602 = vadd.f32 %v3090, %v3598
      %v3603 = vld [vmem:[%s3 + $0x20] sm:$0xff]
      %v3604 = vld [vmem:[%s3 + $0x28] sm:$0xff]
      %v3606 = vsel %vm2574, %v2010, 0
      %v3609 = vsel %vm2574, %v2016, 0
      %3611 = vmatprep.subr.mxu0 0.0
      %v3612 = vand.u32 %v3603, 4294901760
      %3613 = vmatpush1.msra.mxu0 %v3612
      %3614 = vmatprep.subr.mxu0 0.0
      %v3615 = vand.u32 %v3604, 4294901760
      %3616 = vmatpush1.msra.mxu0 %v3615
      %3617 = vmatprep.subr.mxu0 0.0
      %3618 = vmatpush1.msra.mxu0 0.0
      %3619 = vmatprep.subr.mxu0 0.0
      %3620 = vmatpush1.msra.mxu0 0.0
      %3621 = vmatprep.subr.mxu0 0.0
      %3622 = vmatpush1.msra.mxu0 0.0
      %3623 = vmatprep.subr.mxu0 0.0
      %3624 = vmatpush1.msra.mxu0 0.0
      %3625 = vmatprep.subr.mxu0 0.0
      %3626 = vmatpush1.msra.mxu0 0.0
      %3627 = vmatprep.subr.mxu0 0.0
      %3628 = vmatpush1.msra.mxu0 0.0
      %3629 = vmatprep.subr.mxu0 0.0
      %3630 = vmatpush1.msra.mxu0 0.0
      %3631 = vmatprep.subr.mxu0 0.0
      %3632 = vmatpush1.msra.mxu0 0.0
      %3633 = vmatprep.subr.mxu0 0.0
      %3634 = vmatpush1.msra.mxu0 0.0
      %3635 = vmatprep.subr.mxu0 0.0
      %3636 = vmatpush1.msra.mxu0 0.0
      %3637 = vmatprep.subr.mxu0 0.0
      %3638 = vmatpush1.msra.mxu0 0.0
      %3639 = vmatprep.subr.mxu0 0.0
      %3640 = vmatpush1.msra.mxu0 0.0
      %3641 = vmatprep.subr.mxu0 0.0
      %3642 = vmatpush1.msra.mxu0 0.0
      %3643 = vmatprep.subr.mxu0 0.0
      %3644 = vmatpush1.msra.mxu0 0.0
      %3645 = vmatprep.subr.mxu0 0.0
      %3646 = vmatpush1.msra.mxu0 0.0
      %3647 = vmatprep.subr.mxu0 0.0
      %3648 = vmatpush1.msra.mxu0 0.0
      %3649 = vmatprep.subr.mxu0 0.0
      %3650 = vmatpush1.msra.mxu0 0.0
      %3651 = vmatprep.subr.mxu0 0.0
      %3652 = vmatpush1.msra.mxu0 0.0
      %3653 = vmatprep.subr.mxu0 0.0
      %3654 = vmatpush1.msra.mxu0 0.0
      %3655 = vmatprep.subr.mxu0 0.0
      %3656 = vmatpush1.msra.mxu0 0.0
      %3657 = vmatprep.subr.mxu0 0.0
      %3658 = vmatpush1.msra.mxu0 0.0
      %3659 = vmatprep.subr.mxu0 0.0
      %3660 = vmatpush1.msra.mxu0 0.0
      %3661 = vmatprep.subr.mxu0 0.0
      %3662 = vmatpush1.msra.mxu0 0.0
      %3663 = vmatprep.subr.mxu0 0.0
      %3664 = vmatpush1.msra.mxu0 0.0
      %3665 = vmatprep.subr.mxu0 0.0
      %3666 = vmatpush1.msra.mxu0 0.0
      %3667 = vmatprep.subr.mxu0 0.0
      %3668 = vmatpush1.msra.mxu0 0.0
      %3669 = vmatprep.subr.mxu0 0.0
      %3670 = vmatpush1.msra.mxu0 0.0
      %3671 = vmatprep.subr.mxu0 0.0
      %3672 = vmatpush1.msra.mxu0 0.0
      %3673 = vmatprep.subr.mxu0 0.0
      %3674 = vmatpush1.msra.mxu0 0.0
      %3675 = vmatprep.subr.mxu0 0.0
      %3676 = vmatpush1.msra.mxu0 0.0
      %3677 = vmatprep.mubr.f32.mxu0 0.0
      %v3678 = vand.u32 %v3606, 4294901760
      %v3679 = vsub.f32 %v3606, %v3678
      %v3680 = vand.u32 %v3679, 4294901760
      %v3681 = vsub.f32 %v3679, %v3680
      %v3682 = vand.u32 %v3681, 4294901760
      %3683 = vmatmul.mubr.f32.gmra.mrb[0].mxu0 %v3682
      %v3684 = vpop.f32.mrb[0].mxu0
      %v3685 = vadd.f32 0.0, %v3684
      %v3686 = vpop.f32.mrb[0].mxu0
      %3687 = vmatprep.mubr.f32.mxu0 0.0
      %v3688 = vand.u32 %v3609, 4294901760
      %v3689 = vsub.f32 %v3609, %v3688
      %v3690 = vand.u32 %v3689, 4294901760
      %v3691 = vsub.f32 %v3689, %v3690
      %v3692 = vand.u32 %v3691, 4294901760
      %3693 = vmatmul.mubr.f32.gmra.mrb[0].mxu0 %v3692
      %v3694 = vpop.f32.mrb[0].mxu0
      %v3695 = vadd.f32 0.0, %v3694
      %v3696 = vpop.f32.mrb[0].mxu0
      %3697 = vdwg.mxu0
      %3698 = vmatprep.subr.mxu0 0.0
      %v3699 = vand.u32 %v3603, 4294901760
      %v3700 = vsub.f32 %v3603, %v3699
      %v3701 = vand.u32 %v3700, 4294901760
      %v3702 = vsub.f32 %v3700, %v3701
      %v3703 = vand.u32 %v3702, 4294901760
      %3704 = vmatpush1.msra.mxu0 %v3703
      %3705 = vmatprep.subr.mxu0 0.0
      %v3706 = vand.u32 %v3604, 4294901760
      %v3707 = vsub.f32 %v3604, %v3706
      %v3708 = vand.u32 %v3707, 4294901760
      %v3709 = vsub.f32 %v3707, %v3708
      %v3710 = vand.u32 %v3709, 4294901760
      %3711 = vmatpush1.msra.mxu0 %v3710
      %3712 = vmatprep.subr.mxu0 0.0
      %3713 = vmatpush1.msra.mxu0 0.0
      %3714 = vmatprep.subr.mxu0 0.0
      %3715 = vmatpush1.msra.mxu0 0.0
      %3716 = vmatprep.subr.mxu0 0.0
      %3717 = vmatpush1.msra.mxu0 0.0
      %3718 = vmatprep.subr.mxu0 0.0
      %3719 = vmatpush1.msra.mxu0 0.0
      %3720 = vmatprep.subr.mxu0 0.0
      %3721 = vmatpush1.msra.mxu0 0.0
      %3722 = vmatprep.subr.mxu0 0.0
      %3723 = vmatpush1.msra.mxu0 0.0
      %3724 = vmatprep.subr.mxu0 0.0
      %3725 = vmatpush1.msra.mxu0 0.0
      %3726 = vmatprep.subr.mxu0 0.0
      %3727 = vmatpush1.msra.mxu0 0.0
      %3728 = vmatprep.subr.mxu0 0.0
      %3729 = vmatpush1.msra.mxu0 0.0
      %3730 = vmatprep.subr.mxu0 0.0
      %3731 = vmatpush1.msra.mxu0 0.0
      %3732 = vmatprep.subr.mxu0 0.0
      %3733 = vmatpush1.msra.mxu0 0.0
      %3734 = vmatprep.subr.mxu0 0.0
      %3735 = vmatpush1.msra.mxu0 0.0
      %3736 = vmatprep.subr.mxu0 0.0
      %3737 = vmatpush1.msra.mxu0 0.0
      %3738 = vmatprep.subr.mxu0 0.0
      %3739 = vmatpush1.msra.mxu0 0.0
      %3740 = vmatprep.subr.mxu0 0.0
      %3741 = vmatpush1.msra.mxu0 0.0
      %3742 = vmatprep.subr.mxu0 0.0
      %3743 = vmatpush1.msra.mxu0 0.0
      %3744 = vmatprep.subr.mxu0 0.0
      %3745 = vmatpush1.msra.mxu0 0.0
      %3746 = vmatprep.subr.mxu0 0.0
      %3747 = vmatpush1.msra.mxu0 0.0
      %3748 = vmatprep.subr.mxu0 0.0
      %3749 = vmatpush1.msra.mxu0 0.0
      %3750 = vmatprep.subr.mxu0 0.0
      %3751 = vmatpush1.msra.mxu0 0.0
      %3752 = vmatprep.subr.mxu0 0.0
      %3753 = vmatpush1.msra.mxu0 0.0
      %3754 = vmatprep.subr.mxu0 0.0
      %3755 = vmatpush1.msra.mxu0 0.0
      %3756 = vmatprep.subr.mxu0 0.0
      %3757 = vmatpush1.msra.mxu0 0.0
      %3758 = vmatprep.subr.mxu0 0.0
      %3759 = vmatpush1.msra.mxu0 0.0
      %3760 = vmatprep.subr.mxu0 0.0
      %3761 = vmatpush1.msra.mxu0 0.0
      %3762 = vmatprep.subr.mxu0 0.0
      %3763 = vmatpush1.msra.mxu0 0.0
      %3764 = vmatprep.subr.mxu0 0.0
      %3765 = vmatpush1.msra.mxu0 0.0
      %3766 = vmatprep.subr.mxu0 0.0
      %3767 = vmatpush1.msra.mxu0 0.0
      %3768 = vmatprep.subr.mxu0 0.0
      %3769 = vmatpush1.msra.mxu0 0.0
      %3770 = vmatprep.subr.mxu0 0.0
      %3771 = vmatpush1.msra.mxu0 0.0
      %3772 = vmatprep.mubr.f32.mxu0 0.0
      %v3773 = vand.u32 %v3606, 4294901760
      %3774 = vmatmul.mubr.f32.gmra.mrb[0].mxu0 %v3773
      %v3775 = vpop.f32.mrb[0].mxu0
      %v3776 = vadd.f32 %v3685, %v3775
      %v3777 = vpop.f32.mrb[0].mxu0
      %3778 = vmatprep.mubr.f32.mxu0 0.0
      %v3779 = vand.u32 %v3609, 4294901760
      %3780 = vmatmul.mubr.f32.gmra.mrb[0].mxu0 %v3779
      %v3781 = vpop.f32.mrb[0].mxu0
      %v3782 = vadd.f32 %v3695, %v3781
      %v3783 = vpop.f32.mrb[0].mxu0
      %3784 = vdwg.mxu0
      %3785 = vmatprep.subr.mxu0 0.0
      %v3786 = vand.u32 %v3603, 4294901760
      %v3787 = vsub.f32 %v3603, %v3786
      %3788 = vmatpush1.msra.mxu0 %v3787
      %3789 = vmatprep.subr.mxu0 0.0
      %v3790 = vand.u32 %v3604, 4294901760
      %v3791 = vsub.f32 %v3604, %v3790
      %3792 = vmatpush1.msra.mxu0 %v3791
      %3793 = vmatprep.subr.mxu0 0.0
      %3794 = vmatpush1.msra.mxu0 0.0
      %3795 = vmatprep.subr.mxu0 0.0
      %3796 = vmatpush1.msra.mxu0 0.0
      %3797 = vmatprep.subr.mxu0 0.0
      %3798 = vmatpush1.msra.mxu0 0.0
      %3799 = vmatprep.subr.mxu0 0.0
      %3800 = vmatpush1.msra.mxu0 0.0
      %3801 = vmatprep.subr.mxu0 0.0
      %3802 = vmatpush1.msra.mxu0 0.0
      %3803 = vmatprep.subr.mxu0 0.0
      %3804 = vmatpush1.msra.mxu0 0.0
      %3805 = vmatprep.subr.mxu0 0.0
      %3806 = vmatpush1.msra.mxu0 0.0
      %3807 = vmatprep.subr.mxu0 0.0
      %3808 = vmatpush1.msra.mxu0 0.0
      %3809 = vmatprep.subr.mxu0 0.0
      %3810 = vmatpush1.msra.mxu0 0.0
      %3811 = vmatprep.subr.mxu0 0.0
      %3812 = vmatpush1.msra.mxu0 0.0
      %3813 = vmatprep.subr.mxu0 0.0
      %3814 = vmatpush1.msra.mxu0 0.0
      %3815 = vmatprep.subr.mxu0 0.0
      %3816 = vmatpush1.msra.mxu0 0.0
      %3817 = vmatprep.subr.mxu0 0.0
      %3818 = vmatpush1.msra.mxu0 0.0
      %3819 = vmatprep.subr.mxu0 0.0
      %3820 = vmatpush1.msra.mxu0 0.0
      %3821 = vmatprep.subr.mxu0 0.0
      %3822 = vmatpush1.msra.mxu0 0.0
      %3823 = vmatprep.subr.mxu0 0.0
      %3824 = vmatpush1.msra.mxu0 0.0
      %3825 = vmatprep.subr.mxu0 0.0
      %3826 = vmatpush1.msra.mxu0 0.0
      %3827 = vmatprep.subr.mxu0 0.0
      %3828 = vmatpush1.msra.mxu0 0.0
      %3829 = vmatprep.subr.mxu0 0.0
      %3830 = vmatpush1.msra.mxu0 0.0
      %3831 = vmatprep.subr.mxu0 0.0
      %3832 = vmatpush1.msra.mxu0 0.0
      %3833 = vmatprep.subr.mxu0 0.0
      %3834 = vmatpush1.msra.mxu0 0.0
      %3835 = vmatprep.subr.mxu0 0.0
      %3836 = vmatpush1.msra.mxu0 0.0
      %3837 = vmatprep.subr.mxu0 0.0
      %3838 = vmatpush1.msra.mxu0 0.0
      %3839 = vmatprep.subr.mxu0 0.0
      %3840 = vmatpush1.msra.mxu0 0.0
      %3841 = vmatprep.subr.mxu0 0.0
      %3842 = vmatpush1.msra.mxu0 0.0
      %3843 = vmatprep.subr.mxu0 0.0
      %3844 = vmatpush1.msra.mxu0 0.0
      %3845 = vmatprep.subr.mxu0 0.0
      %3846 = vmatpush1.msra.mxu0 0.0
      %3847 = vmatprep.subr.mxu0 0.0
      %3848 = vmatpush1.msra.mxu0 0.0
      %3849 = vmatprep.subr.mxu0 0.0
      %3850 = vmatpush1.msra.mxu0 0.0
      %3851 = vmatprep.subr.mxu0 0.0
      %3852 = vmatpush1.msra.mxu0 0.0
      %3853 = vmatprep.mubr.f32.mxu0 0.0
      %v3854 = vand.u32 %v3606, 4294901760
      %v3855 = vsub.f32 %v3606, %v3854
      %3856 = vmatmul.mubr.f32.gmra.mrb[0].mxu0 %v3855
      %v3857 = vpop.f32.mrb[0].mxu0
      %v3858 = vadd.f32 %v3776, %v3857
      %v3859 = vpop.f32.mrb[0].mxu0
      %3860 = vmatprep.mubr.f32.mxu0 0.0
      %v3861 = vand.u32 %v3609, 4294901760
      %v3862 = vsub.f32 %v3609, %v3861
      %3863 = vmatmul.mubr.f32.gmra.mrb[0].mxu0 %v3862
      %v3864 = vpop.f32.mrb[0].mxu0
      %v3865 = vadd.f32 %v3782, %v3864
      %v3866 = vpop.f32.mrb[0].mxu0
      %3867 = vdwg.mxu0
      %3868 = vmatprep.subr.mxu0 0.0
      %v3869 = vand.u32 %v3603, 4294901760
      %3870 = vmatpush1.msra.mxu0 %v3869
      %3871 = vmatprep.subr.mxu0 0.0
      %v3872 = vand.u32 %v3604, 4294901760
      %3873 = vmatpush1.msra.mxu0 %v3872
      %3874 = vmatprep.subr.mxu0 0.0
      %3875 = vmatpush1.msra.mxu0 0.0
      %3876 = vmatprep.subr.mxu0 0.0
      %3877 = vmatpush1.msra.mxu0 0.0
      %3878 = vmatprep.subr.mxu0 0.0
      %3879 = vmatpush1.msra.mxu0 0.0
      %3880 = vmatprep.subr.mxu0 0.0
      %3881 = vmatpush1.msra.mxu0 0.0
      %3882 = vmatprep.subr.mxu0 0.0
      %3883 = vmatpush1.msra.mxu0 0.0
      %3884 = vmatprep.subr.mxu0 0.0
      %3885 = vmatpush1.msra.mxu0 0.0
      %3886 = vmatprep.subr.mxu0 0.0
      %3887 = vmatpush1.msra.mxu0 0.0
      %3888 = vmatprep.subr.mxu0 0.0
      %3889 = vmatpush1.msra.mxu0 0.0
      %3890 = vmatprep.subr.mxu0 0.0
      %3891 = vmatpush1.msra.mxu0 0.0
      %3892 = vmatprep.subr.mxu0 0.0
      %3893 = vmatpush1.msra.mxu0 0.0
      %3894 = vmatprep.subr.mxu0 0.0
      %3895 = vmatpush1.msra.mxu0 0.0
      %3896 = vmatprep.subr.mxu0 0.0
      %3897 = vmatpush1.msra.mxu0 0.0
      %3898 = vmatprep.subr.mxu0 0.0
      %3899 = vmatpush1.msra.mxu0 0.0
      %3900 = vmatprep.subr.mxu0 0.0
      %3901 = vmatpush1.msra.mxu0 0.0
      %3902 = vmatprep.subr.mxu0 0.0
      %3903 = vmatpush1.msra.mxu0 0.0
      %3904 = vmatprep.subr.mxu0 0.0
      %3905 = vmatpush1.msra.mxu0 0.0
      %3906 = vmatprep.subr.mxu0 0.0
      %3907 = vmatpush1.msra.mxu0 0.0
      %3908 = vmatprep.subr.mxu0 0.0
      %3909 = vmatpush1.msra.mxu0 0.0
      %3910 = vmatprep.subr.mxu0 0.0
      %3911 = vmatpush1.msra.mxu0 0.0
      %3912 = vmatprep.subr.mxu0 0.0
      %3913 = vmatpush1.msra.mxu0 0.0
      %3914 = vmatprep.subr.mxu0 0.0
      %3915 = vmatpush1.msra.mxu0 0.0
      %3916 = vmatprep.subr.mxu0 0.0
      %3917 = vmatpush1.msra.mxu0 0.0
      %3918 = vmatprep.subr.mxu0 0.0
      %3919 = vmatpush1.msra.mxu0 0.0
      %3920 = vmatprep.subr.mxu0 0.0
      %3921 = vmatpush1.msra.mxu0 0.0
      %3922 = vmatprep.subr.mxu0 0.0
      %3923 = vmatpush1.msra.mxu0 0.0
      %3924 = vmatprep.subr.mxu0 0.0
      %3925 = vmatpush1.msra.mxu0 0.0
      %3926 = vmatprep.subr.mxu0 0.0
      %3927 = vmatpush1.msra.mxu0 0.0
      %3928 = vmatprep.subr.mxu0 0.0
      %3929 = vmatpush1.msra.mxu0 0.0
      %3930 = vmatprep.subr.mxu0 0.0
      %3931 = vmatpush1.msra.mxu0 0.0
      %3932 = vmatprep.subr.mxu0 0.0
      %3933 = vmatpush1.msra.mxu0 0.0
      %3934 = vmatprep.mubr.f32.mxu0 0.0
      %v3935 = vand.u32 %v3606, 4294901760
      %v3936 = vsub.f32 %v3606, %v3935
      %v3937 = vand.u32 %v3936, 4294901760
      %3938 = vmatmul.mubr.f32.gmra.mrb[0].mxu0 %v3937
      %v3939 = vpop.f32.mrb[0].mxu0
      %v3940 = vadd.f32 %v3858, %v3939
      %v3941 = vpop.f32.mrb[0].mxu0
      %3942 = vmatprep.mubr.f32.mxu0 0.0
      %v3943 = vand.u32 %v3609, 4294901760
      %v3944 = vsub.f32 %v3609, %v3943
      %v3945 = vand.u32 %v3944, 4294901760
      %3946 = vmatmul.mubr.f32.gmra.mrb[0].mxu0 %v3945
      %v3947 = vpop.f32.mrb[0].mxu0
      %v3948 = vadd.f32 %v3865, %v3947
      %v3949 = vpop.f32.mrb[0].mxu0
      %3950 = vdwg.mxu0
      %3951 = vmatprep.subr.mxu0 0.0
      %v3952 = vand.u32 %v3603, 4294901760
      %v3953 = vsub.f32 %v3603, %v3952
      %v3954 = vand.u32 %v3953, 4294901760
      %3955 = vmatpush1.msra.mxu0 %v3954
      %3956 = vmatprep.subr.mxu0 0.0
      %v3957 = vand.u32 %v3604, 4294901760
      %v3958 = vsub.f32 %v3604, %v3957
      %v3959 = vand.u32 %v3958, 4294901760
      %3960 = vmatpush1.msra.mxu0 %v3959
      %3961 = vmatprep.subr.mxu0 0.0
      %3962 = vmatpush1.msra.mxu0 0.0
      %3963 = vmatprep.subr.mxu0 0.0
      %3964 = vmatpush1.msra.mxu0 0.0
      %3965 = vmatprep.subr.mxu0 0.0
      %3966 = vmatpush1.msra.mxu0 0.0
      %3967 = vmatprep.subr.mxu0 0.0
      %3968 = vmatpush1.msra.mxu0 0.0
      %3969 = vmatprep.subr.mxu0 0.0
      %3970 = vmatpush1.msra.mxu0 0.0
      %3971 = vmatprep.subr.mxu0 0.0
      %3972 = vmatpush1.msra.mxu0 0.0
      %3973 = vmatprep.subr.mxu0 0.0
      %3974 = vmatpush1.msra.mxu0 0.0
      %3975 = vmatprep.subr.mxu0 0.0
      %3976 = vmatpush1.msra.mxu0 0.0
      %3977 = vmatprep.subr.mxu0 0.0
      %3978 = vmatpush1.msra.mxu0 0.0
      %3979 = vmatprep.subr.mxu0 0.0
      %3980 = vmatpush1.msra.mxu0 0.0
      %3981 = vmatprep.subr.mxu0 0.0
      %3982 = vmatpush1.msra.mxu0 0.0
      %3983 = vmatprep.subr.mxu0 0.0
      %3984 = vmatpush1.msra.mxu0 0.0
      %3985 = vmatprep.subr.mxu0 0.0
      %3986 = vmatpush1.msra.mxu0 0.0
      %3987 = vmatprep.subr.mxu0 0.0
      %3988 = vmatpush1.msra.mxu0 0.0
      %3989 = vmatprep.subr.mxu0 0.0
      %3990 = vmatpush1.msra.mxu0 0.0
      %3991 = vmatprep.subr.mxu0 0.0
      %3992 = vmatpush1.msra.mxu0 0.0
      %3993 = vmatprep.subr.mxu0 0.0
      %3994 = vmatpush1.msra.mxu0 0.0
      %3995 = vmatprep.subr.mxu0 0.0
      %3996 = vmatpush1.msra.mxu0 0.0
      %3997 = vmatprep.subr.mxu0 0.0
      %3998 = vmatpush1.msra.mxu0 0.0
      %3999 = vmatprep.subr.mxu0 0.0
      %4000 = vmatpush1.msra.mxu0 0.0
      %4001 = vmatprep.subr.mxu0 0.0
      %4002 = vmatpush1.msra.mxu0 0.0
      %4003 = vmatprep.subr.mxu0 0.0
      %4004 = vmatpush1.msra.mxu0 0.0
      %4005 = vmatprep.subr.mxu0 0.0
      %4006 = vmatpush1.msra.mxu0 0.0
      %4007 = vmatprep.subr.mxu0 0.0
      %4008 = vmatpush1.msra.mxu0 0.0
      %4009 = vmatprep.subr.mxu0 0.0
      %4010 = vmatpush1.msra.mxu0 0.0
      %4011 = vmatprep.subr.mxu0 0.0
      %4012 = vmatpush1.msra.mxu0 0.0
      %4013 = vmatprep.subr.mxu0 0.0
      %4014 = vmatpush1.msra.mxu0 0.0
      %4015 = vmatprep.subr.mxu0 0.0
      %4016 = vmatpush1.msra.mxu0 0.0
      %4017 = vmatprep.subr.mxu0 0.0
      %4018 = vmatpush1.msra.mxu0 0.0
      %4019 = vmatprep.subr.mxu0 0.0
      %4020 = vmatpush1.msra.mxu0 0.0
      %4021 = vmatprep.mubr.f32.mxu0 0.0
      %v4022 = vand.u32 %v3606, 4294901760
      %4023 = vmatmul.mubr.f32.gmra.mrb[0].mxu0 %v4022
      %v4024 = vpop.f32.mrb[0].mxu0
      %v4025 = vadd.f32 %v3940, %v4024
      %v4026 = vpop.f32.mrb[0].mxu0
      %4027 = vmatprep.mubr.f32.mxu0 0.0
      %v4028 = vand.u32 %v3609, 4294901760
      %4029 = vmatmul.mubr.f32.gmra.mrb[0].mxu0 %v4028
      %v4030 = vpop.f32.mrb[0].mxu0
      %v4031 = vadd.f32 %v3948, %v4030
      %v4032 = vpop.f32.mrb[0].mxu0
      %4033 = vdwg.mxu0
      %4034 = vmatprep.subr.mxu0 0.0
      %v4035 = vand.u32 %v3603, 4294901760
      %4036 = vmatpush1.msra.mxu0 %v4035
      %4037 = vmatprep.subr.mxu0 0.0
      %v4038 = vand.u32 %v3604, 4294901760
      %4039 = vmatpush1.msra.mxu0 %v4038
      %4040 = vmatprep.subr.mxu0 0.0
      %4041 = vmatpush1.msra.mxu0 0.0
      %4042 = vmatprep.subr.mxu0 0.0
      %4043 = vmatpush1.msra.mxu0 0.0
      %4044 = vmatprep.subr.mxu0 0.0
      %4045 = vmatpush1.msra.mxu0 0.0
      %4046 = vmatprep.subr.mxu0 0.0
      %4047 = vmatpush1.msra.mxu0 0.0
      %4048 = vmatprep.subr.mxu0 0.0
      %4049 = vmatpush1.msra.mxu0 0.0
      %4050 = vmatprep.subr.mxu0 0.0
      %4051 = vmatpush1.msra.mxu0 0.0
      %4052 = vmatprep.subr.mxu0 0.0
      %4053 = vmatpush1.msra.mxu0 0.0
      %4054 = vmatprep.subr.mxu0 0.0
      %4055 = vmatpush1.msra.mxu0 0.0
      %4056 = vmatprep.subr.mxu0 0.0
      %4057 = vmatpush1.msra.mxu0 0.0
      %4058 = vmatprep.subr.mxu0 0.0
      %4059 = vmatpush1.msra.mxu0 0.0
      %4060 = vmatprep.subr.mxu0 0.0
      %4061 = vmatpush1.msra.mxu0 0.0
      %4062 = vmatprep.subr.mxu0 0.0
      %4063 = vmatpush1.msra.mxu0 0.0
      %4064 = vmatprep.subr.mxu0 0.0
      %4065 = vmatpush1.msra.mxu0 0.0
      %4066 = vmatprep.subr.mxu0 0.0
      %4067 = vmatpush1.msra.mxu0 0.0
      %4068 = vmatprep.subr.mxu0 0.0
      %4069 = vmatpush1.msra.mxu0 0.0
      %4070 = vmatprep.subr.mxu0 0.0
      %4071 = vmatpush1.msra.mxu0 0.0
      %4072 = vmatprep.subr.mxu0 0.0
      %4073 = vmatpush1.msra.mxu0 0.0
      %4074 = vmatprep.subr.mxu0 0.0
      %4075 = vmatpush1.msra.mxu0 0.0
      %4076 = vmatprep.subr.mxu0 0.0
      %4077 = vmatpush1.msra.mxu0 0.0
      %4078 = vmatprep.subr.mxu0 0.0
      %4079 = vmatpush1.msra.mxu0 0.0
      %4080 = vmatprep.subr.mxu0 0.0
      %4081 = vmatpush1.msra.mxu0 0.0
      %4082 = vmatprep.subr.mxu0 0.0
      %4083 = vmatpush1.msra.mxu0 0.0
      %4084 = vmatprep.subr.mxu0 0.0
      %4085 = vmatpush1.msra.mxu0 0.0
      %4086 = vmatprep.subr.mxu0 0.0
      %4087 = vmatpush1.msra.mxu0 0.0
      %4088 = vmatprep.subr.mxu0 0.0
      %4089 = vmatpush1.msra.mxu0 0.0
      %4090 = vmatprep.subr.mxu0 0.0
      %4091 = vmatpush1.msra.mxu0 0.0
      %4092 = vmatprep.subr.mxu0 0.0
      %4093 = vmatpush1.msra.mxu0 0.0
      %4094 = vmatprep.subr.mxu0 0.0
      %4095 = vmatpush1.msra.mxu0 0.0
      %4096 = vmatprep.subr.mxu0 0.0
      %4097 = vmatpush1.msra.mxu0 0.0
      %4098 = vmatprep.subr.mxu0 0.0
      %4099 = vmatpush1.msra.mxu0 0.0
      %4100 = vmatprep.mubr.f32.mxu0 0.0
      %v4101 = vand.u32 %v3606, 4294901760
      %4102 = vmatmul.mubr.f32.gmra.mrb[0].mxu0 %v4101
      %v4103 = vpop.f32.mrb[0].mxu0
      %v4104 = vadd.f32 %v4025, %v4103
      %v4105 = vpop.f32.mrb[0].mxu0
      %4106 = vmatprep.mubr.f32.mxu0 0.0
      %v4107 = vand.u32 %v3609, 4294901760
      %4108 = vmatmul.mubr.f32.gmra.mrb[0].mxu0 %v4107
      %v4109 = vpop.f32.mrb[0].mxu0
      %v4110 = vadd.f32 %v4031, %v4109
      %v4111 = vpop.f32.mrb[0].mxu0
      %4112 = vdwg.mxu0
      %v4113 = vadd.f32 %v3601, %v4104
      %v4114 = vadd.f32 %v3602, %v4110
      %v4115 = vld [vmem:[%s3 + $0x30] sm:$0xff]
      %v4116 = vld [vmem:[%s3 + $0x38] sm:$0xff]
      %v4118 = vsel %vm2574, %v2556, 0
      %v4121 = vsel %vm2574, %v2562, 0
      %4123 = vmatprep.subr.mxu0 0.0
      %v4124 = vand.u32 %v4115, 4294901760
      %4125 = vmatpush1.msra.mxu0 %v4124
      %4126 = vmatprep.subr.mxu0 0.0
      %v4127 = vand.u32 %v4116, 4294901760
      %4128 = vmatpush1.msra.mxu0 %v4127
      %4129 = vmatprep.subr.mxu0 0.0
      %4130 = vmatpush1.msra.mxu0 0.0
      %4131 = vmatprep.subr.mxu0 0.0
      %4132 = vmatpush1.msra.mxu0 0.0
      %4133 = vmatprep.subr.mxu0 0.0
      %4134 = vmatpush1.msra.mxu0 0.0
      %4135 = vmatprep.subr.mxu0 0.0
      %4136 = vmatpush1.msra.mxu0 0.0
      %4137 = vmatprep.subr.mxu0 0.0
      %4138 = vmatpush1.msra.mxu0 0.0
      %4139 = vmatprep.subr.mxu0 0.0
      %4140 = vmatpush1.msra.mxu0 0.0
      %4141 = vmatprep.subr.mxu0 0.0
      %4142 = vmatpush1.msra.mxu0 0.0
      %4143 = vmatprep.subr.mxu0 0.0
      %4144 = vmatpush1.msra.mxu0 0.0
      %4145 = vmatprep.subr.mxu0 0.0
      %4146 = vmatpush1.msra.mxu0 0.0
      %4147 = vmatprep.subr.mxu0 0.0
      %4148 = vmatpush1.msra.mxu0 0.0
      %4149 = vmatprep.subr.mxu0 0.0
      %4150 = vmatpush1.msra.mxu0 0.0
      %4151 = vmatprep.subr.mxu0 0.0
      %4152 = vmatpush1.msra.mxu0 0.0
      %4153 = vmatprep.subr.mxu0 0.0
      %4154 = vmatpush1.msra.mxu0 0.0
      %4155 = vmatprep.subr.mxu0 0.0
      %4156 = vmatpush1.msra.mxu0 0.0
      %4157 = vmatprep.subr.mxu0 0.0
      %4158 = vmatpush1.msra.mxu0 0.0
      %4159 = vmatprep.subr.mxu0 0.0
      %4160 = vmatpush1.msra.mxu0 0.0
      %4161 = vmatprep.subr.mxu0 0.0
      %4162 = vmatpush1.msra.mxu0 0.0
      %4163 = vmatprep.subr.mxu0 0.0
      %4164 = vmatpush1.msra.mxu0 0.0
      %4165 = vmatprep.subr.mxu0 0.0
      %4166 = vmatpush1.msra.mxu0 0.0
      %4167 = vmatprep.subr.mxu0 0.0
      %4168 = vmatpush1.msra.mxu0 0.0
      %4169 = vmatprep.subr.mxu0 0.0
      %4170 = vmatpush1.msra.mxu0 0.0
      %4171 = vmatprep.subr.mxu0 0.0
      %4172 = vmatpush1.msra.mxu0 0.0
      %4173 = vmatprep.subr.mxu0 0.0
      %4174 = vmatpush1.msra.mxu0 0.0
      %4175 = vmatprep.subr.mxu0 0.0
      %4176 = vmatpush1.msra.mxu0 0.0
      %4177 = vmatprep.subr.mxu0 0.0
      %4178 = vmatpush1.msra.mxu0 0.0
      %4179 = vmatprep.subr.mxu0 0.0
      %4180 = vmatpush1.msra.mxu0 0.0
      %4181 = vmatprep.subr.mxu0 0.0
      %4182 = vmatpush1.msra.mxu0 0.0
      %4183 = vmatprep.subr.mxu0 0.0
      %4184 = vmatpush1.msra.mxu0 0.0
      %4185 = vmatprep.subr.mxu0 0.0
      %4186 = vmatpush1.msra.mxu0 0.0
      %4187 = vmatprep.subr.mxu0 0.0
      %4188 = vmatpush1.msra.mxu0 0.0
      %4189 = vmatprep.mubr.f32.mxu0 0.0
      %v4190 = vand.u32 %v4118, 4294901760
      %v4191 = vsub.f32 %v4118, %v4190
      %v4192 = vand.u32 %v4191, 4294901760
      %v4193 = vsub.f32 %v4191, %v4192
      %v4194 = vand.u32 %v4193, 4294901760
      %4195 = vmatmul.mubr.f32.gmra.mrb[0].mxu0 %v4194
      %v4196 = vpop.f32.mrb[0].mxu0
      %v4197 = vadd.f32 0.0, %v4196
      %v4198 = vpop.f32.mrb[0].mxu0
      %4199 = vmatprep.mubr.f32.mxu0 0.0
      %v4200 = vand.u32 %v4121, 4294901760
      %v4201 = vsub.f32 %v4121, %v4200
      %v4202 = vand.u32 %v4201, 4294901760
      %v4203 = vsub.f32 %v4201, %v4202
      %v4204 = vand.u32 %v4203, 4294901760
      %4205 = vmatmul.mubr.f32.gmra.mrb[0].mxu0 %v4204
      %v4206 = vpop.f32.mrb[0].mxu0
      %v4207 = vadd.f32 0.0, %v4206
      %v4208 = vpop.f32.mrb[0].mxu0
      %4209 = vdwg.mxu0
      %4210 = vmatprep.subr.mxu0 0.0
      %v4211 = vand.u32 %v4115, 4294901760
      %v4212 = vsub.f32 %v4115, %v4211
      %v4213 = vand.u32 %v4212, 4294901760
      %v4214 = vsub.f32 %v4212, %v4213
      %v4215 = vand.u32 %v4214, 4294901760
      %4216 = vmatpush1.msra.mxu0 %v4215
      %4217 = vmatprep.subr.mxu0 0.0
      %v4218 = vand.u32 %v4116, 4294901760
      %v4219 = vsub.f32 %v4116, %v4218
      %v4220 = vand.u32 %v4219, 4294901760
      %v4221 = vsub.f32 %v4219, %v4220
      %v4222 = vand.u32 %v4221, 4294901760
      %4223 = vmatpush1.msra.mxu0 %v4222
      %4224 = vmatprep.subr.mxu0 0.0
      %4225 = vmatpush1.msra.mxu0 0.0
      %4226 = vmatprep.subr.mxu0 0.0
      %4227 = vmatpush1.msra.mxu0 0.0
      %4228 = vmatprep.subr.mxu0 0.0
      %4229 = vmatpush1.msra.mxu0 0.0
      %4230 = vmatprep.subr.mxu0 0.0
      %4231 = vmatpush1.msra.mxu0 0.0
      %4232 = vmatprep.subr.mxu0 0.0
      %4233 = vmatpush1.msra.mxu0 0.0
      %4234 = vmatprep.subr.mxu0 0.0
      %4235 = vmatpush1.msra.mxu0 0.0
      %4236 = vmatprep.subr.mxu0 0.0
      %4237 = vmatpush1.msra.mxu0 0.0
      %4238 = vmatprep.subr.mxu0 0.0
      %4239 = vmatpush1.msra.mxu0 0.0
      %4240 = vmatprep.subr.mxu0 0.0
      %4241 = vmatpush1.msra.mxu0 0.0
      %4242 = vmatprep.subr.mxu0 0.0
      %4243 = vmatpush1.msra.mxu0 0.0
      %4244 = vmatprep.subr.mxu0 0.0
      %4245 = vmatpush1.msra.mxu0 0.0
      %4246 = vmatprep.subr.mxu0 0.0
      %4247 = vmatpush1.msra.mxu0 0.0
      %4248 = vmatprep.subr.mxu0 0.0
      %4249 = vmatpush1.msra.mxu0 0.0
      %4250 = vmatprep.subr.mxu0 0.0
      %4251 = vmatpush1.msra.mxu0 0.0
      %4252 = vmatprep.subr.mxu0 0.0
      %4253 = vmatpush1.msra.mxu0 0.0
      %4254 = vmatprep.subr.mxu0 0.0
      %4255 = vmatpush1.msra.mxu0 0.0
      %4256 = vmatprep.subr.mxu0 0.0
      %4257 = vmatpush1.msra.mxu0 0.0
      %4258 = vmatprep.subr.mxu0 0.0
      %4259 = vmatpush1.msra.mxu0 0.0
      %4260 = vmatprep.subr.mxu0 0.0
      %4261 = vmatpush1.msra.mxu0 0.0
      %4262 = vmatprep.subr.mxu0 0.0
      %4263 = vmatpush1.msra.mxu0 0.0
      %4264 = vmatprep.subr.mxu0 0.0
      %4265 = vmatpush1.msra.mxu0 0.0
      %4266 = vmatprep.subr.mxu0 0.0
      %4267 = vmatpush1.msra.mxu0 0.0
      %4268 = vmatprep.subr.mxu0 0.0
      %4269 = vmatpush1.msra.mxu0 0.0
      %4270 = vmatprep.subr.mxu0 0.0
      %4271 = vmatpush1.msra.mxu0 0.0
      %4272 = vmatprep.subr.mxu0 0.0
      %4273 = vmatpush1.msra.mxu0 0.0
      %4274 = vmatprep.subr.mxu0 0.0
      %4275 = vmatpush1.msra.mxu0 0.0
      %4276 = vmatprep.subr.mxu0 0.0
      %4277 = vmatpush1.msra.mxu0 0.0
      %4278 = vmatprep.subr.mxu0 0.0
      %4279 = vmatpush1.msra.mxu0 0.0
      %4280 = vmatprep.subr.mxu0 0.0
      %4281 = vmatpush1.msra.mxu0 0.0
      %4282 = vmatprep.subr.mxu0 0.0
      %4283 = vmatpush1.msra.mxu0 0.0
      %4284 = vmatprep.mubr.f32.mxu0 0.0
      %v4285 = vand.u32 %v4118, 4294901760
      %4286 = vmatmul.mubr.f32.gmra.mrb[0].mxu0 %v4285
      %v4287 = vpop.f32.mrb[0].mxu0
      %v4288 = vadd.f32 %v4197, %v4287
      %v4289 = vpop.f32.mrb[0].mxu0
      %4290 = vmatprep.mubr.f32.mxu0 0.0
      %v4291 = vand.u32 %v4121, 4294901760
      %4292 = vmatmul.mubr.f32.gmra.mrb[0].mxu0 %v4291
      %v4293 = vpop.f32.mrb[0].mxu0
      %v4294 = vadd.f32 %v4207, %v4293
      %v4295 = vpop.f32.mrb[0].mxu0
      %4296 = vdwg.mxu0
      %4297 = vmatprep.subr.mxu0 0.0
      %v4298 = vand.u32 %v4115, 4294901760
      %v4299 = vsub.f32 %v4115, %v4298
      %4300 = vmatpush1.msra.mxu0 %v4299
      %4301 = vmatprep.subr.mxu0 0.0
      %v4302 = vand.u32 %v4116, 4294901760
      %v4303 = vsub.f32 %v4116, %v4302
      %4304 = vmatpush1.msra.mxu0 %v4303
      %4305 = vmatprep.subr.mxu0 0.0
      %4306 = vmatpush1.msra.mxu0 0.0
      %4307 = vmatprep.subr.mxu0 0.0
      %4308 = vmatpush1.msra.mxu0 0.0
      %4309 = vmatprep.subr.mxu0 0.0
      %4310 = vmatpush1.msra.mxu0 0.0
      %4311 = vmatprep.subr.mxu0 0.0
      %4312 = vmatpush1.msra.mxu0 0.0
      %4313 = vmatprep.subr.mxu0 0.0
      %4314 = vmatpush1.msra.mxu0 0.0
      %4315 = vmatprep.subr.mxu0 0.0
      %4316 = vmatpush1.msra.mxu0 0.0
      %4317 = vmatprep.subr.mxu0 0.0
      %4318 = vmatpush1.msra.mxu0 0.0
      %4319 = vmatprep.subr.mxu0 0.0
      %4320 = vmatpush1.msra.mxu0 0.0
      %4321 = vmatprep.subr.mxu0 0.0
      %4322 = vmatpush1.msra.mxu0 0.0
      %4323 = vmatprep.subr.mxu0 0.0
      %4324 = vmatpush1.msra.mxu0 0.0
      %4325 = vmatprep.subr.mxu0 0.0
      %4326 = vmatpush1.msra.mxu0 0.0
      %4327 = vmatprep.subr.mxu0 0.0
      %4328 = vmatpush1.msra.mxu0 0.0
      %4329 = vmatprep.subr.mxu0 0.0
      %4330 = vmatpush1.msra.mxu0 0.0
      %4331 = vmatprep.subr.mxu0 0.0
      %4332 = vmatpush1.msra.mxu0 0.0
      %4333 = vmatprep.subr.mxu0 0.0
      %4334 = vmatpush1.msra.mxu0 0.0
      %4335 = vmatprep.subr.mxu0 0.0
      %4336 = vmatpush1.msra.mxu0 0.0
      %4337 = vmatprep.subr.mxu0 0.0
      %4338 = vmatpush1.msra.mxu0 0.0
      %4339 = vmatprep.subr.mxu0 0.0
      %4340 = vmatpush1.msra.mxu0 0.0
      %4341 = vmatprep.subr.mxu0 0.0
      %4342 = vmatpush1.msra.mxu0 0.0
      %4343 = vmatprep.subr.mxu0 0.0
      %4344 = vmatpush1.msra.mxu0 0.0
      %4345 = vmatprep.subr.mxu0 0.0
      %4346 = vmatpush1.msra.mxu0 0.0
      %4347 = vmatprep.subr.mxu0 0.0
      %4348 = vmatpush1.msra.mxu0 0.0
      %4349 = vmatprep.subr.mxu0 0.0
      %4350 = vmatpush1.msra.mxu0 0.0
      %4351 = vmatprep.subr.mxu0 0.0
      %4352 = vmatpush1.msra.mxu0 0.0
      %4353 = vmatprep.subr.mxu0 0.0
      %4354 = vmatpush1.msra.mxu0 0.0
      %4355 = vmatprep.subr.mxu0 0.0
      %4356 = vmatpush1.msra.mxu0 0.0
      %4357 = vmatprep.subr.mxu0 0.0
      %4358 = vmatpush1.msra.mxu0 0.0
      %4359 = vmatprep.subr.mxu0 0.0
      %4360 = vmatpush1.msra.mxu0 0.0
      %4361 = vmatprep.subr.mxu0 0.0
      %4362 = vmatpush1.msra.mxu0 0.0
      %4363 = vmatprep.subr.mxu0 0.0
      %4364 = vmatpush1.msra.mxu0 0.0
      %4365 = vmatprep.mubr.f32.mxu0 0.0
      %v4366 = vand.u32 %v4118, 4294901760
      %v4367 = vsub.f32 %v4118, %v4366
      %4368 = vmatmul.mubr.f32.gmra.mrb[0].mxu0 %v4367
      %v4369 = vpop.f32.mrb[0].mxu0
      %v4370 = vadd.f32 %v4288, %v4369
      %v4371 = vpop.f32.mrb[0].mxu0
      %4372 = vmatprep.mubr.f32.mxu0 0.0
      %v4373 = vand.u32 %v4121, 4294901760
      %v4374 = vsub.f32 %v4121, %v4373
      %4375 = vmatmul.mubr.f32.gmra.mrb[0].mxu0 %v4374
      %v4376 = vpop.f32.mrb[0].mxu0
      %v4377 = vadd.f32 %v4294, %v4376
      %v4378 = vpop.f32.mrb[0].mxu0
      %4379 = vdwg.mxu0
      %4380 = vmatprep.subr.mxu0 0.0
      %v4381 = vand.u32 %v4115, 4294901760
      %4382 = vmatpush1.msra.mxu0 %v4381
      %4383 = vmatprep.subr.mxu0 0.0
      %v4384 = vand.u32 %v4116, 4294901760
      %4385 = vmatpush1.msra.mxu0 %v4384
      %4386 = vmatprep.subr.mxu0 0.0
      %4387 = vmatpush1.msra.mxu0 0.0
      %4388 = vmatprep.subr.mxu0 0.0
      %4389 = vmatpush1.msra.mxu0 0.0
      %4390 = vmatprep.subr.mxu0 0.0
      %4391 = vmatpush1.msra.mxu0 0.0
      %4392 = vmatprep.subr.mxu0 0.0
      %4393 = vmatpush1.msra.mxu0 0.0
      %4394 = vmatprep.subr.mxu0 0.0
      %4395 = vmatpush1.msra.mxu0 0.0
      %4396 = vmatprep.subr.mxu0 0.0
      %4397 = vmatpush1.msra.mxu0 0.0
      %4398 = vmatprep.subr.mxu0 0.0
      %4399 = vmatpush1.msra.mxu0 0.0
      %4400 = vmatprep.subr.mxu0 0.0
      %4401 = vmatpush1.msra.mxu0 0.0
      %4402 = vmatprep.subr.mxu0 0.0
      %4403 = vmatpush1.msra.mxu0 0.0
      %4404 = vmatprep.subr.mxu0 0.0
      %4405 = vmatpush1.msra.mxu0 0.0
      %4406 = vmatprep.subr.mxu0 0.0
      %4407 = vmatpush1.msra.mxu0 0.0
      %4408 = vmatprep.subr.mxu0 0.0
      %4409 = vmatpush1.msra.mxu0 0.0
      %4410 = vmatprep.subr.mxu0 0.0
      %4411 = vmatpush1.msra.mxu0 0.0
      %4412 = vmatprep.subr.mxu0 0.0
      %4413 = vmatpush1.msra.mxu0 0.0
      %4414 = vmatprep.subr.mxu0 0.0
      %4415 = vmatpush1.msra.mxu0 0.0
      %4416 = vmatprep.subr.mxu0 0.0
      %4417 = vmatpush1.msra.mxu0 0.0
      %4418 = vmatprep.subr.mxu0 0.0
      %4419 = vmatpush1.msra.mxu0 0.0
      %4420 = vmatprep.subr.mxu0 0.0
      %4421 = vmatpush1.msra.mxu0 0.0
      %4422 = vmatprep.subr.mxu0 0.0
      %4423 = vmatpush1.msra.mxu0 0.0
      %4424 = vmatprep.subr.mxu0 0.0
      %4425 = vmatpush1.msra.mxu0 0.0
      %4426 = vmatprep.subr.mxu0 0.0
      %4427 = vmatpush1.msra.mxu0 0.0
      %4428 = vmatprep.subr.mxu0 0.0
      %4429 = vmatpush1.msra.mxu0 0.0
      %4430 = vmatprep.subr.mxu0 0.0
      %4431 = vmatpush1.msra.mxu0 0.0
      %4432 = vmatprep.subr.mxu0 0.0
      %4433 = vmatpush1.msra.mxu0 0.0
      %4434 = vmatprep.subr.mxu0 0.0
      %4435 = vmatpush1.msra.mxu0 0.0
      %4436 = vmatprep.subr.mxu0 0.0
      %4437 = vmatpush1.msra.mxu0 0.0
      %4438 = vmatprep.subr.mxu0 0.0
      %4439 = vmatpush1.msra.mxu0 0.0
      %4440 = vmatprep.subr.mxu0 0.0
      %4441 = vmatpush1.msra.mxu0 0.0
      %4442 = vmatprep.subr.mxu0 0.0
      %4443 = vmatpush1.msra.mxu0 0.0
      %4444 = vmatprep.subr.mxu0 0.0
      %4445 = vmatpush1.msra.mxu0 0.0
      %4446 = vmatprep.mubr.f32.mxu0 0.0
      %v4447 = vand.u32 %v4118, 4294901760
      %v4448 = vsub.f32 %v4118, %v4447
      %v4449 = vand.u32 %v4448, 4294901760
      %4450 = vmatmul.mubr.f32.gmra.mrb[0].mxu0 %v4449
      %v4451 = vpop.f32.mrb[0].mxu0
      %v4452 = vadd.f32 %v4370, %v4451
      %v4453 = vpop.f32.mrb[0].mxu0
      %4454 = vmatprep.mubr.f32.mxu0 0.0
      %v4455 = vand.u32 %v4121, 4294901760
      %v4456 = vsub.f32 %v4121, %v4455
      %v4457 = vand.u32 %v4456, 4294901760
      %4458 = vmatmul.mubr.f32.gmra.mrb[0].mxu0 %v4457
      %v4459 = vpop.f32.mrb[0].mxu0
      %v4460 = vadd.f32 %v4377, %v4459
      %v4461 = vpop.f32.mrb[0].mxu0
      %4462 = vdwg.mxu0
      %4463 = vmatprep.subr.mxu0 0.0
      %v4464 = vand.u32 %v4115, 4294901760
      %v4465 = vsub.f32 %v4115, %v4464
      %v4466 = vand.u32 %v4465, 4294901760
      %4467 = vmatpush1.msra.mxu0 %v4466
      %4468 = vmatprep.subr.mxu0 0.0
      %v4469 = vand.u32 %v4116, 4294901760
      %v4470 = vsub.f32 %v4116, %v4469
      %v4471 = vand.u32 %v4470, 4294901760
      %4472 = vmatpush1.msra.mxu0 %v4471
      %4473 = vmatprep.subr.mxu0 0.0
      %4474 = vmatpush1.msra.mxu0 0.0
      %4475 = vmatprep.subr.mxu0 0.0
      %4476 = vmatpush1.msra.mxu0 0.0
      %4477 = vmatprep.subr.mxu0 0.0
      %4478 = vmatpush1.msra.mxu0 0.0
      %4479 = vmatprep.subr.mxu0 0.0
      %4480 = vmatpush1.msra.mxu0 0.0
      %4481 = vmatprep.subr.mxu0 0.0
      %4482 = vmatpush1.msra.mxu0 0.0
      %4483 = vmatprep.subr.mxu0 0.0
      %4484 = vmatpush1.msra.mxu0 0.0
      %4485 = vmatprep.subr.mxu0 0.0
      %4486 = vmatpush1.msra.mxu0 0.0
      %4487 = vmatprep.subr.mxu0 0.0
      %4488 = vmatpush1.msra.mxu0 0.0
      %4489 = vmatprep.subr.mxu0 0.0
      %4490 = vmatpush1.msra.mxu0 0.0
      %4491 = vmatprep.subr.mxu0 0.0
      %4492 = vmatpush1.msra.mxu0 0.0
      %4493 = vmatprep.subr.mxu0 0.0
      %4494 = vmatpush1.msra.mxu0 0.0
      %4495 = vmatprep.subr.mxu0 0.0
      %4496 = vmatpush1.msra.mxu0 0.0
      %4497 = vmatprep.subr.mxu0 0.0
      %4498 = vmatpush1.msra.mxu0 0.0
      %4499 = vmatprep.subr.mxu0 0.0
      %4500 = vmatpush1.msra.mxu0 0.0
      %4501 = vmatprep.subr.mxu0 0.0
      %4502 = vmatpush1.msra.mxu0 0.0
      %4503 = vmatprep.subr.mxu0 0.0
      %4504 = vmatpush1.msra.mxu0 0.0
      %4505 = vmatprep.subr.mxu0 0.0
      %4506 = vmatpush1.msra.mxu0 0.0
      %4507 = vmatprep.subr.mxu0 0.0
      %4508 = vmatpush1.msra.mxu0 0.0
      %4509 = vmatprep.subr.mxu0 0.0
      %4510 = vmatpush1.msra.mxu0 0.0
      %4511 = vmatprep.subr.mxu0 0.0
      %4512 = vmatpush1.msra.mxu0 0.0
      %4513 = vmatprep.subr.mxu0 0.0
      %4514 = vmatpush1.msra.mxu0 0.0
      %4515 = vmatprep.subr.mxu0 0.0
      %4516 = vmatpush1.msra.mxu0 0.0
      %4517 = vmatprep.subr.mxu0 0.0
      %4518 = vmatpush1.msra.mxu0 0.0
      %4519 = vmatprep.subr.mxu0 0.0
      %4520 = vmatpush1.msra.mxu0 0.0
      %4521 = vmatprep.subr.mxu0 0.0
      %4522 = vmatpush1.msra.mxu0 0.0
      %4523 = vmatprep.subr.mxu0 0.0
      %4524 = vmatpush1.msra.mxu0 0.0
      %4525 = vmatprep.subr.mxu0 0.0
      %4526 = vmatpush1.msra.mxu0 0.0
      %4527 = vmatprep.subr.mxu0 0.0
      %4528 = vmatpush1.msra.mxu0 0.0
      %4529 = vmatprep.subr.mxu0 0.0
      %4530 = vmatpush1.msra.mxu0 0.0
      %4531 = vmatprep.subr.mxu0 0.0
      %4532 = vmatpush1.msra.mxu0 0.0
      %4533 = vmatprep.mubr.f32.mxu0 0.0
      %v4534 = vand.u32 %v4118, 4294901760
      %4535 = vmatmul.mubr.f32.gmra.mrb[0].mxu0 %v4534
      %v4536 = vpop.f32.mrb[0].mxu0
      %v4537 = vadd.f32 %v4452, %v4536
      %v4538 = vpop.f32.mrb[0].mxu0
      %4539 = vmatprep.mubr.f32.mxu0 0.0
      %v4540 = vand.u32 %v4121, 4294901760
      %4541 = vmatmul.mubr.f32.gmra.mrb[0].mxu0 %v4540
      %v4542 = vpop.f32.mrb[0].mxu0
      %v4543 = vadd.f32 %v4460, %v4542
      %v4544 = vpop.f32.mrb[0].mxu0
      %4545 = vdwg.mxu0
      %4546 = vmatprep.subr.mxu0 0.0
      %v4547 = vand.u32 %v4115, 4294901760
      %4548 = vmatpush1.msra.mxu0 %v4547
      %4549 = vmatprep.subr.mxu0 0.0
      %v4550 = vand.u32 %v4116, 4294901760
      %4551 = vmatpush1.msra.mxu0 %v4550
      %4552 = vmatprep.subr.mxu0 0.0
      %4553 = vmatpush1.msra.mxu0 0.0
      %4554 = vmatprep.subr.mxu0 0.0
      %4555 = vmatpush1.msra.mxu0 0.0
      %4556 = vmatprep.subr.mxu0 0.0
      %4557 = vmatpush1.msra.mxu0 0.0
      %4558 = vmatprep.subr.mxu0 0.0
      %4559 = vmatpush1.msra.mxu0 0.0
      %4560 = vmatprep.subr.mxu0 0.0
      %4561 = vmatpush1.msra.mxu0 0.0
      %4562 = vmatprep.subr.mxu0 0.0
      %4563 = vmatpush1.msra.mxu0 0.0
      %4564 = vmatprep.subr.mxu0 0.0
      %4565 = vmatpush1.msra.mxu0 0.0
      %4566 = vmatprep.subr.mxu0 0.0
      %4567 = vmatpush1.msra.mxu0 0.0
      %4568 = vmatprep.subr.mxu0 0.0
      %4569 = vmatpush1.msra.mxu0 0.0
      %4570 = vmatprep.subr.mxu0 0.0
      %4571 = vmatpush1.msra.mxu0 0.0
      %4572 = vmatprep.subr.mxu0 0.0
      %4573 = vmatpush1.msra.mxu0 0.0
      %4574 = vmatprep.subr.mxu0 0.0
      %4575 = vmatpush1.msra.mxu0 0.0
      %4576 = vmatprep.subr.mxu0 0.0
      %4577 = vmatpush1.msra.mxu0 0.0
      %4578 = vmatprep.subr.mxu0 0.0
      %4579 = vmatpush1.msra.mxu0 0.0
      %4580 = vmatprep.subr.mxu0 0.0
      %4581 = vmatpush1.msra.mxu0 0.0
      %4582 = vmatprep.subr.mxu0 0.0
      %4583 = vmatpush1.msra.mxu0 0.0
      %4584 = vmatprep.subr.mxu0 0.0
      %4585 = vmatpush1.msra.mxu0 0.0
      %4586 = vmatprep.subr.mxu0 0.0
      %4587 = vmatpush1.msra.mxu0 0.0
      %4588 = vmatprep.subr.mxu0 0.0
      %4589 = vmatpush1.msra.mxu0 0.0
      %4590 = vmatprep.subr.mxu0 0.0
      %4591 = vmatpush1.msra.mxu0 0.0
      %4592 = vmatprep.subr.mxu0 0.0
      %4593 = vmatpush1.msra.mxu0 0.0
      %4594 = vmatprep.subr.mxu0 0.0
      %4595 = vmatpush1.msra.mxu0 0.0
      %4596 = vmatprep.subr.mxu0 0.0
      %4597 = vmatpush1.msra.mxu0 0.0
      %4598 = vmatprep.subr.mxu0 0.0
      %4599 = vmatpush1.msra.mxu0 0.0
      %4600 = vmatprep.subr.mxu0 0.0
      %4601 = vmatpush1.msra.mxu0 0.0
      %4602 = vmatprep.subr.mxu0 0.0
      %4603 = vmatpush1.msra.mxu0 0.0
      %4604 = vmatprep.subr.mxu0 0.0
      %4605 = vmatpush1.msra.mxu0 0.0
      %4606 = vmatprep.subr.mxu0 0.0
      %4607 = vmatpush1.msra.mxu0 0.0
      %4608 = vmatprep.subr.mxu0 0.0
      %4609 = vmatpush1.msra.mxu0 0.0
      %4610 = vmatprep.subr.mxu0 0.0
      %4611 = vmatpush1.msra.mxu0 0.0
      %4612 = vmatprep.mubr.f32.mxu0 0.0
      %v4613 = vand.u32 %v4118, 4294901760
      %4614 = vmatmul.mubr.f32.gmra.mrb[0].mxu0 %v4613
      %v4615 = vpop.f32.mrb[0].mxu0
      %v4616 = vadd.f32 %v4537, %v4615
      %v4617 = vpop.f32.mrb[0].mxu0
      %4618 = vmatprep.mubr.f32.mxu0 0.0
      %v4619 = vand.u32 %v4121, 4294901760
      %4620 = vmatmul.mubr.f32.gmra.mrb[0].mxu0 %v4619
      %v4621 = vpop.f32.mrb[0].mxu0
      %v4622 = vadd.f32 %v4543, %v4621
      %v4623 = vpop.f32.mrb[0].mxu0
      %4624 = vdwg.mxu0
      %v4625 = vadd.f32 %v4113, %v4616
      %v4626 = vadd.f32 %v4114, %v4622
      %v4627 = vmax.f32 %v4625, 0.0
      %v4628 = vmax.f32 %v4626, 0.0
      %v4629 = vld [vmem:[%s5] sm:$0xff]
      %v4630 = vld [vmem:[%s5 + $0x8] sm:$0xff]
      %v4631 = vld [vmem:[%s5 + $0x10] sm:$0xff]
      %v4632 = vld [vmem:[%s5 + $0x18] sm:$0xff]
      %v4633 = vld [vmem:[%s6] sm:$0x1]
      %v4635 = vlaneseq
      %v4636 = vshrl.u32 %v4635, 7
      %v4637 = vsub.s32 0, %v4636
      %v4638 = vrot.slane %v4633, %v4637
      %v4641 = vsel %vm392, %v4627, 0
      %v4644 = vsel %vm392, %v4628, 0
      %4646 = vmatprep.subr.mxu0 0.0
      %v4647 = vand.u32 %v4629, 4294901760
      %4648 = vmatpush1.msra.mxu0 %v4647
      %4649 = vmatprep.subr.mxu0 0.0
      %v4650 = vand.u32 %v4630, 4294901760
      %4651 = vmatpush1.msra.mxu0 %v4650
      %4652 = vmatprep.subr.mxu0 0.0
      %v4653 = vand.u32 %v4631, 4294901760
      %4654 = vmatpush1.msra.mxu0 %v4653
      %4655 = vmatprep.subr.mxu0 0.0
      %v4656 = vand.u32 %v4632, 4294901760
      %4657 = vmatpush1.msra.mxu0 %v4656
      %4658 = vmatprep.subr.mxu0 0.0
      %4659 = vmatpush1.msra.mxu0 0.0
      %4660 = vmatprep.subr.mxu0 0.0
      %4661 = vmatpush1.msra.mxu0 0.0
      %4662 = vmatprep.subr.mxu0 0.0
      %4663 = vmatpush1.msra.mxu0 0.0
      %4664 = vmatprep.subr.mxu0 0.0
      %4665 = vmatpush1.msra.mxu0 0.0
      %4666 = vmatprep.subr.mxu0 0.0
      %4667 = vmatpush1.msra.mxu0 0.0
      %4668 = vmatprep.subr.mxu0 0.0
      %4669 = vmatpush1.msra.mxu0 0.0
      %4670 = vmatprep.subr.mxu0 0.0
      %4671 = vmatpush1.msra.mxu0 0.0
      %4672 = vmatprep.subr.mxu0 0.0
      %4673 = vmatpush1.msra.mxu0 0.0
      %4674 = vmatprep.subr.mxu0 0.0
      %4675 = vmatpush1.msra.mxu0 0.0
      %4676 = vmatprep.subr.mxu0 0.0
      %4677 = vmatpush1.msra.mxu0 0.0
      %4678 = vmatprep.subr.mxu0 0.0
      %4679 = vmatpush1.msra.mxu0 0.0
      %4680 = vmatprep.subr.mxu0 0.0
      %4681 = vmatpush1.msra.mxu0 0.0
      %4682 = vmatprep.subr.mxu0 0.0
      %4683 = vmatpush1.msra.mxu0 0.0
      %4684 = vmatprep.subr.mxu0 0.0
      %4685 = vmatpush1.msra.mxu0 0.0
      %4686 = vmatprep.subr.mxu0 0.0
      %4687 = vmatpush1.msra.mxu0 0.0
      %4688 = vmatprep.subr.mxu0 0.0
      %4689 = vmatpush1.msra.mxu0 0.0
      %4690 = vmatprep.subr.mxu0 0.0
      %4691 = vmatpush1.msra.mxu0 0.0
      %4692 = vmatprep.subr.mxu0 0.0
      %4693 = vmatpush1.msra.mxu0 0.0
      %4694 = vmatprep.subr.mxu0 0.0
      %4695 = vmatpush1.msra.mxu0 0.0
      %4696 = vmatprep.subr.mxu0 0.0
      %4697 = vmatpush1.msra.mxu0 0.0
      %4698 = vmatprep.subr.mxu0 0.0
      %4699 = vmatpush1.msra.mxu0 0.0
      %4700 = vmatprep.subr.mxu0 0.0
      %4701 = vmatpush1.msra.mxu0 0.0
      %4702 = vmatprep.subr.mxu0 0.0
      %4703 = vmatpush1.msra.mxu0 0.0
      %4704 = vmatprep.subr.mxu0 0.0
      %4705 = vmatpush1.msra.mxu0 0.0
      %4706 = vmatprep.subr.mxu0 0.0
      %4707 = vmatpush1.msra.mxu0 0.0
      %4708 = vmatprep.subr.mxu0 0.0
      %4709 = vmatpush1.msra.mxu0 0.0
      %4710 = vmatprep.subr.mxu0 0.0
      %4711 = vmatpush1.msra.mxu0 0.0
      %4712 = vmatprep.subr.mxu0 0.0
      %4713 = vmatpush1.msra.mxu0 0.0
      %4714 = vmatprep.mubr.f32.mxu0 0.0
      %v4715 = vand.u32 %v4641, 4294901760
      %v4716 = vsub.f32 %v4641, %v4715
      %v4717 = vand.u32 %v4716, 4294901760
      %v4718 = vsub.f32 %v4716, %v4717
      %v4719 = vand.u32 %v4718, 4294901760
      %4720 = vmatmul.mubr.f32.gmra.mrb[0].mxu0 %v4719
      %v4721 = vpop.f32.mrb[0].mxu0
      %v4722 = vadd.f32 %v4638, %v4721
      %v4723 = vpop.f32.mrb[0].mxu0
      %4724 = vmatprep.mubr.f32.mxu0 0.0
      %v4725 = vand.u32 %v4644, 4294901760
      %v4726 = vsub.f32 %v4644, %v4725
      %v4727 = vand.u32 %v4726, 4294901760
      %v4728 = vsub.f32 %v4726, %v4727
      %v4729 = vand.u32 %v4728, 4294901760
      %4730 = vmatmul.mubr.f32.gmra.mrb[0].mxu0 %v4729
      %v4731 = vpop.f32.mrb[0].mxu0
      %v4732 = vadd.f32 %v4638, %v4731
      %v4733 = vpop.f32.mrb[0].mxu0
      %4734 = vdwg.mxu0
      %4735 = vmatprep.subr.mxu0 0.0
      %v4736 = vand.u32 %v4629, 4294901760
      %v4737 = vsub.f32 %v4629, %v4736
      %v4738 = vand.u32 %v4737, 4294901760
      %v4739 = vsub.f32 %v4737, %v4738
      %v4740 = vand.u32 %v4739, 4294901760
      %4741 = vmatpush1.msra.mxu0 %v4740
      %4742 = vmatprep.subr.mxu0 0.0
      %v4743 = vand.u32 %v4630, 4294901760
      %v4744 = vsub.f32 %v4630, %v4743
      %v4745 = vand.u32 %v4744, 4294901760
      %v4746 = vsub.f32 %v4744, %v4745
      %v4747 = vand.u32 %v4746, 4294901760
      %4748 = vmatpush1.msra.mxu0 %v4747
      %4749 = vmatprep.subr.mxu0 0.0
      %v4750 = vand.u32 %v4631, 4294901760
      %v4751 = vsub.f32 %v4631, %v4750
      %v4752 = vand.u32 %v4751, 4294901760
      %v4753 = vsub.f32 %v4751, %v4752
      %v4754 = vand.u32 %v4753, 4294901760
      %4755 = vmatpush1.msra.mxu0 %v4754
      %4756 = vmatprep.subr.mxu0 0.0
      %v4757 = vand.u32 %v4632, 4294901760
      %v4758 = vsub.f32 %v4632, %v4757
      %v4759 = vand.u32 %v4758, 4294901760
      %v4760 = vsub.f32 %v4758, %v4759
      %v4761 = vand.u32 %v4760, 4294901760
      %4762 = vmatpush1.msra.mxu0 %v4761
      %4763 = vmatprep.subr.mxu0 0.0
      %4764 = vmatpush1.msra.mxu0 0.0
      %4765 = vmatprep.subr.mxu0 0.0
      %4766 = vmatpush1.msra.mxu0 0.0
      %4767 = vmatprep.subr.mxu0 0.0
      %4768 = vmatpush1.msra.mxu0 0.0
      %4769 = vmatprep.subr.mxu0 0.0
      %4770 = vmatpush1.msra.mxu0 0.0
      %4771 = vmatprep.subr.mxu0 0.0
      %4772 = vmatpush1.msra.mxu0 0.0
      %4773 = vmatprep.subr.mxu0 0.0
      %4774 = vmatpush1.msra.mxu0 0.0
      %4775 = vmatprep.subr.mxu0 0.0
      %4776 = vmatpush1.msra.mxu0 0.0
      %4777 = vmatprep.subr.mxu0 0.0
      %4778 = vmatpush1.msra.mxu0 0.0
      %4779 = vmatprep.subr.mxu0 0.0
      %4780 = vmatpush1.msra.mxu0 0.0
      %4781 = vmatprep.subr.mxu0 0.0
      %4782 = vmatpush1.msra.mxu0 0.0
      %4783 = vmatprep.subr.mxu0 0.0
      %4784 = vmatpush1.msra.mxu0 0.0
      %4785 = vmatprep.subr.mxu0 0.0
      %4786 = vmatpush1.msra.mxu0 0.0
      %4787 = vmatprep.subr.mxu0 0.0
      %4788 = vmatpush1.msra.mxu0 0.0
      %4789 = vmatprep.subr.mxu0 0.0
      %4790 = vmatpush1.msra.mxu0 0.0
      %4791 = vmatprep.subr.mxu0 0.0
      %4792 = vmatpush1.msra.mxu0 0.0
      %4793 = vmatprep.subr.mxu0 0.0
      %4794 = vmatpush1.msra.mxu0 0.0
      %4795 = vmatprep.subr.mxu0 0.0
      %4796 = vmatpush1.msra.mxu0 0.0
      %4797 = vmatprep.subr.mxu0 0.0
      %4798 = vmatpush1.msra.mxu0 0.0
      %4799 = vmatprep.subr.mxu0 0.0
      %4800 = vmatpush1.msra.mxu0 0.0
      %4801 = vmatprep.subr.mxu0 0.0
      %4802 = vmatpush1.msra.mxu0 0.0
      %4803 = vmatprep.subr.mxu0 0.0
      %4804 = vmatpush1.msra.mxu0 0.0
      %4805 = vmatprep.subr.mxu0 0.0
      %4806 = vmatpush1.msra.mxu0 0.0
      %4807 = vmatprep.subr.mxu0 0.0
      %4808 = vmatpush1.msra.mxu0 0.0
      %4809 = vmatprep.subr.mxu0 0.0
      %4810 = vmatpush1.msra.mxu0 0.0
      %4811 = vmatprep.subr.mxu0 0.0
      %4812 = vmatpush1.msra.mxu0 0.0
      %4813 = vmatprep.subr.mxu0 0.0
      %4814 = vmatpush1.msra.mxu0 0.0
      %4815 = vmatprep.subr.mxu0 0.0
      %4816 = vmatpush1.msra.mxu0 0.0
      %4817 = vmatprep.subr.mxu0 0.0
      %4818 = vmatpush1.msra.mxu0 0.0
      %4819 = vmatprep.mubr.f32.mxu0 0.0
      %v4820 = vand.u32 %v4641, 4294901760
      %4821 = vmatmul.mubr.f32.gmra.mrb[0].mxu0 %v4820
      %v4822 = vpop.f32.mrb[0].mxu0
      %v4823 = vadd.f32 %v4722, %v4822
      %v4824 = vpop.f32.mrb[0].mxu0
      %4825 = vmatprep.mubr.f32.mxu0 0.0
      %v4826 = vand.u32 %v4644, 4294901760
      %4827 = vmatmul.mubr.f32.gmra.mrb[0].mxu0 %v4826
      %v4828 = vpop.f32.mrb[0].mxu0
      %v4829 = vadd.f32 %v4732, %v4828
      %v4830 = vpop.f32.mrb[0].mxu0
      %4831 = vdwg.mxu0
      %4832 = vmatprep.subr.mxu0 0.0
      %v4833 = vand.u32 %v4629, 4294901760
      %v4834 = vsub.f32 %v4629, %v4833
      %4835 = vmatpush1.msra.mxu0 %v4834
      %4836 = vmatprep.subr.mxu0 0.0
      %v4837 = vand.u32 %v4630, 4294901760
      %v4838 = vsub.f32 %v4630, %v4837
      %4839 = vmatpush1.msra.mxu0 %v4838
      %4840 = vmatprep.subr.mxu0 0.0
      %v4841 = vand.u32 %v4631, 4294901760
      %v4842 = vsub.f32 %v4631, %v4841
      %4843 = vmatpush1.msra.mxu0 %v4842
      %4844 = vmatprep.subr.mxu0 0.0
      %v4845 = vand.u32 %v4632, 4294901760
      %v4846 = vsub.f32 %v4632, %v4845
      %4847 = vmatpush1.msra.mxu0 %v4846
      %4848 = vmatprep.subr.mxu0 0.0
      %4849 = vmatpush1.msra.mxu0 0.0
      %4850 = vmatprep.subr.mxu0 0.0
      %4851 = vmatpush1.msra.mxu0 0.0
      %4852 = vmatprep.subr.mxu0 0.0
      %4853 = vmatpush1.msra.mxu0 0.0
      %4854 = vmatprep.subr.mxu0 0.0
      %4855 = vmatpush1.msra.mxu0 0.0
      %4856 = vmatprep.subr.mxu0 0.0
      %4857 = vmatpush1.msra.mxu0 0.0
      %4858 = vmatprep.subr.mxu0 0.0
      %4859 = vmatpush1.msra.mxu0 0.0
      %4860 = vmatprep.subr.mxu0 0.0
      %4861 = vmatpush1.msra.mxu0 0.0
      %4862 = vmatprep.subr.mxu0 0.0
      %4863 = vmatpush1.msra.mxu0 0.0
      %4864 = vmatprep.subr.mxu0 0.0
      %4865 = vmatpush1.msra.mxu0 0.0
      %4866 = vmatprep.subr.mxu0 0.0
      %4867 = vmatpush1.msra.mxu0 0.0
      %4868 = vmatprep.subr.mxu0 0.0
      %4869 = vmatpush1.msra.mxu0 0.0
      %4870 = vmatprep.subr.mxu0 0.0
      %4871 = vmatpush1.msra.mxu0 0.0
      %4872 = vmatprep.subr.mxu0 0.0
      %4873 = vmatpush1.msra.mxu0 0.0
      %4874 = vmatprep.subr.mxu0 0.0
      %4875 = vmatpush1.msra.mxu0 0.0
      %4876 = vmatprep.subr.mxu0 0.0
      %4877 = vmatpush1.msra.mxu0 0.0
      %4878 = vmatprep.subr.mxu0 0.0
      %4879 = vmatpush1.msra.mxu0 0.0
      %4880 = vmatprep.subr.mxu0 0.0
      %4881 = vmatpush1.msra.mxu0 0.0
      %4882 = vmatprep.subr.mxu0 0.0
      %4883 = vmatpush1.msra.mxu0 0.0
      %4884 = vmatprep.subr.mxu0 0.0
      %4885 = vmatpush1.msra.mxu0 0.0
      %4886 = vmatprep.subr.mxu0 0.0
      %4887 = vmatpush1.msra.mxu0 0.0
      %4888 = vmatprep.subr.mxu0 0.0
      %4889 = vmatpush1.msra.mxu0 0.0
      %4890 = vmatprep.subr.mxu0 0.0
      %4891 = vmatpush1.msra.mxu0 0.0
      %4892 = vmatprep.subr.mxu0 0.0
      %4893 = vmatpush1.msra.mxu0 0.0
      %4894 = vmatprep.subr.mxu0 0.0
      %4895 = vmatpush1.msra.mxu0 0.0
      %4896 = vmatprep.subr.mxu0 0.0
      %4897 = vmatpush1.msra.mxu0 0.0
      %4898 = vmatprep.subr.mxu0 0.0
      %4899 = vmatpush1.msra.mxu0 0.0
      %4900 = vmatprep.subr.mxu0 0.0
      %4901 = vmatpush1.msra.mxu0 0.0
      %4902 = vmatprep.subr.mxu0 0.0
      %4903 = vmatpush1.msra.mxu0 0.0
      %4904 = vmatprep.mubr.f32.mxu0 0.0
      %v4905 = vand.u32 %v4641, 4294901760
      %v4906 = vsub.f32 %v4641, %v4905
      %4907 = vmatmul.mubr.f32.gmra.mrb[0].mxu0 %v4906
      %v4908 = vpop.f32.mrb[0].mxu0
      %v4909 = vadd.f32 %v4823, %v4908
      %v4910 = vpop.f32.mrb[0].mxu0
      %4911 = vmatprep.mubr.f32.mxu0 0.0
      %v4912 = vand.u32 %v4644, 4294901760
      %v4913 = vsub.f32 %v4644, %v4912
      %4914 = vmatmul.mubr.f32.gmra.mrb[0].mxu0 %v4913
      %v4915 = vpop.f32.mrb[0].mxu0
      %v4916 = vadd.f32 %v4829, %v4915
      %v4917 = vpop.f32.mrb[0].mxu0
      %4918 = vdwg.mxu0
      %4919 = vmatprep.subr.mxu0 0.0
      %v4920 = vand.u32 %v4629, 4294901760
      %4921 = vmatpush1.msra.mxu0 %v4920
      %4922 = vmatprep.subr.mxu0 0.0
      %v4923 = vand.u32 %v4630, 4294901760
      %4924 = vmatpush1.msra.mxu0 %v4923
      %4925 = vmatprep.subr.mxu0 0.0
      %v4926 = vand.u32 %v4631, 4294901760
      %4927 = vmatpush1.msra.mxu0 %v4926
      %4928 = vmatprep.subr.mxu0 0.0
      %v4929 = vand.u32 %v4632, 4294901760
      %4930 = vmatpush1.msra.mxu0 %v4929
      %4931 = vmatprep.subr.mxu0 0.0
      %4932 = vmatpush1.msra.mxu0 0.0
      %4933 = vmatprep.subr.mxu0 0.0
      %4934 = vmatpush1.msra.mxu0 0.0
      %4935 = vmatprep.subr.mxu0 0.0
      %4936 = vmatpush1.msra.mxu0 0.0
      %4937 = vmatprep.subr.mxu0 0.0
      %4938 = vmatpush1.msra.mxu0 0.0
      %4939 = vmatprep.subr.mxu0 0.0
      %4940 = vmatpush1.msra.mxu0 0.0
      %4941 = vmatprep.subr.mxu0 0.0
      %4942 = vmatpush1.msra.mxu0 0.0
      %4943 = vmatprep.subr.mxu0 0.0
      %4944 = vmatpush1.msra.mxu0 0.0
      %4945 = vmatprep.subr.mxu0 0.0
      %4946 = vmatpush1.msra.mxu0 0.0
      %4947 = vmatprep.subr.mxu0 0.0
      %4948 = vmatpush1.msra.mxu0 0.0
      %4949 = vmatprep.subr.mxu0 0.0
      %4950 = vmatpush1.msra.mxu0 0.0
      %4951 = vmatprep.subr.mxu0 0.0
      %4952 = vmatpush1.msra.mxu0 0.0
      %4953 = vmatprep.subr.mxu0 0.0
      %4954 = vmatpush1.msra.mxu0 0.0
      %4955 = vmatprep.subr.mxu0 0.0
      %4956 = vmatpush1.msra.mxu0 0.0
      %4957 = vmatprep.subr.mxu0 0.0
      %4958 = vmatpush1.msra.mxu0 0.0
      %4959 = vmatprep.subr.mxu0 0.0
      %4960 = vmatpush1.msra.mxu0 0.0
      %4961 = vmatprep.subr.mxu0 0.0
      %4962 = vmatpush1.msra.mxu0 0.0
      %4963 = vmatprep.subr.mxu0 0.0
      %4964 = vmatpush1.msra.mxu0 0.0
      %4965 = vmatprep.subr.mxu0 0.0
      %4966 = vmatpush1.msra.mxu0 0.0
      %4967 = vmatprep.subr.mxu0 0.0
      %4968 = vmatpush1.msra.mxu0 0.0
      %4969 = vmatprep.subr.mxu0 0.0
      %4970 = vmatpush1.msra.mxu0 0.0
      %4971 = vmatprep.subr.mxu0 0.0
      %4972 = vmatpush1.msra.mxu0 0.0
      %4973 = vmatprep.subr.mxu0 0.0
      %4974 = vmatpush1.msra.mxu0 0.0
      %4975 = vmatprep.subr.mxu0 0.0
      %4976 = vmatpush1.msra.mxu0 0.0
      %4977 = vmatprep.subr.mxu0 0.0
      %4978 = vmatpush1.msra.mxu0 0.0
      %4979 = vmatprep.subr.mxu0 0.0
      %4980 = vmatpush1.msra.mxu0 0.0
      %4981 = vmatprep.subr.mxu0 0.0
      %4982 = vmatpush1.msra.mxu0 0.0
      %4983 = vmatprep.subr.mxu0 0.0
      %4984 = vmatpush1.msra.mxu0 0.0
      %4985 = vmatprep.subr.mxu0 0.0
      %4986 = vmatpush1.msra.mxu0 0.0
      %4987 = vmatprep.mubr.f32.mxu0 0.0
      %v4988 = vand.u32 %v4641, 4294901760
      %v4989 = vsub.f32 %v4641, %v4988
      %v4990 = vand.u32 %v4989, 4294901760
      %4991 = vmatmul.mubr.f32.gmra.mrb[0].mxu0 %v4990
      %v4992 = vpop.f32.mrb[0].mxu0
      %v4993 = vadd.f32 %v4909, %v4992
      %v4994 = vpop.f32.mrb[0].mxu0
      %4995 = vmatprep.mubr.f32.mxu0 0.0
      %v4996 = vand.u32 %v4644, 4294901760
      %v4997 = vsub.f32 %v4644, %v4996
      %v4998 = vand.u32 %v4997, 4294901760
      %4999 = vmatmul.mubr.f32.gmra.mrb[0].mxu0 %v4998
      %v5000 = vpop.f32.mrb[0].mxu0
      %v5001 = vadd.f32 %v4916, %v5000
      %v5002 = vpop.f32.mrb[0].mxu0
      %5003 = vdwg.mxu0
      %5004 = vmatprep.subr.mxu0 0.0
      %v5005 = vand.u32 %v4629, 4294901760
      %v5006 = vsub.f32 %v4629, %v5005
      %v5007 = vand.u32 %v5006, 4294901760
      %5008 = vmatpush1.msra.mxu0 %v5007
      %5009 = vmatprep.subr.mxu0 0.0
      %v5010 = vand.u32 %v4630, 4294901760
      %v5011 = vsub.f32 %v4630, %v5010
      %v5012 = vand.u32 %v5011, 4294901760
      %5013 = vmatpush1.msra.mxu0 %v5012
      %5014 = vmatprep.subr.mxu0 0.0
      %v5015 = vand.u32 %v4631, 4294901760
      %v5016 = vsub.f32 %v4631, %v5015
      %v5017 = vand.u32 %v5016, 4294901760
      %5018 = vmatpush1.msra.mxu0 %v5017
      %5019 = vmatprep.subr.mxu0 0.0
      %v5020 = vand.u32 %v4632, 4294901760
      %v5021 = vsub.f32 %v4632, %v5020
      %v5022 = vand.u32 %v5021, 4294901760
      %5023 = vmatpush1.msra.mxu0 %v5022
      %5024 = vmatprep.subr.mxu0 0.0
      %5025 = vmatpush1.msra.mxu0 0.0
      %5026 = vmatprep.subr.mxu0 0.0
      %5027 = vmatpush1.msra.mxu0 0.0
      %5028 = vmatprep.subr.mxu0 0.0
      %5029 = vmatpush1.msra.mxu0 0.0
      %5030 = vmatprep.subr.mxu0 0.0
      %5031 = vmatpush1.msra.mxu0 0.0
      %5032 = vmatprep.subr.mxu0 0.0
      %5033 = vmatpush1.msra.mxu0 0.0
      %5034 = vmatprep.subr.mxu0 0.0
      %5035 = vmatpush1.msra.mxu0 0.0
      %5036 = vmatprep.subr.mxu0 0.0
      %5037 = vmatpush1.msra.mxu0 0.0
      %5038 = vmatprep.subr.mxu0 0.0
      %5039 = vmatpush1.msra.mxu0 0.0
      %5040 = vmatprep.subr.mxu0 0.0
      %5041 = vmatpush1.msra.mxu0 0.0
      %5042 = vmatprep.subr.mxu0 0.0
      %5043 = vmatpush1.msra.mxu0 0.0
      %5044 = vmatprep.subr.mxu0 0.0
      %5045 = vmatpush1.msra.mxu0 0.0
      %5046 = vmatprep.subr.mxu0 0.0
      %5047 = vmatpush1.msra.mxu0 0.0
      %5048 = vmatprep.subr.mxu0 0.0
      %5049 = vmatpush1.msra.mxu0 0.0
      %5050 = vmatprep.subr.mxu0 0.0
      %5051 = vmatpush1.msra.mxu0 0.0
      %5052 = vmatprep.subr.mxu0 0.0
      %5053 = vmatpush1.msra.mxu0 0.0
      %5054 = vmatprep.subr.mxu0 0.0
      %5055 = vmatpush1.msra.mxu0 0.0
      %5056 = vmatprep.subr.mxu0 0.0
      %5057 = vmatpush1.msra.mxu0 0.0
      %5058 = vmatprep.subr.mxu0 0.0
      %5059 = vmatpush1.msra.mxu0 0.0
      %5060 = vmatprep.subr.mxu0 0.0
      %5061 = vmatpush1.msra.mxu0 0.0
      %5062 = vmatprep.subr.mxu0 0.0
      %5063 = vmatpush1.msra.mxu0 0.0
      %5064 = vmatprep.subr.mxu0 0.0
      %5065 = vmatpush1.msra.mxu0 0.0
      %5066 = vmatprep.subr.mxu0 0.0
      %5067 = vmatpush1.msra.mxu0 0.0
      %5068 = vmatprep.subr.mxu0 0.0
      %5069 = vmatpush1.msra.mxu0 0.0
      %5070 = vmatprep.subr.mxu0 0.0
      %5071 = vmatpush1.msra.mxu0 0.0
      %5072 = vmatprep.subr.mxu0 0.0
      %5073 = vmatpush1.msra.mxu0 0.0
      %5074 = vmatprep.subr.mxu0 0.0
      %5075 = vmatpush1.msra.mxu0 0.0
      %5076 = vmatprep.subr.mxu0 0.0
      %5077 = vmatpush1.msra.mxu0 0.0
      %5078 = vmatprep.subr.mxu0 0.0
      %5079 = vmatpush1.msra.mxu0 0.0
      %5080 = vmatprep.mubr.f32.mxu0 0.0
      %v5081 = vand.u32 %v4641, 4294901760
      %5082 = vmatmul.mubr.f32.gmra.mrb[0].mxu0 %v5081
      %v5083 = vpop.f32.mrb[0].mxu0
      %v5084 = vadd.f32 %v4993, %v5083
      %v5085 = vpop.f32.mrb[0].mxu0
      %5086 = vmatprep.mubr.f32.mxu0 0.0
      %v5087 = vand.u32 %v4644, 4294901760
      %5088 = vmatmul.mubr.f32.gmra.mrb[0].mxu0 %v5087
      %v5089 = vpop.f32.mrb[0].mxu0
      %v5090 = vadd.f32 %v5001, %v5089
      %v5091 = vpop.f32.mrb[0].mxu0
      %5092 = vdwg.mxu0
      %5093 = vmatprep.subr.mxu0 0.0
      %v5094 = vand.u32 %v4629, 4294901760
      %5095 = vmatpush1.msra.mxu0 %v5094
      %5096 = vmatprep.subr.mxu0 0.0
      %v5097 = vand.u32 %v4630, 4294901760
      %5098 = vmatpush1.msra.mxu0 %v5097
      %5099 = vmatprep.subr.mxu0 0.0
      %v5100 = vand.u32 %v4631, 4294901760
      %5101 = vmatpush1.msra.mxu0 %v5100
      %5102 = vmatprep.subr.mxu0 0.0
      %v5103 = vand.u32 %v4632, 4294901760
      %5104 = vmatpush1.msra.mxu0 %v5103
      %5105 = vmatprep.subr.mxu0 0.0
      %5106 = vmatpush1.msra.mxu0 0.0
      %5107 = vmatprep.subr.mxu0 0.0
      %5108 = vmatpush1.msra.mxu0 0.0
      %5109 = vmatprep.subr.mxu0 0.0
      %5110 = vmatpush1.msra.mxu0 0.0
      %5111 = vmatprep.subr.mxu0 0.0
      %5112 = vmatpush1.msra.mxu0 0.0
      %5113 = vmatprep.subr.mxu0 0.0
      %5114 = vmatpush1.msra.mxu0 0.0
      %5115 = vmatprep.subr.mxu0 0.0
      %5116 = vmatpush1.msra.mxu0 0.0
      %5117 = vmatprep.subr.mxu0 0.0
      %5118 = vmatpush1.msra.mxu0 0.0
      %5119 = vmatprep.subr.mxu0 0.0
      %5120 = vmatpush1.msra.mxu0 0.0
      %5121 = vmatprep.subr.mxu0 0.0
      %5122 = vmatpush1.msra.mxu0 0.0
      %5123 = vmatprep.subr.mxu0 0.0
      %5124 = vmatpush1.msra.mxu0 0.0
      %5125 = vmatprep.subr.mxu0 0.0
      %5126 = vmatpush1.msra.mxu0 0.0
      %5127 = vmatprep.subr.mxu0 0.0
      %5128 = vmatpush1.msra.mxu0 0.0
      %5129 = vmatprep.subr.mxu0 0.0
      %5130 = vmatpush1.msra.mxu0 0.0
      %5131 = vmatprep.subr.mxu0 0.0
      %5132 = vmatpush1.msra.mxu0 0.0
      %5133 = vmatprep.subr.mxu0 0.0
      %5134 = vmatpush1.msra.mxu0 0.0
      %5135 = vmatprep.subr.mxu0 0.0
      %5136 = vmatpush1.msra.mxu0 0.0
      %5137 = vmatprep.subr.mxu0 0.0
      %5138 = vmatpush1.msra.mxu0 0.0
      %5139 = vmatprep.subr.mxu0 0.0
      %5140 = vmatpush1.msra.mxu0 0.0
      %5141 = vmatprep.subr.mxu0 0.0
      %5142 = vmatpush1.msra.mxu0 0.0
      %5143 = vmatprep.subr.mxu0 0.0
      %5144 = vmatpush1.msra.mxu0 0.0
      %5145 = vmatprep.subr.mxu0 0.0
      %5146 = vmatpush1.msra.mxu0 0.0
      %5147 = vmatprep.subr.mxu0 0.0
      %5148 = vmatpush1.msra.mxu0 0.0
      %5149 = vmatprep.subr.mxu0 0.0
      %5150 = vmatpush1.msra.mxu0 0.0
      %5151 = vmatprep.subr.mxu0 0.0
      %5152 = vmatpush1.msra.mxu0 0.0
      %5153 = vmatprep.subr.mxu0 0.0
      %5154 = vmatpush1.msra.mxu0 0.0
      %5155 = vmatprep.subr.mxu0 0.0
      %5156 = vmatpush1.msra.mxu0 0.0
      %5157 = vmatprep.subr.mxu0 0.0
      %5158 = vmatpush1.msra.mxu0 0.0
      %5159 = vmatprep.subr.mxu0 0.0
      %5160 = vmatpush1.msra.mxu0 0.0
      %5161 = vmatprep.mubr.f32.mxu0 0.0
      %v5162 = vand.u32 %v4641, 4294901760
      %5163 = vmatmul.mubr.f32.gmra.mrb[0].mxu0 %v5162
      %v5164 = vpop.f32.mrb[0].mxu0
      %v5165 = vadd.f32 %v5084, %v5164
      %v5166 = vpop.f32.mrb[0].mxu0
      %5167 = vmatprep.mubr.f32.mxu0 0.0
      %v5168 = vand.u32 %v4644, 4294901760
      %5169 = vmatmul.mubr.f32.gmra.mrb[0].mxu0 %v5168
      %v5170 = vpop.f32.mrb[0].mxu0
      %v5171 = vadd.f32 %v5090, %v5170
      %v5172 = vpop.f32.mrb[0].mxu0
      %5173 = vdwg.mxu0
      %v5174 = vmax.f32 %v5165, 0.0
      %v5175 = vmax.f32 %v5171, 0.0
      %v5176 = vld [vmem:[%s7] sm:$0x1]
      %v5178 = vlaneseq
      %v5179 = vshrl.u32 %v5178, 7
      %v5180 = vsub.s32 0, %v5179
      %v5181 = vrot.slane %v5176, %v5180
      %v5183 = vmul.f32 %v2569, %v5181
      %v5184 = vmul.f32 %v2570, %v5181
      %v5185 = vld [vmem:[%s8] sm:$0x1]
      %v5187 = vlaneseq
      %v5188 = vshrl.u32 %v5187, 7
      %v5189 = vsub.s32 0, %v5188
      %v5190 = vrot.slane %v5185, %v5189
      %v5192 = vmul.f32 %v5174, %v5190
      %v5193 = vmul.f32 %v5175, %v5190
      %v5194 = vadd.f32 %v5183, %v5192
      %v5195 = vadd.f32 %v5184, %v5193
      %v5196 = vsel %vm2574, %v5194, 0.0
      %5197 = vadd.xlane.f32.xlu0 %v5196
      %v5198 = vpop.xlane.xlu0 %5197
      %v5199 = vsel %vm2574, %v5195, 0.0
      %5200 = vadd.xlane.f32.xlu0 %v5199
      %v5201 = vpop.xlane.xlu0 %5200
      %v5202 = vld [vmem:[#allocation2] sm:$0x1]
      %v5204 = vlaneseq
      %v5205 = vshrl.u32 %v5204, 7
      %v5206 = vsub.s32 0, %v5205
      %v5207 = vrot.slane %v5202, %v5206
      %v5209 = vadd.f32 %v5198, %v5207
      %v5210 = vadd.f32 %v5201, %v5207
      %vm5211 = vcmask 7168
      %5212 = vst.msk [vmem:[%s363] sm:$0xff] %vm5211, %v5209
      %5213 = vst.msk [vmem:[%s363 + $0x8] sm:$0xff] %vm5211, %v5210
      %s5214 = smul.u32 2, %s23
      %p5215 = scmp.lt.s32.totalorder %s5214, 7
      %s5216 = scalar_select %p5215, %s5214, 7
      %s5217 = smul.addr %s5216, 8
      %s5218 = scalar_lea.vmem %s10, %s5217
      // Predicated region
      $region61: #{_lambda_.1} parent=59 // pred_check
        %p5219 = pneg %p256
      $region62: #{_lambda_.1} parent=59 // pred_check_branch
        %5221 = sbr.rel (%p5219) target = $region64
      $region63: #{_lambda_.1} parent=59 // pred_region
        %s5222 = smul.u32 2, %s23
      $region64: #{_lambda_.1} parent=59 // pred_fallthru
        _
    $region60: #{_lambda_.1} parent=5 // pred_fallthru
      _
    %p5223 = scmp.le.s32.totalorder 2, %s18
    // Predicated region
    $region65: #{_lambda_.1} parent=5 // pred_check
      %p5224 = pneg %p5223
    $region66: #{_lambda_.1} parent=5 // pred_check_branch
      %5226 = sbr.rel (%p5224) target = $region68
    $region67: #{_lambda_.1} parent=5 // pred_region
      %s5227 = ssub.s32 %s18, 2
      // Predicated region
      $region69: #{_lambda_.1} parent=67 // pred_check
        %p5228 = pneg %p262
      $region70: #{_lambda_.1} parent=67 // pred_check_branch
        %5230 = sbr.rel (%p5228) target = $region72
      $region71: #{_lambda_.1} parent=67 // pred_region
        %s5231 = smul.u32 2, %s24
        %p5232 = scmp.lt.s32.totalorder %s5231, 7
        %s5233 = scalar_select %p5232, %s5231, 7
        %s5234 = smul.addr %s5233, 8
        %s5235 = scalar_lea.vmem %s10, %s5234
      $region72: #{_lambda_.1} parent=67 // pred_fallthru
        _
    $region68: #{_lambda_.1} parent=5 // pred_fallthru
      _
  $region6: #{_lambda_.1} parent=0 // loop_footer
    %s22 = sadd.s32 1, %s18
  $region7: #{_lambda_.1} parent=0 // loop_footer_branch
    %17 = sbr.rel target = $region3
  $region8: #{_lambda_.1} parent=0 // loop_exit
    _

</llo_original>
